<compile_context>
chip_gen: v7x
topology: tpu7x:2x2x1
jax: 0.10.0
libtpu: 0.0.40
codegen_flags: <defaults>
</compile_context>

<pallas_src>
import jax
import jax.numpy as jnp
from jax.experimental import pallas as pl
from jax.experimental.pallas import tpu as pltpu

LN_EPS = 1e-5  # PyTorch nn.LayerNorm default


def _layernorm(x, gamma, beta):
    # Two-pass (centered) variance on purpose: one-pass sum/sumsq cancels badly
    # in f32 when rows carry a large constant offset (all-ones init case).
    mean = jnp.mean(x, axis=-1, keepdims=True)
    var = jnp.mean(jnp.square(x - mean), axis=-1, keepdims=True)
    return (x - mean) * jax.lax.rsqrt(var + LN_EPS) * gamma + beta


def transformer_layer_kernel(
    src_ref,    # (1, S, E)  f32    full sequence for this batch element
    wq_ref,     # (E, E)     bf16
    wkv_ref,    # (E, 2E)    bf16   [wk | wv]
    wo_ref,     # (E, E)     bf16
    w1_ref,     # (E, F)     bf16
    w2_ref,     # (F, E)     bf16
    vecs_ref,   # (9, E)     f32    [bq, bk, bv, bo, b2, ln1_g, ln1_b, ln2_g, ln2_b]
    b1_ref,     # (1, F)     f32
    out_ref,    # (1, block_q, E)
    kv_ref,     # (S, 2E)    bf16   scratch: per-batch K|V with biases folded in
):
    f32, bf16 = jnp.float32, jnp.bfloat16
    E = wq_ref.shape[0]
    block_q = out_ref.shape[1]
    qi = pl.program_id(1)

    vecs = vecs_ref[...].astype(f32)
    bq, bk, bv, bo, b2 = vecs[0:1], vecs[1:2], vecs[2:3], vecs[3:4], vecs[4:5]
    g1, be1, g2, be2 = vecs[5:6], vecs[6:7], vecs[7:8], vecs[8:9]

    # --- hoisted K/V projection: once per batch element, reused by all qi tiles ---
    @pl.when(qi == 0)
    def _():
        x_full = src_ref[0].astype(bf16)                                 # (S, E)
        kv = jnp.dot(x_full, wkv_ref[...], preferred_element_type=f32)   # (S, 2E)
        kv_ref[:, :E] = (kv[:, :E] + bk).astype(bf16)
        kv_ref[:, E:] = (kv[:, E:] + bv).astype(bf16)

    # Query rows sliced from the already-resident full-sequence block (no second
    # src input / HBM read).
    q_start = pl.multiple_of(qi * block_q, block_q)
    x_q = src_ref[0, pl.ds(q_start, block_q), :].astype(f32)             # (block_q, E)

    # --- self-attention (single "head": the module's forward never splits heads) ---
    q = jnp.dot(x_q.astype(bf16), wq_ref[...], preferred_element_type=f32) + bq
    k = kv_ref[:, :E]                                                    # (S, E) bf16
    v = kv_ref[:, E:]                                                    # (S, E) bf16

    # Q @ K^T via an NT contraction on the last dims — native MXU pattern (same as
    # the reference flash-attention kernel); no explicit XLU transpose materialized.
    scores = jax.lax.dot_general(
        q.astype(bf16), k,
        dimension_numbers=(((1,), (1,)), ((), ())),
        preferred_element_type=f32)                                      # (block_q, S)

    # TODO(synk): for S >~ 2k, tile softmax/PV over S (flash-style online softmax)
    # so only a (block_q, tile_s) score block is live (v7x 64 MiB VMEM).
    scores_max = jnp.max(scores, axis=-1, keepdims=True)
    p = jnp.exp(scores - scores_max)
    denom = jnp.sum(p, axis=-1, keepdims=True)

    # Normalization folded into the (block_q, E) output instead of the
    # (block_q, S) weight matrix: S/E x fewer VPU multiplies, one less live array.
    attn = jnp.dot(p.astype(bf16), v, preferred_element_type=f32)        # (block_q, E)
    attn = attn * pl.reciprocal(denom, approx=True)
    attn = jnp.dot(attn.astype(bf16), wo_ref[...],
                   preferred_element_type=f32) + bo

    # TODO(synk): dropout treated as identity (eval-mode semantics).
    h = _layernorm(x_q + attn, g1, be1)                                  # (block_q, E)

    # --- feed-forward ---
    ff = jnp.dot(h.astype(bf16), w1_ref[...],
                 preferred_element_type=f32) + b1_ref[...].astype(f32)   # (block_q, F)
    ff = jnp.maximum(ff, 0.0)
    ff = jnp.dot(ff.astype(bf16), w2_ref[...],
                 preferred_element_type=f32) + b2                        # (block_q, E)

    out_ref[0] = _layernorm(h + ff, g2, be2).astype(out_ref.dtype)


def _vmem_limit_bytes():
    """~80% of physical per-core VMEM (headroom for Mosaic scratch / pipeline buffers).

    ~51 MiB on v7x (64 MiB physical), ~102 MiB on v5e/v6e (128 MiB physical).
    """
    try:
        cap = getattr(pltpu.get_tpu_info(), "vmem_capacity_bytes", None)
    except Exception:
        return None
    if not cap:
        return None
    return int(min(cap * 0.8, 110 * 1024 * 1024))


def native_transformer_layer(src, params, *, block_q=None):
    """src: (B, S, E) float32. params: dict of f32 weights (see make_params)."""
    B, S, E = src.shape
    F = params["w1"].shape[1]

    assert E % 128 == 0, "embed_dim must be a multiple of 128 (lane alignment)"
    assert F % 128 == 0, "dim_feedforward must be a multiple of 128 (lane alignment)"

    if block_q is None:
        block_q = min(S, 512)  # big tiles amortize per-step overhead / weight pushes
    assert S % block_q == 0, "block_q must divide the sequence length"
    assert block_q % 8 == 0, "block_q must be a multiple of 8 (sublane alignment)"
    n_q = S // block_q

    bf16, f32 = jnp.bfloat16, jnp.float32
    wq = params["wq"].astype(bf16)
    wkv = jnp.concatenate([params["wk"], params["wv"]], axis=1).astype(bf16)   # (E, 2E)
    wo = params["wo"].astype(bf16)
    w1 = params["w1"].astype(bf16)
    w2 = params["w2"].astype(bf16)
    vecs = jnp.concatenate(
        [params["bq"], params["bk"], params["bv"], params["bo"], params["b2"],
         params["ln1_g"], params["ln1_b"], params["ln2_g"], params["ln2_b"]],
        axis=0).astype(f32)                                                    # (9, E)
    b1 = params["b1"].astype(f32)                                              # (1, F)

    # Advisory cost estimate so XLA schedules neighbouring HLO correctly.
    flops = int(2 * B * S * (4 * E * E + 2 * E * F) + 4 * B * S * S * E)
    bytes_accessed = int(2 * B * S * E * 4
                         + 2 * (wq.size + wkv.size + wo.size + w1.size + w2.size)
                         + 4 * (vecs.size + b1.size))
    cost = pl.CostEstimate(flops=flops, transcendentals=int(B * S * S),
                           bytes_accessed=bytes_accessed)

    def build(single_buffer_weights):
        def const_spec(shape):
            zeros = (0,) * len(shape)
            if single_buffer_weights:
                # Block index never changes -> single-buffer to halve weight VMEM.
                return pl.BlockSpec(shape, lambda b, qi: zeros,
                                    pipeline_mode=pl.Buffered(1))
            return pl.BlockSpec(shape, lambda b, qi: zeros)

        in_specs = [
            pl.BlockSpec((1, S, E), lambda b, qi: (b, 0, 0)),  # src: full seq per batch
            const_spec((E, E)),        # wq
            const_spec((E, 2 * E)),    # wkv
            const_spec((E, E)),        # wo
            const_spec((E, F)),        # w1
            const_spec((F, E)),        # w2
            const_spec((9, E)),        # packed bias / LN vectors
            const_spec((1, F)),        # b1
        ]
        return pl.pallas_call(
            transformer_layer_kernel,
            out_shape=jax.ShapeDtypeStruct((B, S, E), src.dtype),
            grid=(B, n_q),
            in_specs=in_specs,
            out_specs=pl.BlockSpec((1, block_q, E), lambda b, qi: (b, qi, 0)),
            scratch_shapes=[pltpu.VMEM((S, 2 * E), bf16)],     # per-batch K|V scratch
            compiler_params=pltpu.CompilerParams(
                # batch "parallel" (megacore split); qi "arbitrary" so the K/V
                # scratch filled at qi == 0 stays valid for all later query tiles.
                dimension_semantics=("parallel", "arbitrary"),
                vmem_limit_bytes=_vmem_limit_bytes(),
            ),
            cost_estimate=cost,
        )

    args = (src, wq, wkv, wo, w1, w2, vecs, b1)
    try:
        return build(True)(*args)
    except Exception:
        # Fallback for Pallas builds that reject pipeline_mode=Buffered(1):
        # identical kernel, default double-buffered constant operands.
        return build(False)(*args)


def make_params(embed_dim, dim_feedforward, dtype=jnp.float32):
    # _initialize_weights(): every parameter is constant 1 (matches the module).
    ones = lambda *s: jnp.ones(s, dtype)
    return dict(
        wq=ones(embed_dim, embed_dim), bq=ones(1, embed_dim),
        wk=ones(embed_dim, embed_dim), bk=ones(1, embed_dim),
        wv=ones(embed_dim, embed_dim), bv=ones(1, embed_dim),
        wo=ones(embed_dim, embed_dim), bo=ones(1, embed_dim),
        w1=ones(embed_dim, dim_feedforward), b1=ones(1, dim_feedforward),
        w2=ones(dim_feedforward, embed_dim), b2=ones(1, embed_dim),
        ln1_g=ones(1, embed_dim), ln1_b=ones(1, embed_dim),
        ln2_g=ones(1, embed_dim), ln2_b=ones(1, embed_dim),
    )


def make_random_params(key, E, F):
    # Well-conditioned random weights: catches structural bugs (e.g. swapped K/V)
    # that the degenerate all-ones init cannot distinguish.
    ks = jax.random.split(key, 16)
    n = lambda k, *s: jax.random.normal(k, s, jnp.float32)
    se, sf = float(E) ** 0.5, float(F) ** 0.5
    return dict(
        wq=n(ks[0], E, E) / se, bq=0.1 * n(ks[1], 1, E),
        wk=n(ks[2], E, E) / se, bk=0.1 * n(ks[3], 1, E),
        wv=n(ks[4], E, E) / se, bv=0.1 * n(ks[5], 1, E),
        wo=n(ks[6], E, E) / se, bo=0.1 * n(ks[7], 1, E),
        w1=n(ks[8], E, F) / se, b1=0.1 * n(ks[9], 1, F),
        w2=n(ks[10], F, E) / sf, b2=0.1 * n(ks[11], 1, E),
        ln1_g=1.0 + 0.1 * n(ks[12], 1, E), ln1_b=0.1 * n(ks[13], 1, E),
        ln2_g=1.0 + 0.1 * n(ks[14], 1, E), ln2_b=0.1 * n(ks[15], 1, E),
    )


def reference_forward(src, p):
    """Pure-JAX reference mirroring the PyTorch forward (dropout = identity).

    Matmul operands are cast to bf16 with f32 accumulation to mirror the kernel's
    (standard TPU) numerics; everything else stays f32.
    """
    f32, bf16 = jnp.float32, jnp.bfloat16

    def mm(subs, a, b):
        return jnp.einsum(subs, a.astype(bf16), b.astype(bf16),
                          preferred_element_type=f32)

    def ln(x, g, b):
        m = jnp.mean(x, axis=-1, keepdims=True)
        v = jnp.mean(jnp.square(x - m), axis=-1, keepdims=True)
        return (x - m) * jax.lax.rsqrt(v + LN_EPS) * g + b

    q = mm("bse,ef->bsf", src, p["wq"]) + p["bq"]
    k = mm("bse,ef->bsf", src, p["wk"]) + p["bk"]
    v = mm("bse,ef->bsf", src, p["wv"]) + p["bv"]
    scores = mm("bse,bte->bst", q, k)
    attn = jax.nn.softmax(scores, axis=-1)
    ao = mm("bst,bte->bse", attn, v)
    ao = mm("bse,ef->bsf", ao, p["wo"]) + p["bo"]
    h = ln(src + ao, p["ln1_g"], p["ln1_b"])
    ff = jnp.maximum(mm("bse,ef->bsf", h, p["w1"]) + p["b1"], 0.0)
    ff = mm("bsf,fe->bse", ff, p["w2"]) + p["b2"]
    return ln(h + ff, p["ln2_g"], p["ln2_b"])


def _check(out, ref, name, atol=3e-2, rtol=3e-2):
    assert out.shape == ref.shape, f"{name}: shape mismatch"
    assert not bool(jnp.any(jnp.isnan(out))), f"{name}: NaNs in output"
    if not jnp.allclose(out, ref, atol=atol, rtol=rtol):
        err = float(jnp.max(jnp.abs(out - ref)))
        raise AssertionError(f"{name}: mismatch vs reference (max abs err {err:.3e})")


if __name__ == "__main__":
    # Small, lane-aligned shapes (E and F multiples of 128).
    batch, seq = 2, 16
    embed_dim, num_heads, dim_feedforward = 128, 4, 256  # num_heads unused by forward

    key = jax.random.PRNGKey(0)
    k_src, k_par = jax.random.split(key)
    src = jax.random.normal(k_src, (batch, seq, embed_dim), dtype=jnp.float32)

    # 1) Module semantics: every parameter == 1 (matches _initialize_weights()).
    #    The all-ones init makes the residual+LayerNorm path ill-conditioned (the
    #    FFN adds a ~3e4 per-row constant that LayerNorm then cancels), so f32
    #    implementations only agree to ~1e-2; tolerance reflects that.
    params_ones = make_params(embed_dim, dim_feedforward)
    out = jax.block_until_ready(native_transformer_layer(src, params_ones))
    _check(out, reference_forward(src, params_ones), "all-ones params")

    # 2) Structural check with well-conditioned random weights; block_q=8 forces
    #    n_q=2 so the hoisted-K/V reuse path (qi > 0) is actually exercised.
    params_rand = make_random_params(k_par, embed_dim, dim_feedforward)
    out2 = jax.block_until_ready(
        native_transformer_layer(src, params_rand, block_q=8))
    _check(out2, reference_forward(src, params_rand), "random params")

    print("KERNEL_OK")
</pallas_src>

<mosaic_0001>
module attributes {stable_mosaic.version = 11 : i64} {
  func.func @transformer_layer_kernel(%arg0: i32, %arg1: i32, %arg2: memref<1x16x128xf32, #tpu.memory_space<vmem>>, %arg3: memref<128x128xbf16, #tpu.memory_space<vmem>>, %arg4: memref<128x256xbf16, #tpu.memory_space<vmem>>, %arg5: memref<128x128xbf16, #tpu.memory_space<vmem>>, %arg6: memref<128x256xbf16, #tpu.memory_space<vmem>>, %arg7: memref<256x128xbf16, #tpu.memory_space<vmem>>, %arg8: memref<9x128xf32, #tpu.memory_space<vmem>>, %arg9: memref<1x256xf32, #tpu.memory_space<vmem>>, %arg10: memref<1x16x128xf32, #tpu.memory_space<vmem>>, %arg11: memref<16x256xbf16, #tpu.memory_space<vmem>>) attributes {dimension_semantics = [#tpu.dimension_semantics<parallel>, #tpu.dimension_semantics<arbitrary>], iteration_bounds = array<i64: 2, 1>, scalar_prefetch = 0 : i64, scratch_operands = 1 : i64, tpu.core_type = #tpu.core_type<tc>, window_params = [{transform_indices = @transform_0, window_bounds = array<i64: 1, 16, 128>}, {pipeline_mode = #tpu.pipeline_mode<synchronous>, transform_indices = @transform_1, window_bounds = array<i64: 128, 128>}, {pipeline_mode = #tpu.pipeline_mode<synchronous>, transform_indices = @transform_2, window_bounds = array<i64: 128, 256>}, {pipeline_mode = #tpu.pipeline_mode<synchronous>, transform_indices = @transform_3, window_bounds = array<i64: 128, 128>}, {pipeline_mode = #tpu.pipeline_mode<synchronous>, transform_indices = @transform_4, window_bounds = array<i64: 128, 256>}, {pipeline_mode = #tpu.pipeline_mode<synchronous>, transform_indices = @transform_5, window_bounds = array<i64: 256, 128>}, {pipeline_mode = #tpu.pipeline_mode<synchronous>, transform_indices = @transform_6, window_bounds = array<i64: 9, 128>}, {pipeline_mode = #tpu.pipeline_mode<synchronous>, transform_indices = @transform_7, window_bounds = array<i64: 1, 256>}, {transform_indices = @transform_8, window_bounds = array<i64: 1, 16, 128>}]} {
    %c0 = arith.constant 0 : index
    %c0_0 = arith.constant 0 : index
    %0 = vector.load %arg8[%c0, %c0_0] : memref<9x128xf32, #tpu.memory_space<vmem>>, vector<9x128xf32>
    %1 = vector.extract_strided_slice %0 {offsets = [0, 0], sizes = [1, 128], strides = [1, 1]} : vector<9x128xf32> to vector<1x128xf32>
    %2 = vector.extract_strided_slice %0 {offsets = [1, 0], sizes = [1, 128], strides = [1, 1]} : vector<9x128xf32> to vector<1x128xf32>
    %3 = vector.extract_strided_slice %0 {offsets = [2, 0], sizes = [1, 128], strides = [1, 1]} : vector<9x128xf32> to vector<1x128xf32>
    %4 = vector.extract_strided_slice %0 {offsets = [3, 0], sizes = [1, 128], strides = [1, 1]} : vector<9x128xf32> to vector<1x128xf32>
    %5 = vector.extract_strided_slice %0 {offsets = [4, 0], sizes = [1, 128], strides = [1, 1]} : vector<9x128xf32> to vector<1x128xf32>
    %6 = vector.extract_strided_slice %0 {offsets = [5, 0], sizes = [1, 128], strides = [1, 1]} : vector<9x128xf32> to vector<1x128xf32>
    %7 = vector.extract_strided_slice %0 {offsets = [6, 0], sizes = [1, 128], strides = [1, 1]} : vector<9x128xf32> to vector<1x128xf32>
    %8 = vector.extract_strided_slice %0 {offsets = [7, 0], sizes = [1, 128], strides = [1, 1]} : vector<9x128xf32> to vector<1x128xf32>
    %9 = vector.extract_strided_slice %0 {offsets = [8, 0], sizes = [1, 128], strides = [1, 1]} : vector<9x128xf32> to vector<1x128xf32>
    %c0_i32 = arith.constant 0 : i32
    %10 = arith.cmpi eq, %arg1, %c0_i32 : i32
    %11 = arith.extui %10 : i1 to i32
    %c0_i32_1 = arith.constant 0 : i32
    %12 = arith.cmpi ne, %11, %c0_i32_1 : i32
    scf.if %12 {
      %c0_38 = arith.constant 0 : index
      %c0_39 = arith.constant 0 : index
      %c0_40 = arith.constant 0 : index
      %106 = vector.load %arg2[%c0_38, %c0_39, %c0_40] : memref<1x16x128xf32, #tpu.memory_space<vmem>>, vector<1x16x128xf32>
      %107 = vector.shape_cast %106 : vector<1x16x128xf32> to vector<16x128xf32>
      %108 = arith.truncf %107 : vector<16x128xf32> to vector<16x128xbf16>
      %c0_41 = arith.constant 0 : index
      %c0_42 = arith.constant 0 : index
      %109 = vector.load %arg4[%c0_41, %c0_42] : memref<128x256xbf16, #tpu.memory_space<vmem>>, vector<128x256xbf16>
      %cst_43 = arith.constant dense<0.000000e+00> : vector<16x256xf32>
      %110 = tpu.matmul %108, %109, %cst_43 {dimension_numbers = #tpu.dot_dimension_numbers<[1], [0], [0], [1], [0, 0, 1, 1], [], []>} : vector<16x128xbf16>, vector<128x256xbf16>, vector<16x256xf32> -> vector<16x256xf32>
      %111 = vector.extract_strided_slice %110 {offsets = [0, 0], sizes = [16, 128], strides = [1, 1]} : vector<16x256xf32> to vector<16x128xf32>
      %112 = vector.broadcast %2 : vector<1x128xf32> to vector<16x128xf32>
      %113 = arith.addf %111, %112 : vector<16x128xf32>
      %114 = arith.truncf %113 : vector<16x128xf32> to vector<16x128xbf16>
      %c0_44 = arith.constant 0 : index
      %c0_45 = arith.constant 0 : index
      %115 = vector.load %arg11[%c0_44, %c0_45] : memref<16x256xbf16, #tpu.memory_space<vmem>>, vector<16x128xbf16>
      tpu.vector_store %arg11[%c0_44, %c0_45], %114 {strides = array<i32>} : memref<16x256xbf16, #tpu.memory_space<vmem>>, vector<16x128xbf16>,
      %116 = vector.extract_strided_slice %110 {offsets = [0, 128], sizes = [16, 128], strides = [1, 1]} : vector<16x256xf32> to vector<16x128xf32>
      %117 = vector.broadcast %3 : vector<1x128xf32> to vector<16x128xf32>
      %118 = arith.addf %116, %117 : vector<16x128xf32>
      %119 = arith.truncf %118 : vector<16x128xf32> to vector<16x128xbf16>
      %c0_46 = arith.constant 0 : index
      %c128_47 = arith.constant 128 : index
      %120 = vector.load %arg11[%c0_46, %c128_47] : memref<16x256xbf16, #tpu.memory_space<vmem>>, vector<16x128xbf16>
      tpu.vector_store %arg11[%c0_46, %c128_47], %119 {strides = array<i32>} : memref<16x256xbf16, #tpu.memory_space<vmem>>, vector<16x128xbf16>,
    } else {
    }
    %c16_i32 = arith.constant 16 : i32
    %13 = arith.muli %arg1, %c16_i32 : i32
    %14 = tpu.assume_multiple %13, 16 : i32
    %c0_2 = arith.constant 0 : index
    %15 = arith.index_cast %14 : i32 to index
    %c0_3 = arith.constant 0 : index
    %16 = vector.load %arg2[%c0_2, %15, %c0_3] : memref<1x16x128xf32, #tpu.memory_space<vmem>>, vector<1x16x128xf32>
    %17 = vector.shape_cast %16 : vector<1x16x128xf32> to vector<16x128xf32>
    %18 = arith.truncf %17 : vector<16x128xf32> to vector<16x128xbf16>
    %c0_4 = arith.constant 0 : index
    %c0_5 = arith.constant 0 : index
    %19 = vector.load %arg3[%c0_4, %c0_5] : memref<128x128xbf16, #tpu.memory_space<vmem>>, vector<128x128xbf16>
    %cst = arith.constant dense<0.000000e+00> : vector<16x128xf32>
    %20 = tpu.matmul %18, %19, %cst {dimension_numbers = #tpu.dot_dimension_numbers<[1], [0], [0], [1], [0, 0, 1, 1], [], []>} : vector<16x128xbf16>, vector<128x128xbf16>, vector<16x128xf32> -> vector<16x128xf32>
    %21 = vector.broadcast %1 : vector<1x128xf32> to vector<16x128xf32>
    %22 = arith.addf %20, %21 : vector<16x128xf32>
    %c0_6 = arith.constant 0 : index
    %c0_7 = arith.constant 0 : index
    %23 = vector.load %arg11[%c0_6, %c0_7] : memref<16x256xbf16, #tpu.memory_space<vmem>>, vector<16x128xbf16>
    %c0_8 = arith.constant 0 : index
    %c128 = arith.constant 128 : index
    %24 = vector.load %arg11[%c0_8, %c128] : memref<16x256xbf16, #tpu.memory_space<vmem>>, vector<16x128xbf16>
    %25 = arith.truncf %22 : vector<16x128xf32> to vector<16x128xbf16>
    %cst_9 = arith.constant dense<0.000000e+00> : vector<16x16xf32>
    %26 = tpu.matmul %25, %23, %cst_9 {dimension_numbers = #tpu.dot_dimension_numbers<[1], [1], [0], [0], [0, 0, 1, 0], [], []>} : vector<16x128xbf16>, vector<16x128xbf16>, vector<16x16xf32> -> vector<16x16xf32>
    %cst_10 = arith.constant dense<0xFF800000> : vector<16xf32>
    %27 = vector.multi_reduction <maximumf>, %26, %cst_10 [1] : vector<16x16xf32> to vector<16xf32>
    %28 = vector.shape_cast %27 : vector<16xf32> to vector<16x1xf32>
    %29 = vector.broadcast %28 : vector<16x1xf32> to vector<16x16xf32>
    %30 = arith.subf %26, %29 : vector<16x16xf32>
    %31 = math.exp %30 : vector<16x16xf32>
    %cst_11 = arith.constant dense<0.000000e+00> : vector<16xf32>
    %32 = vector.multi_reduction <add>, %31, %cst_11 [1] : vector<16x16xf32> to vector<16xf32>
    %33 = vector.shape_cast %32 : vector<16xf32> to vector<16x1xf32>
    %34 = arith.truncf %31 : vector<16x16xf32> to vector<16x16xbf16>
    %cst_12 = arith.constant dense<0.000000e+00> : vector<16x128xf32>
    %35 = tpu.matmul %34, %24, %cst_12 {dimension_numbers = #tpu.dot_dimension_numbers<[1], [0], [0], [1], [0, 0, 1, 1], [], []>} : vector<16x16xbf16>, vector<16x128xbf16>, vector<16x128xf32> -> vector<16x128xf32>
    %36 = tpu.reciprocal %33 {approx = true} : vector<16x1xf32> -> vector<16x1xf32>
    %37 = vector.broadcast %36 : vector<16x1xf32> to vector<16x128xf32>
    %38 = arith.mulf %35, %37 : vector<16x128xf32>
    %39 = arith.truncf %38 : vector<16x128xf32> to vector<16x128xbf16>
    %c0_13 = arith.constant 0 : index
    %c0_14 = arith.constant 0 : index
    %40 = vector.load %arg5[%c0_13, %c0_14] : memref<128x128xbf16, #tpu.memory_space<vmem>>, vector<128x128xbf16>
    %cst_15 = arith.constant dense<0.000000e+00> : vector<16x128xf32>
    %41 = tpu.matmul %39, %40, %cst_15 {dimension_numbers = #tpu.dot_dimension_numbers<[1], [0], [0], [1], [0, 0, 1, 1], [], []>} : vector<16x128xbf16>, vector<128x128xbf16>, vector<16x128xf32> -> vector<16x128xf32>
    %42 = vector.broadcast %4 : vector<1x128xf32> to vector<16x128xf32>
    %43 = arith.addf %41, %42 : vector<16x128xf32>
    %44 = arith.addf %17, %43 : vector<16x128xf32>
    %cst_16 = arith.constant dense<0.000000e+00> : vector<16xf32>
    %45 = vector.multi_reduction <add>, %44, %cst_16 [1] : vector<16x128xf32> to vector<16xf32>
    %46 = vector.shape_cast %45 : vector<16xf32> to vector<16x1xf32>
    %cst_17 = arith.constant 1.280000e+02 : f32
    %47 = vector.broadcast %cst_17 : f32 to vector<16x1xf32>
    %48 = arith.divf %46, %47 : vector<16x1xf32>
    %49 = vector.broadcast %48 : vector<16x1xf32> to vector<16x128xf32>
    %50 = arith.subf %44, %49 : vector<16x128xf32>
    %51 = arith.mulf %50, %50 : vector<16x128xf32>
    %cst_18 = arith.constant dense<0.000000e+00> : vector<16xf32>
    %52 = vector.multi_reduction <add>, %51, %cst_18 [1] : vector<16x128xf32> to vector<16xf32>
    %53 = vector.shape_cast %52 : vector<16xf32> to vector<16x1xf32>
    %cst_19 = arith.constant 1.280000e+02 : f32
    %54 = vector.broadcast %cst_19 : f32 to vector<16x1xf32>
    %55 = arith.divf %53, %54 : vector<16x1xf32>
    %56 = vector.broadcast %48 : vector<16x1xf32> to vector<16x128xf32>
    %57 = arith.subf %44, %56 : vector<16x128xf32>
    %cst_20 = arith.constant 9.99999974E-6 : f32
    %58 = vector.broadcast %cst_20 : f32 to vector<16x1xf32>
    %59 = arith.addf %55, %58 : vector<16x1xf32>
    %60 = math.rsqrt %59 : vector<16x1xf32>
    %61 = vector.broadcast %60 : vector<16x1xf32> to vector<16x128xf32>
    %62 = arith.mulf %57, %61 : vector<16x128xf32>
    %63 = vector.broadcast %6 : vector<1x128xf32> to vector<16x128xf32>
    %64 = arith.mulf %62, %63 : vector<16x128xf32>
    %65 = vector.broadcast %7 : vector<1x128xf32> to vector<16x128xf32>
    %66 = arith.addf %64, %65 : vector<16x128xf32>
    %67 = arith.truncf %66 : vector<16x128xf32> to vector<16x128xbf16>
    %c0_21 = arith.constant 0 : index
    %c0_22 = arith.constant 0 : index
    %68 = vector.load %arg6[%c0_21, %c0_22] : memref<128x256xbf16, #tpu.memory_space<vmem>>, vector<128x256xbf16>
    %cst_23 = arith.constant dense<0.000000e+00> : vector<16x256xf32>
    %69 = tpu.matmul %67, %68, %cst_23 {dimension_numbers = #tpu.dot_dimension_numbers<[1], [0], [0], [1], [0, 0, 1, 1], [], []>} : vector<16x128xbf16>, vector<128x256xbf16>, vector<16x256xf32> -> vector<16x256xf32>
    %c0_24 = arith.constant 0 : index
    %c0_25 = arith.constant 0 : index
    %70 = vector.load %arg9[%c0_24, %c0_25] : memref<1x256xf32, #tpu.memory_space<vmem>>, vector<1x256xf32>
    %71 = vector.broadcast %70 : vector<1x256xf32> to vector<16x256xf32>
    %72 = arith.addf %69, %71 : vector<16x256xf32>
    %cst_26 = arith.constant 0.000000e+00 : f32
    %73 = vector.broadcast %cst_26 : f32 to vector<16x256xf32>
    %74 = arith.maximumf %72, %73 : vector<16x256xf32>
    %75 = arith.truncf %74 : vector<16x256xf32> to vector<16x256xbf16>
    %c0_27 = arith.constant 0 : index
    %c0_28 = arith.constant 0 : index
    %76 = vector.load %arg7[%c0_27, %c0_28] : memref<256x128xbf16, #tpu.memory_space<vmem>>, vector<256x128xbf16>
    %cst_29 = arith.constant dense<0.000000e+00> : vector<16x128xf32>
    %77 = tpu.matmul %75, %76, %cst_29 {dimension_numbers = #tpu.dot_dimension_numbers<[1], [0], [0], [1], [0, 0, 1, 1], [], []>} : vector<16x256xbf16>, vector<256x128xbf16>, vector<16x128xf32> -> vector<16x128xf32>
    %78 = vector.broadcast %5 : vector<1x128xf32> to vector<16x128xf32>
    %79 = arith.addf %77, %78 : vector<16x128xf32>
    %80 = arith.addf %66, %79 : vector<16x128xf32>
    %cst_30 = arith.constant dense<0.000000e+00> : vector<16xf32>
    %81 = vector.multi_reduction <add>, %80, %cst_30 [1] : vector<16x128xf32> to vector<16xf32>
    %82 = vector.shape_cast %81 : vector<16xf32> to vector<16x1xf32>
    %cst_31 = arith.constant 1.280000e+02 : f32
    %83 = vector.broadcast %cst_31 : f32 to vector<16x1xf32>
    %84 = arith.divf %82, %83 : vector<16x1xf32>
    %85 = vector.broadcast %84 : vector<16x1xf32> to vector<16x128xf32>
    %86 = arith.subf %80, %85 : vector<16x128xf32>
    %87 = arith.mulf %86, %86 : vector<16x128xf32>
    %cst_32 = arith.constant dense<0.000000e+00> : vector<16xf32>
    %88 = vector.multi_reduction <add>, %87, %cst_32 [1] : vector<16x128xf32> to vector<16xf32>
    %89 = vector.shape_cast %88 : vector<16xf32> to vector<16x1xf32>
    %cst_33 = arith.constant 1.280000e+02 : f32
    %90 = vector.broadcast %cst_33 : f32 to vector<16x1xf32>
    %91 = arith.divf %89, %90 : vector<16x1xf32>
    %92 = vector.broadcast %84 : vector<16x1xf32> to vector<16x128xf32>
    %93 = arith.subf %80, %92 : vector<16x128xf32>
    %cst_34 = arith.constant 9.99999974E-6 : f32
    %94 = vector.broadcast %cst_34 : f32 to vector<16x1xf32>
    %95 = arith.addf %91, %94 : vector<16x1xf32>
    %96 = math.rsqrt %95 : vector<16x1xf32>
    %97 = vector.broadcast %96 : vector<16x1xf32> to vector<16x128xf32>
    %98 = arith.mulf %93, %97 : vector<16x128xf32>
    %99 = vector.broadcast %8 : vector<1x128xf32> to vector<16x128xf32>
    %100 = arith.mulf %98, %99 : vector<16x128xf32>
    %101 = vector.broadcast %9 : vector<1x128xf32> to vector<16x128xf32>
    %102 = arith.addf %100, %101 : vector<16x128xf32>
    %c0_35 = arith.constant 0 : index
    %c0_36 = arith.constant 0 : index
    %c0_37 = arith.constant 0 : index
    %103 = vector.load %arg10[%c0_35, %c0_36, %c0_37] : memref<1x16x128xf32, #tpu.memory_space<vmem>>, vector<1x16x128xf32>
    %104 = vector.shape_cast %103 : vector<1x16x128xf32> to vector<16x128xf32>
    %105 = vector.shape_cast %102 : vector<16x128xf32> to vector<1x16x128xf32>
    tpu.vector_store %arg10[%c0_35, %c0_36, %c0_37], %105 {strides = array<i32>} : memref<1x16x128xf32, #tpu.memory_space<vmem>>, vector<1x16x128xf32>,
    return
  }
  func.func @transform_0(%arg0: i32, %arg1: i32) -> (i32, i32, i32) {
    %c0_i32 = arith.constant 0 : i32
    %c0_i32_0 = arith.constant 0 : i32
    %c0_i32_1 = arith.constant 0 : i32
    return %arg0, %c0_i32, %c0_i32_0 : i32, i32, i32
  }
  func.func @transform_1(%arg0: i32, %arg1: i32) -> (i32, i32) {
    %c0_i32 = arith.constant 0 : i32
    %c0_i32_0 = arith.constant 0 : i32
    %c0_i32_1 = arith.constant 0 : i32
    return %c0_i32, %c0_i32_0 : i32, i32
  }
  func.func @transform_2(%arg0: i32, %arg1: i32) -> (i32, i32) {
    %c0_i32 = arith.constant 0 : i32
    %c0_i32_0 = arith.constant 0 : i32
    %c0_i32_1 = arith.constant 0 : i32
    return %c0_i32, %c0_i32_0 : i32, i32
  }
  func.func @transform_3(%arg0: i32, %arg1: i32) -> (i32, i32) {
    %c0_i32 = arith.constant 0 : i32
    %c0_i32_0 = arith.constant 0 : i32
    %c0_i32_1 = arith.constant 0 : i32
    return %c0_i32, %c0_i32_0 : i32, i32
  }
  func.func @transform_4(%arg0: i32, %arg1: i32) -> (i32, i32) {
    %c0_i32 = arith.constant 0 : i32
    %c0_i32_0 = arith.constant 0 : i32
    %c0_i32_1 = arith.constant 0 : i32
    return %c0_i32, %c0_i32_0 : i32, i32
  }
  func.func @transform_5(%arg0: i32, %arg1: i32) -> (i32, i32) {
    %c0_i32 = arith.constant 0 : i32
    %c0_i32_0 = arith.constant 0 : i32
    %c0_i32_1 = arith.constant 0 : i32
    return %c0_i32, %c0_i32_0 : i32, i32
  }
  func.func @transform_6(%arg0: i32, %arg1: i32) -> (i32, i32) {
    %c0_i32 = arith.constant 0 : i32
    %c0_i32_0 = arith.constant 0 : i32
    %c0_i32_1 = arith.constant 0 : i32
    return %c0_i32, %c0_i32_0 : i32, i32
  }
  func.func @transform_7(%arg0: i32, %arg1: i32) -> (i32, i32) {
    %c0_i32 = arith.constant 0 : i32
    %c0_i32_0 = arith.constant 0 : i32
    %c0_i32_1 = arith.constant 0 : i32
    return %c0_i32, %c0_i32_0 : i32, i32
  }
  func.func @transform_8(%arg0: i32, %arg1: i32) -> (i32, i32, i32) {
    %c0_i32 = arith.constant 0 : i32
    %c0_i32_0 = arith.constant 0 : i32
    return %arg0, %arg1, %c0_i32 : i32, i32, i32
  }
}

module attributes {stable_mosaic.version = 11 : i64} {
  func.func @transformer_layer_kernel(%arg0: i32, %arg1: i32, %arg2: memref<1x16x128xf32, #tpu.memory_space<vmem>>, %arg3: memref<128x128xbf16, #tpu.memory_space<vmem>>, %arg4: memref<128x256xbf16, #tpu.memory_space<vmem>>, %arg5: memref<128x128xbf16, #tpu.memory_space<vmem>>, %arg6: memref<128x256xbf16, #tpu.memory_space<vmem>>, %arg7: memref<256x128xbf16, #tpu.memory_space<vmem>>, %arg8: memref<9x128xf32, #tpu.memory_space<vmem>>, %arg9: memref<1x256xf32, #tpu.memory_space<vmem>>, %arg10: memref<1x16x128xf32, #tpu.memory_space<vmem>>, %arg11: memref<16x256xbf16, #tpu.memory_space<vmem>>) attributes {dimension_semantics = [#tpu.dimension_semantics<parallel>, #tpu.dimension_semantics<arbitrary>], iteration_bounds = array<i64: 2, 1>, scalar_prefetch = 0 : i64, scratch_operands = 1 : i64, tpu.core_type = #tpu.core_type<tc>, window_params = [{transform_indices = @transform_0, window_bounds = array<i64: 1, 16, 128>}, {pipeline_mode = #tpu.pipeline_mode<synchronous>, transform_indices = @transform_1, window_bounds = array<i64: 128, 128>}, {pipeline_mode = #tpu.pipeline_mode<synchronous>, transform_indices = @transform_2, window_bounds = array<i64: 128, 256>}, {pipeline_mode = #tpu.pipeline_mode<synchronous>, transform_indices = @transform_3, window_bounds = array<i64: 128, 128>}, {pipeline_mode = #tpu.pipeline_mode<synchronous>, transform_indices = @transform_4, window_bounds = array<i64: 128, 256>}, {pipeline_mode = #tpu.pipeline_mode<synchronous>, transform_indices = @transform_5, window_bounds = array<i64: 256, 128>}, {pipeline_mode = #tpu.pipeline_mode<synchronous>, transform_indices = @transform_6, window_bounds = array<i64: 9, 128>}, {pipeline_mode = #tpu.pipeline_mode<synchronous>, transform_indices = @transform_7, window_bounds = array<i64: 1, 256>}, {transform_indices = @transform_8, window_bounds = array<i64: 1, 16, 128>}]} {
    %c0 = arith.constant 0 : index
    %c0_0 = arith.constant 0 : index
    %0 = vector.load %arg8[%c0, %c0_0] : memref<9x128xf32, #tpu.memory_space<vmem>>, vector<9x128xf32>
    %1 = vector.extract_strided_slice %0 {offsets = [0, 0], sizes = [1, 128], strides = [1, 1]} : vector<9x128xf32> to vector<1x128xf32>
    %2 = vector.extract_strided_slice %0 {offsets = [1, 0], sizes = [1, 128], strides = [1, 1]} : vector<9x128xf32> to vector<1x128xf32>
    %3 = vector.extract_strided_slice %0 {offsets = [2, 0], sizes = [1, 128], strides = [1, 1]} : vector<9x128xf32> to vector<1x128xf32>
    %4 = vector.extract_strided_slice %0 {offsets = [3, 0], sizes = [1, 128], strides = [1, 1]} : vector<9x128xf32> to vector<1x128xf32>
    %5 = vector.extract_strided_slice %0 {offsets = [4, 0], sizes = [1, 128], strides = [1, 1]} : vector<9x128xf32> to vector<1x128xf32>
    %6 = vector.extract_strided_slice %0 {offsets = [5, 0], sizes = [1, 128], strides = [1, 1]} : vector<9x128xf32> to vector<1x128xf32>
    %7 = vector.extract_strided_slice %0 {offsets = [6, 0], sizes = [1, 128], strides = [1, 1]} : vector<9x128xf32> to vector<1x128xf32>
    %8 = vector.extract_strided_slice %0 {offsets = [7, 0], sizes = [1, 128], strides = [1, 1]} : vector<9x128xf32> to vector<1x128xf32>
    %9 = vector.extract_strided_slice %0 {offsets = [8, 0], sizes = [1, 128], strides = [1, 1]} : vector<9x128xf32> to vector<1x128xf32>
    %c0_i32 = arith.constant 0 : i32
    %10 = arith.cmpi eq, %arg1, %c0_i32 : i32
    %11 = arith.extui %10 : i1 to i32
    %c0_i32_1 = arith.constant 0 : i32
    %12 = arith.cmpi ne, %11, %c0_i32_1 : i32
    scf.if %12 {
      %c0_38 = arith.constant 0 : index
      %c0_39 = arith.constant 0 : index
      %c0_40 = arith.constant 0 : index
      %106 = vector.load %arg2[%c0_38, %c0_39, %c0_40] : memref<1x16x128xf32, #tpu.memory_space<vmem>>, vector<1x16x128xf32>
      %107 = vector.shape_cast %106 : vector<1x16x128xf32> to vector<16x128xf32>
      %108 = arith.truncf %107 : vector<16x128xf32> to vector<16x128xbf16>
      %c0_41 = arith.constant 0 : index
      %c0_42 = arith.constant 0 : index
      %109 = vector.load %arg4[%c0_41, %c0_42] : memref<128x256xbf16, #tpu.memory_space<vmem>>, vector<128x256xbf16>
      %cst_43 = arith.constant dense<0.000000e+00> : vector<16x256xf32>
      %110 = tpu.matmul %108, %109, %cst_43 {dimension_numbers = #tpu.dot_dimension_numbers<[1], [0], [0], [1], [0, 0, 1, 1], [], []>} : vector<16x128xbf16>, vector<128x256xbf16>, vector<16x256xf32> -> vector<16x256xf32>
      %111 = vector.extract_strided_slice %110 {offsets = [0, 0], sizes = [16, 128], strides = [1, 1]} : vector<16x256xf32> to vector<16x128xf32>
      %112 = vector.broadcast %2 : vector<1x128xf32> to vector<16x128xf32>
      %113 = arith.addf %111, %112 : vector<16x128xf32>
      %114 = arith.truncf %113 : vector<16x128xf32> to vector<16x128xbf16>
      %c0_44 = arith.constant 0 : index
      %c0_45 = arith.constant 0 : index
      %115 = vector.load %arg11[%c0_44, %c0_45] : memref<16x256xbf16, #tpu.memory_space<vmem>>, vector<16x128xbf16>
      tpu.vector_store %arg11[%c0_44, %c0_45], %114 {strides = array<i32>} : memref<16x256xbf16, #tpu.memory_space<vmem>>, vector<16x128xbf16>,
      %116 = vector.extract_strided_slice %110 {offsets = [0, 128], sizes = [16, 128], strides = [1, 1]} : vector<16x256xf32> to vector<16x128xf32>
      %117 = vector.broadcast %3 : vector<1x128xf32> to vector<16x128xf32>
      %118 = arith.addf %116, %117 : vector<16x128xf32>
      %119 = arith.truncf %118 : vector<16x128xf32> to vector<16x128xbf16>
      %c0_46 = arith.constant 0 : index
      %c128_47 = arith.constant 128 : index
      %120 = vector.load %arg11[%c0_46, %c128_47] : memref<16x256xbf16, #tpu.memory_space<vmem>>, vector<16x128xbf16>
      tpu.vector_store %arg11[%c0_46, %c128_47], %119 {strides = array<i32>} : memref<16x256xbf16, #tpu.memory_space<vmem>>, vector<16x128xbf16>,
    } else {
    }
    %c16_i32 = arith.constant 16 : i32
    %13 = arith.muli %arg1, %c16_i32 : i32
    %14 = tpu.assume_multiple %13, 16 : i32
    %c0_2 = arith.constant 0 : index
    %15 = arith.index_cast %14 : i32 to index
    %c0_3 = arith.constant 0 : index
    %16 = vector.load %arg2[%c0_2, %15, %c0_3] : memref<1x16x128xf32, #tpu.memory_space<vmem>>, vector<1x16x128xf32>
    %17 = vector.shape_cast %16 : vector<1x16x128xf32> to vector<16x128xf32>
    %18 = arith.truncf %17 : vector<16x128xf32> to vector<16x128xbf16>
    %c0_4 = arith.constant 0 : index
    %c0_5 = arith.constant 0 : index
    %19 = vector.load %arg3[%c0_4, %c0_5] : memref<128x128xbf16, #tpu.memory_space<vmem>>, vector<128x128xbf16>
    %cst = arith.constant dense<0.000000e+00> : vector<16x128xf32>
    %20 = tpu.matmul %18, %19, %cst {dimension_numbers = #tpu.dot_dimension_numbers<[1], [0], [0], [1], [0, 0, 1, 1], [], []>} : vector<16x128xbf16>, vector<128x128xbf16>, vector<16x128xf32> -> vector<16x128xf32>
    %21 = vector.broadcast %1 : vector<1x128xf32> to vector<16x128xf32>
    %22 = arith.addf %20, %21 : vector<16x128xf32>
    %c0_6 = arith.constant 0 : index
    %c0_7 = arith.constant 0 : index
    %23 = vector.load %arg11[%c0_6, %c0_7] : memref<16x256xbf16, #tpu.memory_space<vmem>>, vector<16x128xbf16>
    %c0_8 = arith.constant 0 : index
    %c128 = arith.constant 128 : index
    %24 = vector.load %arg11[%c0_8, %c128] : memref<16x256xbf16, #tpu.memory_space<vmem>>, vector<16x128xbf16>
    %25 = arith.truncf %22 : vector<16x128xf32> to vector<16x128xbf16>
    %cst_9 = arith.constant dense<0.000000e+00> : vector<16x16xf32>
    %26 = tpu.matmul %25, %23, %cst_9 {dimension_numbers = #tpu.dot_dimension_numbers<[1], [1], [0], [0], [0, 0, 1, 0], [], []>} : vector<16x128xbf16>, vector<16x128xbf16>, vector<16x16xf32> -> vector<16x16xf32>
    %cst_10 = arith.constant dense<0xFF800000> : vector<16xf32>
    %27 = vector.multi_reduction <maximumf>, %26, %cst_10 [1] : vector<16x16xf32> to vector<16xf32>
    %28 = vector.shape_cast %27 : vector<16xf32> to vector<16x1xf32>
    %29 = vector.broadcast %28 : vector<16x1xf32> to vector<16x16xf32>
    %30 = arith.subf %26, %29 : vector<16x16xf32>
    %31 = math.exp %30 : vector<16x16xf32>
    %cst_11 = arith.constant dense<0.000000e+00> : vector<16xf32>
    %32 = vector.multi_reduction <add>, %31, %cst_11 [1] : vector<16x16xf32> to vector<16xf32>
    %33 = vector.shape_cast %32 : vector<16xf32> to vector<16x1xf32>
    %34 = arith.truncf %31 : vector<16x16xf32> to vector<16x16xbf16>
    %cst_12 = arith.constant dense<0.000000e+00> : vector<16x128xf32>
    %35 = tpu.matmul %34, %24, %cst_12 {dimension_numbers = #tpu.dot_dimension_numbers<[1], [0], [0], [1], [0, 0, 1, 1], [], []>} : vector<16x16xbf16>, vector<16x128xbf16>, vector<16x128xf32> -> vector<16x128xf32>
    %36 = tpu.reciprocal %33 {approx = true} : vector<16x1xf32> -> vector<16x1xf32>
    %37 = vector.broadcast %36 : vector<16x1xf32> to vector<16x128xf32>
    %38 = arith.mulf %35, %37 : vector<16x128xf32>
    %39 = arith.truncf %38 : vector<16x128xf32> to vector<16x128xbf16>
    %c0_13 = arith.constant 0 : index
    %c0_14 = arith.constant 0 : index
    %40 = vector.load %arg5[%c0_13, %c0_14] : memref<128x128xbf16, #tpu.memory_space<vmem>>, vector<128x128xbf16>
    %cst_15 = arith.constant dense<0.000000e+00> : vector<16x128xf32>
    %41 = tpu.matmul %39, %40, %cst_15 {dimension_numbers = #tpu.dot_dimension_numbers<[1], [0], [0], [1], [0, 0, 1, 1], [], []>} : vector<16x128xbf16>, vector<128x128xbf16>, vector<16x128xf32> -> vector<16x128xf32>
    %42 = vector.broadcast %4 : vector<1x128xf32> to vector<16x128xf32>
    %43 = arith.addf %41, %42 : vector<16x128xf32>
    %44 = arith.addf %17, %43 : vector<16x128xf32>
    %cst_16 = arith.constant dense<0.000000e+00> : vector<16xf32>
    %45 = vector.multi_reduction <add>, %44, %cst_16 [1] : vector<16x128xf32> to vector<16xf32>
    %46 = vector.shape_cast %45 : vector<16xf32> to vector<16x1xf32>
    %cst_17 = arith.constant 1.280000e+02 : f32
    %47 = vector.broadcast %cst_17 : f32 to vector<16x1xf32>
    %48 = arith.divf %46, %47 : vector<16x1xf32>
    %49 = vector.broadcast %48 : vector<16x1xf32> to vector<16x128xf32>
    %50 = arith.subf %44, %49 : vector<16x128xf32>
    %51 = arith.mulf %50, %50 : vector<16x128xf32>
    %cst_18 = arith.constant dense<0.000000e+00> : vector<16xf32>
    %52 = vector.multi_reduction <add>, %51, %cst_18 [1] : vector<16x128xf32> to vector<16xf32>
    %53 = vector.shape_cast %52 : vector<16xf32> to vector<16x1xf32>
    %cst_19 = arith.constant 1.280000e+02 : f32
    %54 = vector.broadcast %cst_19 : f32 to vector<16x1xf32>
    %55 = arith.divf %53, %54 : vector<16x1xf32>
    %56 = vector.broadcast %48 : vector<16x1xf32> to vector<16x128xf32>
    %57 = arith.subf %44, %56 : vector<16x128xf32>
    %cst_20 = arith.constant 9.99999974E-6 : f32
    %58 = vector.broadcast %cst_20 : f32 to vector<16x1xf32>
    %59 = arith.addf %55, %58 : vector<16x1xf32>
    %60 = math.rsqrt %59 : vector<16x1xf32>
    %61 = vector.broadcast %60 : vector<16x1xf32> to vector<16x128xf32>
    %62 = arith.mulf %57, %61 : vector<16x128xf32>
    %63 = vector.broadcast %6 : vector<1x128xf32> to vector<16x128xf32>
    %64 = arith.mulf %62, %63 : vector<16x128xf32>
    %65 = vector.broadcast %7 : vector<1x128xf32> to vector<16x128xf32>
    %66 = arith.addf %64, %65 : vector<16x128xf32>
    %67 = arith.truncf %66 : vector<16x128xf32> to vector<16x128xbf16>
    %c0_21 = arith.constant 0 : index
    %c0_22 = arith.constant 0 : index
    %68 = vector.load %arg6[%c0_21, %c0_22] : memref<128x256xbf16, #tpu.memory_space<vmem>>, vector<128x256xbf16>
    %cst_23 = arith.constant dense<0.000000e+00> : vector<16x256xf32>
    %69 = tpu.matmul %67, %68, %cst_23 {dimension_numbers = #tpu.dot_dimension_numbers<[1], [0], [0], [1], [0, 0, 1, 1], [], []>} : vector<16x128xbf16>, vector<128x256xbf16>, vector<16x256xf32> -> vector<16x256xf32>
    %c0_24 = arith.constant 0 : index
    %c0_25 = arith.constant 0 : index
    %70 = vector.load %arg9[%c0_24, %c0_25] : memref<1x256xf32, #tpu.memory_space<vmem>>, vector<1x256xf32>
    %71 = vector.broadcast %70 : vector<1x256xf32> to vector<16x256xf32>
    %72 = arith.addf %69, %71 : vector<16x256xf32>
    %cst_26 = arith.constant 0.000000e+00 : f32
    %73 = vector.broadcast %cst_26 : f32 to vector<16x256xf32>
    %74 = arith.maximumf %72, %73 : vector<16x256xf32>
    %75 = arith.truncf %74 : vector<16x256xf32> to vector<16x256xbf16>
    %c0_27 = arith.constant 0 : index
    %c0_28 = arith.constant 0 : index
    %76 = vector.load %arg7[%c0_27, %c0_28] : memref<256x128xbf16, #tpu.memory_space<vmem>>, vector<256x128xbf16>
    %cst_29 = arith.constant dense<0.000000e+00> : vector<16x128xf32>
    %77 = tpu.matmul %75, %76, %cst_29 {dimension_numbers = #tpu.dot_dimension_numbers<[1], [0], [0], [1], [0, 0, 1, 1], [], []>} : vector<16x256xbf16>, vector<256x128xbf16>, vector<16x128xf32> -> vector<16x128xf32>
    %78 = vector.broadcast %5 : vector<1x128xf32> to vector<16x128xf32>
    %79 = arith.addf %77, %78 : vector<16x128xf32>
    %80 = arith.addf %66, %79 : vector<16x128xf32>
    %cst_30 = arith.constant dense<0.000000e+00> : vector<16xf32>
    %81 = vector.multi_reduction <add>, %80, %cst_30 [1] : vector<16x128xf32> to vector<16xf32>
    %82 = vector.shape_cast %81 : vector<16xf32> to vector<16x1xf32>
    %cst_31 = arith.constant 1.280000e+02 : f32
    %83 = vector.broadcast %cst_31 : f32 to vector<16x1xf32>
    %84 = arith.divf %82, %83 : vector<16x1xf32>
    %85 = vector.broadcast %84 : vector<16x1xf32> to vector<16x128xf32>
    %86 = arith.subf %80, %85 : vector<16x128xf32>
    %87 = arith.mulf %86, %86 : vector<16x128xf32>
    %cst_32 = arith.constant dense<0.000000e+00> : vector<16xf32>
    %88 = vector.multi_reduction <add>, %87, %cst_32 [1] : vector<16x128xf32> to vector<16xf32>
    %89 = vector.shape_cast %88 : vector<16xf32> to vector<16x1xf32>
    %cst_33 = arith.constant 1.280000e+02 : f32
    %90 = vector.broadcast %cst_33 : f32 to vector<16x1xf32>
    %91 = arith.divf %89, %90 : vector<16x1xf32>
    %92 = vector.broadcast %84 : vector<16x1xf32> to vector<16x128xf32>
    %93 = arith.subf %80, %92 : vector<16x128xf32>
    %cst_34 = arith.constant 9.99999974E-6 : f32
    %94 = vector.broadcast %cst_34 : f32 to vector<16x1xf32>
    %95 = arith.addf %91, %94 : vector<16x1xf32>
    %96 = math.rsqrt %95 : vector<16x1xf32>
    %97 = vector.broadcast %96 : vector<16x1xf32> to vector<16x128xf32>
    %98 = arith.mulf %93, %97 : vector<16x128xf32>
    %99 = vector.broadcast %8 : vector<1x128xf32> to vector<16x128xf32>
    %100 = arith.mulf %98, %99 : vector<16x128xf32>
    %101 = vector.broadcast %9 : vector<1x128xf32> to vector<16x128xf32>
    %102 = arith.addf %100, %101 : vector<16x128xf32>
    %c0_35 = arith.constant 0 : index
    %c0_36 = arith.constant 0 : index
    %c0_37 = arith.constant 0 : index
    %103 = vector.load %arg10[%c0_35, %c0_36, %c0_37] : memref<1x16x128xf32, #tpu.memory_space<vmem>>, vector<1x16x128xf32>
    %104 = vector.shape_cast %103 : vector<1x16x128xf32> to vector<16x128xf32>
    %105 = vector.shape_cast %102 : vector<16x128xf32> to vector<1x16x128xf32>
    tpu.vector_store %arg10[%c0_35, %c0_36, %c0_37], %105 {strides = array<i32>} : memref<1x16x128xf32, #tpu.memory_space<vmem>>, vector<1x16x128xf32>,
    return
  }
  func.func @transform_0(%arg0: i32, %arg1: i32) -> (i32, i32, i32) {
    %c0_i32 = arith.constant 0 : i32
    %c0_i32_0 = arith.constant 0 : i32
    %c0_i32_1 = arith.constant 0 : i32
    return %arg0, %c0_i32, %c0_i32_0 : i32, i32, i32
  }
  func.func @transform_1(%arg0: i32, %arg1: i32) -> (i32, i32) {
    %c0_i32 = arith.constant 0 : i32
    %c0_i32_0 = arith.constant 0 : i32
    %c0_i32_1 = arith.constant 0 : i32
    return %c0_i32, %c0_i32_0 : i32, i32
  }
  func.func @transform_2(%arg0: i32, %arg1: i32) -> (i32, i32) {
    %c0_i32 = arith.constant 0 : i32
    %c0_i32_0 = arith.constant 0 : i32
    %c0_i32_1 = arith.constant 0 : i32
    return %c0_i32, %c0_i32_0 : i32, i32
  }
  func.func @transform_3(%arg0: i32, %arg1: i32) -> (i32, i32) {
    %c0_i32 = arith.constant 0 : i32
    %c0_i32_0 = arith.constant 0 : i32
    %c0_i32_1 = arith.constant 0 : i32
    return %c0_i32, %c0_i32_0 : i32, i32
  }
  func.func @transform_4(%arg0: i32, %arg1: i32) -> (i32, i32) {
    %c0_i32 = arith.constant 0 : i32
    %c0_i32_0 = arith.constant 0 : i32
    %c0_i32_1 = arith.constant 0 : i32
    return %c0_i32, %c0_i32_0 : i32, i32
  }
  func.func @transform_5(%arg0: i32, %arg1: i32) -> (i32, i32) {
    %c0_i32 = arith.constant 0 : i32
    %c0_i32_0 = arith.constant 0 : i32
    %c0_i32_1 = arith.constant 0 : i32
    return %c0_i32, %c0_i32_0 : i32, i32
  }
  func.func @transform_6(%arg0: i32, %arg1: i32) -> (i32, i32) {
    %c0_i32 = arith.constant 0 : i32
    %c0_i32_0 = arith.constant 0 : i32
    %c0_i32_1 = arith.constant 0 : i32
    return %c0_i32, %c0_i32_0 : i32, i32
  }
  func.func @transform_7(%arg0: i32, %arg1: i32) -> (i32, i32) {
    %c0_i32 = arith.constant 0 : i32
    %c0_i32_0 = arith.constant 0 : i32
    %c0_i32_1 = arith.constant 0 : i32
    return %c0_i32, %c0_i32_0 : i32, i32
  }
  func.func @transform_8(%arg0: i32, %arg1: i32) -> (i32, i32, i32) {
    %c0_i32 = arith.constant 0 : i32
    %c0_i32_0 = arith.constant 0 : i32
    return %arg0, %arg1, %c0_i32 : i32, i32, i32
  }
}

</mosaic_0001>

<llo_original>
// kernel: tpu_custom_call.1
$region0: #{tpu_custom_call.1}
  #allocation0 [shape = 'u32[]', space=smem, size = 0x4, offset = 0x4, fixed_abs, tag = 'smem constant byte address 0x4 - core index']
  #allocation1 [shape = 'u32[144,128]{1,0:T(1,128)}', space=vmem, size = 0x12000, scoped, tag = 'internal scratch']
  #allocation2 [shape = 'bf16[16,256]{1,0:T(16,128)(2,1)}', space=vmem, size = 0x2000, scoped, tag = 'scratch operand']
  %s0 = inlined_call_operand.hbm [shape: f32[2,16,128], index: 0, kind: input, shape index: {}]
  %s1 = inlined_call_operand.hbm [shape: bf16[128,128], index: 1, kind: input, shape index: {}]
  %s2 = inlined_call_operand.hbm [shape: bf16[128,256], index: 2, kind: input, shape index: {}]
  %s3 = inlined_call_operand.hbm [shape: bf16[128,128], index: 3, kind: input, shape index: {}]
  %s4 = inlined_call_operand.hbm [shape: bf16[128,256], index: 4, kind: input, shape index: {}]
  %s5 = inlined_call_operand.hbm [shape: bf16[256,128], index: 5, kind: input, shape index: {}]
  %s6 = inlined_call_operand.vmem [shape: f32[9,128], index: 6, kind: input, shape index: {}]
  %s7 = inlined_call_operand.vmem [shape: f32[1,256], index: 7, kind: input, shape index: {}]
  %s8 = inlined_call_operand.hbm [shape: f32[2,16,128], index: 8, kind: output, shape index: {}]
  %s9 = sld [smem:[#allocation0]]
  $region93: #{tpu_custom_call.1} parent=0
    _
  %s11 = ssub.s32 1, %s9
  %s12 = scalar_select 0, %s11, %s9
  $region1: #{tpu_custom_call.1} parent=0
    #allocation3 [shape = 'u8[16384]{0}', space=vmem, size = 0x4000, scoped, tag = 'input window, operand 0']
    #allocation4 [shape = 's32[2]{0}', space=sflag, size = 0x8, scoped, tag = 'scoped memory for tpu_custom_call.1']
    #allocation5 [shape = 's32[2]{0}', space=sflag, size = 0x8, scoped, tag = 'scoped memory for tpu_custom_call.1']
    #allocation6 [shape = 'u8[32768]{0}', space=vmem, size = 0x8000, scoped, tag = 'input window, operand 1, single buffered']
    #allocation7 [shape = 's32[1]{0}', space=sflag, size = 0x4, scoped, tag = 'scoped memory for tpu_custom_call.1']
    #allocation8 [shape = 'u8[65536]{0}', space=vmem, size = 0x10000, scoped, tag = 'input window, operand 2, single buffered']
    #allocation9 [shape = 'u8[32768]{0}', space=vmem, size = 0x8000, scoped, tag = 'input window, operand 3, single buffered']
    #allocation10 [shape = 's32[1]{0}', space=sflag, size = 0x4, scoped, tag = 'scoped memory for tpu_custom_call.1']
    #allocation11 [shape = 'u8[65536]{0}', space=vmem, size = 0x10000, scoped, tag = 'input window, operand 4, single buffered']
    #allocation12 [shape = 'u8[65536]{0}', space=vmem, size = 0x10000, scoped, tag = 'input window, operand 5, single buffered']
    #allocation13 [shape = 's32[1]{0}', space=sflag, size = 0x4, scoped, tag = 'scoped memory for tpu_custom_call.1']
    #allocation14 [shape = 'u8[16384]{0}', space=vmem, size = 0x4000, scoped, tag = 'output window, operand 0']
    %13 = vsyncpa [#allocation4], 0
    %s14 = scalar_lea.sflag [#allocation4], 1
    %15 = vsyncpa %s14, 0
    %16 = vsyncpa [#allocation7], 0
    %17 = vsyncpa [#allocation10], 0
    %18 = vsyncpa [#allocation13], 0
    %19 = vsyncpa [#allocation5], 0
    %s20 = scalar_lea.sflag [#allocation5], 1
    %21 = vsyncpa %s20, 0
    loop: start=0, step=1, limit=4
    $region2: #{tpu_custom_call.1} parent=1 // loop_pre_header
      _
    $region3: #{tpu_custom_call.1} parent=1 // loop_header
      %s23 = sphi 0, %s27
      %p24 = scmp.ge.s32.totalorder %s23, 4
      %s30 = sphi 0, %s42
      %s31 = sphi 0, %s38
      %s32 = sphi 0, %s30
      %s33 = sphi 0, %s31
      %s34 = sphi 0, %s32
      %s35 = sphi 0, %s33
      %s45 = sphi 0, %s47
      %s48 = sphi 0, %s45
      %s49 = sphi 0, %s48
      %s65 = sphi 0, %s49
      %s69 = sphi 0, %s69
      %s71 = sphi 0, %s69
      %s72 = sphi 0, %s71
      %s86 = sphi 0, %s72
      %s90 = sphi 0, %s90
      %s92 = sphi 0, %s90
      %s93 = sphi 0, %s92
      %s107 = sphi 0, %s93
      %s111 = sphi 0, %s111
      %s113 = sphi 0, %s111
      %s114 = sphi 0, %s113
      %s128 = sphi 0, %s114
      %s132 = sphi 0, %s132
      %s134 = sphi 0, %s132
      %s135 = sphi 0, %s134
      %s149 = sphi 0, %s135
      %s153 = sphi 0, %s153
      %s155 = sphi 0, %s153
      %s156 = sphi 0, %s155
      %s170 = sphi 0, %s156
      %s174 = sphi 0, %s174
      %s176 = sphi 0, %s174
      %s177 = sphi 0, %s176
      %s191 = sphi 0, %s177
      %s195 = sphi 0, %s195
      %s197 = sphi 0, %s195
      %s198 = sphi 0, %s197
      %s212 = sphi 0, %s198
      %s220 = sphi 0, %s222
      %s223 = sphi 0, %s220
      %s224 = sphi 0, %s223
      %s240 = sphi 0, %s224
    $region4: #{tpu_custom_call.1} parent=1 // loop_header_branch
      %26 = sbr.rel (%p24) target = $region8
    $region5: #{tpu_custom_call.1} parent=1 // loop_body
      %s28 = ssub.s32 %s23, 1
      %s29 = ssub.s32 %s23, 2
      %s36 = sadd.s32 1, %s31
      %p37 = scmp.ge.s32.totalorder %s36, 1
      %s38 = scalar_select %p37, 0, %s36
      %s39 = sadd.s32 1, %s30
      %s40 = scalar_select %p37, %s39, %s30
      %p41 = scmp.ge.s32.totalorder %s40, 2
      %s42 = scalar_select %p41, 0, %s40
      %s43 = ssub.s32 %s30, %s42
      %p44 = scmp.eq.s32.totalorder %s43, 0
      %s46 = sadd.s32 %s45, 1
      %s47 = scalar_select %p44, %s45, %s46
      %p50 = pneg %p44
      %p51 = scmp.eq.s32.totalorder %s23, 1
      %p52 = por %p50, %p51
      %p53 = scmp.ne.s32.totalorder %s45, %s48
      %p54 = scmp.eq.s32.totalorder %s23, 0
      %p55 = por %p53, %p54
      %p56 = scmp.ne.s32.totalorder %s45, %s48
      %p57 = scmp.eq.s32.totalorder %s28, 1
      %p58 = por %p56, %p57
      %p59 = scmp.ne.s32.totalorder %s48, %s49
      %p60 = scmp.eq.s32.totalorder %s28, 0
      %p61 = por %p59, %p60
      %p62 = scmp.ne.s32.totalorder %s48, %s49
      %p63 = scmp.eq.s32.totalorder %s29, 1
      %p64 = por %p62, %p63
      %p66 = scmp.ne.s32.totalorder %s49, %s65
      %p67 = scmp.eq.s32.totalorder %s29, 0
      %p68 = por %p66, %p67
      %s70 = sadd.s32 %s69, 1
      %p73 = scmp.eq.s32.totalorder %s23, 1
      %p74 = scmp.ne.s32.totalorder %s69, %s71
      %p75 = scmp.eq.s32.totalorder %s23, 0
      %p76 = por %p74, %p75
      %p77 = scmp.ne.s32.totalorder %s69, %s71
      %p78 = scmp.eq.s32.totalorder %s28, 1
      %p79 = por %p77, %p78
      %p80 = scmp.ne.s32.totalorder %s71, %s72
      %p81 = scmp.eq.s32.totalorder %s28, 0
      %p82 = por %p80, %p81
      %p83 = scmp.ne.s32.totalorder %s71, %s72
      %p84 = scmp.eq.s32.totalorder %s29, 1
      %p85 = por %p83, %p84
      %p87 = scmp.ne.s32.totalorder %s72, %s86
      %p88 = scmp.eq.s32.totalorder %s29, 0
      %p89 = por %p87, %p88
      %s91 = sadd.s32 %s90, 1
      %p94 = scmp.eq.s32.totalorder %s23, 1
      %p95 = scmp.ne.s32.totalorder %s90, %s92
      %p96 = scmp.eq.s32.totalorder %s23, 0
      %p97 = por %p95, %p96
      %p98 = scmp.ne.s32.totalorder %s90, %s92
      %p99 = scmp.eq.s32.totalorder %s28, 1
      %p100 = por %p98, %p99
      %p101 = scmp.ne.s32.totalorder %s92, %s93
      %p102 = scmp.eq.s32.totalorder %s28, 0
      %p103 = por %p101, %p102
      %p104 = scmp.ne.s32.totalorder %s92, %s93
      %p105 = scmp.eq.s32.totalorder %s29, 1
      %p106 = por %p104, %p105
      %p108 = scmp.ne.s32.totalorder %s93, %s107
      %p109 = scmp.eq.s32.totalorder %s29, 0
      %p110 = por %p108, %p109
      %s112 = sadd.s32 %s111, 1
      %p115 = scmp.eq.s32.totalorder %s23, 1
      %p116 = scmp.ne.s32.totalorder %s111, %s113
      %p117 = scmp.eq.s32.totalorder %s23, 0
      %p118 = por %p116, %p117
      %p119 = scmp.ne.s32.totalorder %s111, %s113
      %p120 = scmp.eq.s32.totalorder %s28, 1
      %p121 = por %p119, %p120
      %p122 = scmp.ne.s32.totalorder %s113, %s114
      %p123 = scmp.eq.s32.totalorder %s28, 0
      %p124 = por %p122, %p123
      %p125 = scmp.ne.s32.totalorder %s113, %s114
      %p126 = scmp.eq.s32.totalorder %s29, 1
      %p127 = por %p125, %p126
      %p129 = scmp.ne.s32.totalorder %s114, %s128
      %p130 = scmp.eq.s32.totalorder %s29, 0
      %p131 = por %p129, %p130
      %s133 = sadd.s32 %s132, 1
      %p136 = scmp.eq.s32.totalorder %s23, 1
      %p137 = scmp.ne.s32.totalorder %s132, %s134
      %p138 = scmp.eq.s32.totalorder %s23, 0
      %p139 = por %p137, %p138
      %p140 = scmp.ne.s32.totalorder %s132, %s134
      %p141 = scmp.eq.s32.totalorder %s28, 1
      %p142 = por %p140, %p141
      %p143 = scmp.ne.s32.totalorder %s134, %s135
      %p144 = scmp.eq.s32.totalorder %s28, 0
      %p145 = por %p143, %p144
      %p146 = scmp.ne.s32.totalorder %s134, %s135
      %p147 = scmp.eq.s32.totalorder %s29, 1
      %p148 = por %p146, %p147
      %p150 = scmp.ne.s32.totalorder %s135, %s149
      %p151 = scmp.eq.s32.totalorder %s29, 0
      %p152 = por %p150, %p151
      %s154 = sadd.s32 %s153, 1
      %p157 = scmp.eq.s32.totalorder %s23, 1
      %p158 = scmp.ne.s32.totalorder %s153, %s155
      %p159 = scmp.eq.s32.totalorder %s23, 0
      %p160 = por %p158, %p159
      %p161 = scmp.ne.s32.totalorder %s153, %s155
      %p162 = scmp.eq.s32.totalorder %s28, 1
      %p163 = por %p161, %p162
      %p164 = scmp.ne.s32.totalorder %s155, %s156
      %p165 = scmp.eq.s32.totalorder %s28, 0
      %p166 = por %p164, %p165
      %p167 = scmp.ne.s32.totalorder %s155, %s156
      %p168 = scmp.eq.s32.totalorder %s29, 1
      %p169 = por %p167, %p168
      %p171 = scmp.ne.s32.totalorder %s156, %s170
      %p172 = scmp.eq.s32.totalorder %s29, 0
      %p173 = por %p171, %p172
      %s175 = sadd.s32 %s174, 1
      %p178 = scmp.eq.s32.totalorder %s23, 1
      %p179 = scmp.ne.s32.totalorder %s174, %s176
      %p180 = scmp.eq.s32.totalorder %s23, 0
      %p181 = por %p179, %p180
      %p182 = scmp.ne.s32.totalorder %s174, %s176
      %p183 = scmp.eq.s32.totalorder %s28, 1
      %p184 = por %p182, %p183
      %p185 = scmp.ne.s32.totalorder %s176, %s177
      %p186 = scmp.eq.s32.totalorder %s28, 0
      %p187 = por %p185, %p186
      %p188 = scmp.ne.s32.totalorder %s176, %s177
      %p189 = scmp.eq.s32.totalorder %s29, 1
      %p190 = por %p188, %p189
      %p192 = scmp.ne.s32.totalorder %s177, %s191
      %p193 = scmp.eq.s32.totalorder %s29, 0
      %p194 = por %p192, %p193
      %s196 = sadd.s32 %s195, 1
      %p199 = scmp.eq.s32.totalorder %s23, 1
      %p200 = scmp.ne.s32.totalorder %s195, %s197
      %p201 = scmp.eq.s32.totalorder %s23, 0
      %p202 = por %p200, %p201
      %p203 = scmp.ne.s32.totalorder %s195, %s197
      %p204 = scmp.eq.s32.totalorder %s28, 1
      %p205 = por %p203, %p204
      %p206 = scmp.ne.s32.totalorder %s197, %s198
      %p207 = scmp.eq.s32.totalorder %s28, 0
      %p208 = por %p206, %p207
      %p209 = scmp.ne.s32.totalorder %s197, %s198
      %p210 = scmp.eq.s32.totalorder %s29, 1
      %p211 = por %p209, %p210
      %p213 = scmp.ne.s32.totalorder %s198, %s212
      %p214 = scmp.eq.s32.totalorder %s29, 0
      %p215 = por %p213, %p214
      %s216 = ssub.s32 %s30, %s42
      %s217 = ssub.s32 %s31, %s38
      %s218 = sor.u32 %s216, %s217
      %p219 = scmp.eq.s32.totalorder %s218, 0
      %s221 = sadd.s32 %s220, 1
      %s222 = scalar_select %p219, %s220, %s221
      %p225 = pneg %p219
      %p226 = scmp.eq.s32.totalorder %s23, 1
      %p227 = por %p225, %p226
      %p228 = scmp.ne.s32.totalorder %s220, %s223
      %p229 = scmp.eq.s32.totalorder %s23, 0
      %p230 = por %p228, %p229
      %p231 = scmp.ne.s32.totalorder %s220, %s223
      %p232 = scmp.eq.s32.totalorder %s28, 1
      %p233 = por %p231, %p232
      %p234 = scmp.ne.s32.totalorder %s223, %s224
      %p235 = scmp.eq.s32.totalorder %s28, 0
      %p236 = por %p234, %p235
      %p237 = scmp.ne.s32.totalorder %s223, %s224
      %p238 = scmp.eq.s32.totalorder %s29, 1
      %p239 = por %p237, %p238
      %p241 = scmp.ne.s32.totalorder %s224, %s240
      %p242 = scmp.eq.s32.totalorder %s29, 0
      %p243 = por %p241, %p242
      %p244 = scmp.le.s32.totalorder 1, %s23
      %p245 = scmp.lt.s32.totalorder %s23, 3
      %p246 = pnand %p244, %p245
      %p247 = pneg %p246
      // Predicated region
      $region9: #{tpu_custom_call.1} parent=5 // pred_check
        _
      $region10: #{tpu_custom_call.1} parent=5 // pred_check_branch
        %249 = sbr.rel (%p246) target = $region12
      $region11: #{tpu_custom_call.1} parent=5 // pred_region
        %s250 = ssub.s32 %s23, 1
        // Predicated region
        $region13: #{tpu_custom_call.1} parent=11 // pred_check
          %p251 = pneg %p82
        $region14: #{tpu_custom_call.1} parent=11 // pred_check_branch
          %253 = sbr.rel (%p251) target = $region16
        $region15: #{tpu_custom_call.1} parent=11 // pred_region
          %s255 = ssub.s32 1024, 1024
          %256 = vsyncadd [#allocation7], %s255
          %s257 = sshll.u32 [#allocation6], 4
          %s258 = int_to_ptr.vmem [resolvable:$true] %s257
          %263 = dma.hbm_to_vmem [thread:$0]  %s1, 1024, %s258, [#allocation7], 64, 64, 4
        $region16: #{tpu_custom_call.1} parent=11 // pred_fallthru
          _
        // Predicated region
        $region17: #{tpu_custom_call.1} parent=11 // pred_check
          %p264 = pneg %p103
        $region18: #{tpu_custom_call.1} parent=11 // pred_check_branch
          %266 = sbr.rel (%p264) target = $region20
        $region19: #{tpu_custom_call.1} parent=11 // pred_region
          %s268 = ssub.s32 2048, 2048
          %269 = vsyncadd [#allocation7], %s268
          %s270 = sshll.u32 [#allocation8], 4
          %s271 = int_to_ptr.vmem [resolvable:$true] %s270
          %276 = dma.hbm_to_vmem [thread:$0]  %s2, 2048, %s271, [#allocation7], 128, 128, 8
        $region20: #{tpu_custom_call.1} parent=11 // pred_fallthru
          _
        // Predicated region
        $region21: #{tpu_custom_call.1} parent=11 // pred_check
          %p277 = pneg %p124
        $region22: #{tpu_custom_call.1} parent=11 // pred_check_branch
          %279 = sbr.rel (%p277) target = $region24
        $region23: #{tpu_custom_call.1} parent=11 // pred_region
          %s281 = ssub.s32 1024, 1024
          %282 = vsyncadd [#allocation10], %s281
          %s283 = sshll.u32 [#allocation9], 4
          %s284 = int_to_ptr.vmem [resolvable:$true] %s283
          %289 = dma.hbm_to_vmem [thread:$0]  %s3, 1024, %s284, [#allocation10], 64, 64, 4
        $region24: #{tpu_custom_call.1} parent=11 // pred_fallthru
          _
        // Predicated region
        $region25: #{tpu_custom_call.1} parent=11 // pred_check
          %p290 = pneg %p145
        $region26: #{tpu_custom_call.1} parent=11 // pred_check_branch
          %292 = sbr.rel (%p290) target = $region28
        $region27: #{tpu_custom_call.1} parent=11 // pred_region
          %s294 = ssub.s32 2048, 2048
          %295 = vsyncadd [#allocation10], %s294
          %s296 = sshll.u32 [#allocation11], 4
          %s297 = int_to_ptr.vmem [resolvable:$true] %s296
          %302 = dma.hbm_to_vmem [thread:$0]  %s4, 2048, %s297, [#allocation10], 128, 128, 8
        $region28: #{tpu_custom_call.1} parent=11 // pred_fallthru
          _
        // Predicated region
        $region29: #{tpu_custom_call.1} parent=11 // pred_check
          %p303 = pneg %p166
        $region30: #{tpu_custom_call.1} parent=11 // pred_check_branch
          %305 = sbr.rel (%p303) target = $region32
        $region31: #{tpu_custom_call.1} parent=11 // pred_region
          %s307 = ssub.s32 2048, 2048
          %308 = vsyncadd [#allocation13], %s307
          %s309 = sshll.u32 [#allocation12], 4
          %s310 = int_to_ptr.vmem [resolvable:$true] %s309
          %315 = dma.hbm_to_vmem [thread:$0]  %s5, 2048, %s310, [#allocation13], 64, 64, 4
        $region32: #{tpu_custom_call.1} parent=11 // pred_fallthru
          _
        // Predicated region
        $region33: #{tpu_custom_call.1} parent=11 // pred_check
          %p316 = pneg %p187
        $region34: #{tpu_custom_call.1} parent=11 // pred_check_branch
          %318 = sbr.rel (%p316) target = $region36
        $region35: #{tpu_custom_call.1} parent=11 // pred_region
          _
        $region36: #{tpu_custom_call.1} parent=11 // pred_fallthru
          _
        // Predicated region
        $region37: #{tpu_custom_call.1} parent=11 // pred_check
          %p319 = pneg %p208
        $region38: #{tpu_custom_call.1} parent=11 // pred_check_branch
          %321 = sbr.rel (%p319) target = $region40
        $region39: #{tpu_custom_call.1} parent=11 // pred_region
          _
        $region40: #{tpu_custom_call.1} parent=11 // pred_fallthru
          _
      $region12: #{tpu_custom_call.1} parent=5 // pred_fallthru
        _
      %p322 = scmp.lt.s32.totalorder %s23, 2
      // Predicated region
      $region41: #{tpu_custom_call.1} parent=5 // pred_check
        %p323 = pneg %p322
      $region42: #{tpu_custom_call.1} parent=5 // pred_check_branch
        %325 = sbr.rel (%p323) target = $region44
      $region43: #{tpu_custom_call.1} parent=5 // pred_region
        // Predicated region
        $region45: #{tpu_custom_call.1} parent=43 // pred_check
          %p326 = pneg %p55
        $region46: #{tpu_custom_call.1} parent=43 // pred_check_branch
          %328 = sbr.rel (%p326) target = $region48
        $region47: #{tpu_custom_call.1} parent=43 // pred_region
          %s329 = sand.u32 %s45, 1
          %s330 = scalar_lea.sflag [#allocation4], %s329
          %s331 = sand.u32 %s45, 1
          %s332 = smul.addr %s331, 16
          %s333 = scalar_lea.vmem [#allocation3], %s332
          %s335 = ssub.s32 256, 256
          %336 = vsyncadd %s330, %s335
          %s337 = smul.addr %s30, 2
          %s338 = smul.addr %s337, 128
          %s339 = scalar_lea.hbm %s0, %s338
          %s340 = sshll.u32 %s333, 4
          %s341 = int_to_ptr.vmem [resolvable:$true] %s340
          %346 = dma.hbm_to_vmem [thread:$0]  %s339, 256, %s341, %s330, 128, 128, 8
        $region48: #{tpu_custom_call.1} parent=43 // pred_fallthru
          _
      $region44: #{tpu_custom_call.1} parent=5 // pred_fallthru
        _
      %p347 = scmp.le.s32.totalorder 1, %s23
      %p348 = scmp.lt.s32.totalorder %s23, 3
      %p349 = pnand %p347, %p348
      %p350 = pneg %p349
      // Predicated region
      $region49: #{tpu_custom_call.1} parent=5 // pred_check
        _
      $region50: #{tpu_custom_call.1} parent=5 // pred_check_branch
        %352 = sbr.rel (%p349) target = $region52
      $region51: #{tpu_custom_call.1} parent=5 // pred_region
        %s353 = ssub.s32 %s23, 1
        %s354 = sand.u32 %s48, 1
        %s355 = scalar_lea.sflag [#allocation4], %s354
        %s356 = sand.u32 %s48, 1
        %s357 = smul.addr %s356, 16
        %s358 = scalar_lea.vmem [#allocation3], %s357
        // Predicated region
        $region53: #{tpu_custom_call.1} parent=51 // pred_check
          %p359 = pneg %p61
        $region54: #{tpu_custom_call.1} parent=51 // pred_check_branch
          %361 = sbr.rel (%p359) target = $region56
        $region55: #{tpu_custom_call.1} parent=51 // pred_region
          %362 = dma.done %s355, 256
        $region56: #{tpu_custom_call.1} parent=51 // pred_fallthru
          _
        // Predicated region
        $region57: #{tpu_custom_call.1} parent=51 // pred_check
          %p363 = pneg %p82
        $region58: #{tpu_custom_call.1} parent=51 // pred_check_branch
          %365 = sbr.rel (%p363) target = $region60
        $region59: #{tpu_custom_call.1} parent=51 // pred_region
          %366 = dma.done [#allocation7], 1024
        $region60: #{tpu_custom_call.1} parent=51 // pred_fallthru
          _
        // Predicated region
        $region61: #{tpu_custom_call.1} parent=51 // pred_check
          %p367 = pneg %p103
        $region62: #{tpu_custom_call.1} parent=51 // pred_check_branch
          %369 = sbr.rel (%p367) target = $region64
        $region63: #{tpu_custom_call.1} parent=51 // pred_region
          %370 = dma.done [#allocation7], 2048
        $region64: #{tpu_custom_call.1} parent=51 // pred_fallthru
          _
        // Predicated region
        $region65: #{tpu_custom_call.1} parent=51 // pred_check
          %p371 = pneg %p124
        $region66: #{tpu_custom_call.1} parent=51 // pred_check_branch
          %373 = sbr.rel (%p371) target = $region68
        $region67: #{tpu_custom_call.1} parent=51 // pred_region
          %374 = dma.done [#allocation10], 1024
        $region68: #{tpu_custom_call.1} parent=51 // pred_fallthru
          _
        // Predicated region
        $region69: #{tpu_custom_call.1} parent=51 // pred_check
          %p375 = pneg %p145
        $region70: #{tpu_custom_call.1} parent=51 // pred_check_branch
          %377 = sbr.rel (%p375) target = $region72
        $region71: #{tpu_custom_call.1} parent=51 // pred_region
          %378 = dma.done [#allocation10], 2048
        $region72: #{tpu_custom_call.1} parent=51 // pred_fallthru
          _
        // Predicated region
        $region73: #{tpu_custom_call.1} parent=51 // pred_check
          %p379 = pneg %p166
        $region74: #{tpu_custom_call.1} parent=51 // pred_check_branch
          %381 = sbr.rel (%p379) target = $region76
        $region75: #{tpu_custom_call.1} parent=51 // pred_region
          %382 = dma.done [#allocation13], 2048
        $region76: #{tpu_custom_call.1} parent=51 // pred_fallthru
          _
        %s383 = sand.u32 %s48, 1
        %s384 = scalar_lea.sflag [#allocation4], %s383
        %s385 = sand.u32 %s48, 1
        %s386 = smul.addr %s385, 16
        %s387 = scalar_lea.vmem [#allocation3], %s386
        %p388 = pneg %p61
        %p389 = pneg %p58
        %p390 = pneg %p82
        %p391 = pneg %p79
        %p392 = pneg %p103
        %p393 = pneg %p100
        %p394 = pneg %p124
        %p395 = pneg %p121
        %p396 = pneg %p145
        %p397 = pneg %p142
        %p398 = pneg %p166
        %p399 = pneg %p163
        %p400 = pneg %p187
        %p401 = pneg %p184
        %p402 = pneg %p208
        %p403 = pneg %p205
        %p404 = pneg %p236
        %p405 = pneg %p233
        %s406 = sand.u32 %s223, 1
        %s407 = scalar_lea.sflag [#allocation5], %s406
        %s408 = sand.u32 %s223, 1
        %s409 = smul.addr %s408, 16
        %s410 = scalar_lea.vmem [#allocation14], %s409
        %s411 = smul.u32 2, %s33
        %v413 = vld [vmem:[%s6] sm:$0xff]
        %v414 = vld [vmem:[%s6 + $0x8] sm:$0x1]
        %p415 = scmp.eq.s32.totalorder %s33, 0
        // Predicated region
        $region77: #{tpu_custom_call.1} parent=51 // pred_check
          %p416 = pneg %p415
        $region78: #{tpu_custom_call.1} parent=51 // pred_check_branch
          %418 = sbr.rel (%p416) target = $region80
        $region79: #{tpu_custom_call.1} parent=51 // pred_region
          %v419 = vld [vmem:[%s358] sm:$0xff]
          %v420 = vld [vmem:[%s358 + $0x8] sm:$0xff]
          %v421 = vpack.c.bf16 %v420, %v419
          %v422 = vld [vmem:[#allocation8] sm:$0xff]
          %v423 = vld [vmem:[#allocation8 + $0x8] sm:$0xff]
          %v424 = vld [vmem:[#allocation8 + $0x10] sm:$0xff]
          %v425 = vld [vmem:[#allocation8 + $0x18] sm:$0xff]
          %v426 = vld [vmem:[#allocation8 + $0x20] sm:$0xff]
          %v427 = vld [vmem:[#allocation8 + $0x28] sm:$0xff]
          %v428 = vld [vmem:[#allocation8 + $0x30] sm:$0xff]
          %v429 = vld [vmem:[#allocation8 + $0x38] sm:$0xff]
          %v430 = vld [vmem:[#allocation8 + $0x40] sm:$0xff]
          %v431 = vld [vmem:[#allocation8 + $0x48] sm:$0xff]
          %v432 = vld [vmem:[#allocation8 + $0x50] sm:$0xff]
          %v433 = vld [vmem:[#allocation8 + $0x58] sm:$0xff]
          %v434 = vld [vmem:[#allocation8 + $0x60] sm:$0xff]
          %v435 = vld [vmem:[#allocation8 + $0x68] sm:$0xff]
          %v436 = vld [vmem:[#allocation8 + $0x70] sm:$0xff]
          %v437 = vld [vmem:[#allocation8 + $0x78] sm:$0xff]
          %v454 = vunpack.c.l.b16 %v422
          %v455 = vunpack.c.h.b16 %v422
          %v456 = vunpack.c.l.b16 %v423
          %v457 = vunpack.c.h.b16 %v423
          %v458 = vunpack.c.l.b16 %v424
          %v459 = vunpack.c.h.b16 %v424
          %v460 = vunpack.c.l.b16 %v425
          %v461 = vunpack.c.h.b16 %v425
          %v462 = vunpack.c.l.b16 %v426
          %v463 = vunpack.c.h.b16 %v426
          %v464 = vunpack.c.l.b16 %v427
          %v465 = vunpack.c.h.b16 %v427
          %v466 = vunpack.c.l.b16 %v428
          %v467 = vunpack.c.h.b16 %v428
          %v468 = vunpack.c.l.b16 %v429
          %v469 = vunpack.c.h.b16 %v429
          %v470 = vunpack.c.l.b16 %v430
          %v471 = vunpack.c.h.b16 %v430
          %v472 = vunpack.c.l.b16 %v431
          %v473 = vunpack.c.h.b16 %v431
          %v474 = vunpack.c.l.b16 %v432
          %v475 = vunpack.c.h.b16 %v432
          %v476 = vunpack.c.l.b16 %v433
          %v477 = vunpack.c.h.b16 %v433
          %v478 = vunpack.c.l.b16 %v434
          %v479 = vunpack.c.h.b16 %v434
          %v480 = vunpack.c.l.b16 %v435
          %v481 = vunpack.c.h.b16 %v435
          %v482 = vunpack.c.l.b16 %v436
          %v483 = vunpack.c.h.b16 %v436
          %v484 = vunpack.c.l.b16 %v437
          %v485 = vunpack.c.h.b16 %v437
          %v486 = vpack.c.b16 %v456, %v454
          %v487 = vpack.c.b16 %v457, %v455
          %v488 = vpack.c.b16 %v460, %v458
          %v489 = vpack.c.b16 %v461, %v459
          %v490 = vpack.c.b16 %v464, %v462
          %v491 = vpack.c.b16 %v465, %v463
          %v492 = vpack.c.b16 %v468, %v466
          %v493 = vpack.c.b16 %v469, %v467
          %v494 = vpack.c.b16 %v472, %v470
          %v495 = vpack.c.b16 %v473, %v471
          %v496 = vpack.c.b16 %v476, %v474
          %v497 = vpack.c.b16 %v477, %v475
          %v498 = vpack.c.b16 %v480, %v478
          %v499 = vpack.c.b16 %v481, %v479
          %v500 = vpack.c.b16 %v484, %v482
          %v501 = vpack.c.b16 %v485, %v483
          %518 = vmatprep.subr.bf16.mxu0 %v487
          %519 = vmatpush1.bf16.msra.mxu0 %v486
          %520 = vmatprep.subr.bf16.mxu0 %v489
          %521 = vmatpush1.bf16.msra.mxu0 %v488
          %522 = vmatprep.subr.bf16.mxu0 %v491
          %523 = vmatpush1.bf16.msra.mxu0 %v490
          %524 = vmatprep.subr.bf16.mxu0 %v493
          %525 = vmatpush1.bf16.msra.mxu0 %v492
          %526 = vmatprep.subr.bf16.mxu0 %v495
          %527 = vmatpush1.bf16.msra.mxu0 %v494
          %528 = vmatprep.subr.bf16.mxu0 %v497
          %529 = vmatpush1.bf16.msra.mxu0 %v496
          %530 = vmatprep.subr.bf16.mxu0 %v499
          %531 = vmatpush1.bf16.msra.mxu0 %v498
          %532 = vmatprep.subr.bf16.mxu0 %v501
          %533 = vmatpush1.bf16.msra.mxu0 %v500
          %534 = vmatprep.subr.bf16.mxu0 0
          %535 = vmatpush1.bf16.msra.mxu0 0
          %536 = vmatprep.subr.bf16.mxu0 0
          %537 = vmatpush1.bf16.msra.mxu0 0
          %538 = vmatprep.subr.bf16.mxu0 0
          %539 = vmatpush1.bf16.msra.mxu0 0
          %540 = vmatprep.subr.bf16.mxu0 0
          %541 = vmatpush1.bf16.msra.mxu0 0
          %542 = vmatprep.subr.bf16.mxu0 0
          %543 = vmatpush1.bf16.msra.mxu0 0
          %544 = vmatprep.subr.bf16.mxu0 0
          %545 = vmatpush1.bf16.msra.mxu0 0
          %546 = vmatprep.subr.bf16.mxu0 0
          %547 = vmatpush1.bf16.msra.mxu0 0
          %548 = vmatprep.subr.bf16.mxu0 0
          %549 = vmatpush1.bf16.msra.mxu0 0
          %550 = vmatprep.mubr.bf16.mxu0 0
          %551 = vmatmul.mubr.bf16.gmra.mrb[0].mxu0 %v421
          %v552 = vpop.f32.mrb[0].mxu0
          %v553 = vadd.f32 0.0, %v552
          %v554 = vpop.f32.mrb[0].mxu0
          %v555 = vadd.f32 0.0, %v554
          %v556 = vpop.f32.mrb[0].mxu0
          %v557 = vadd.f32 0.0, %v556
          %v558 = vpop.f32.mrb[0].mxu0
          %v559 = vadd.f32 0.0, %v558
          %560 = vdwg.mxu0
          %v561 = vlaneseq
          %v562 = vshrl.u32 %v561, 7
          %v563 = vsub.s32 1, %v562
          %v564 = vrot.slane %v413, %v563
          %v565 = vadd.f32 %v553, %v564
          %v566 = vadd.f32 %v557, %v564
          %v567 = vpack.c.bf16 %v566, %v565
          %568 = vst [vmem:[#allocation2] sm:$0xff] %v567
          %v569 = vlaneseq
          %v570 = vshrl.u32 %v569, 7
          %v571 = vsub.s32 2, %v570
          %v572 = vrot.slane %v413, %v571
          %v573 = vadd.f32 %v555, %v572
          %v574 = vadd.f32 %v559, %v572
          %v575 = vpack.c.bf16 %v574, %v573
          %576 = vst [vmem:[#allocation2 + $0x8] sm:$0xff] %v575
        $region80: #{tpu_custom_call.1} parent=51 // pred_fallthru
          _
        %s577 = smul.u32 %s33, 16
        %s578 = scalar_lea.vmem %s358, %s577 [#allocation3]
        %v579 = vld [vmem:[%s578] sm:$0xff]
        %v580 = vld [vmem:[%s578 + $0x8] sm:$0xff]
        %v581 = vpack.c.bf16 %v580, %v579
        %v582 = vld [vmem:[#allocation6] sm:$0xf]
        %v583 = vld [vmem:[#allocation6 + $0x4] sm:$0xf]
        %v584 = vld [vmem:[#allocation6 + $0x8] sm:$0xf]
        %v585 = vld [vmem:[#allocation6 + $0xc] sm:$0xf]
        %v586 = vld [vmem:[#allocation6 + $0x10] sm:$0xf]
        %v587 = vld [vmem:[#allocation6 + $0x14] sm:$0xf]
        %v588 = vld [vmem:[#allocation6 + $0x18] sm:$0xf]
        %v589 = vld [vmem:[#allocation6 + $0x1c] sm:$0xf]
        %v590 = vld [vmem:[#allocation6 + $0x20] sm:$0xf]
        %v591 = vld [vmem:[#allocation6 + $0x24] sm:$0xf]
        %v592 = vld [vmem:[#allocation6 + $0x28] sm:$0xf]
        %v593 = vld [vmem:[#allocation6 + $0x2c] sm:$0xf]
        %v594 = vld [vmem:[#allocation6 + $0x30] sm:$0xf]
        %v595 = vld [vmem:[#allocation6 + $0x34] sm:$0xf]
        %v596 = vld [vmem:[#allocation6 + $0x38] sm:$0xf]
        %v597 = vld [vmem:[#allocation6 + $0x3c] sm:$0xf]
        %v598 = vlaneseq
        %v599 = vshrl.u32 %v598, 7
        %v600 = vsub.s32 0, %v599
        %v601 = vrot.slane %v413, %v600
        %v618 = vunpack.c.l.b16 %v582
        %v619 = vunpack.c.l.b16 %v583
        %v620 = vunpack.c.l.b16 %v584
        %v621 = vunpack.c.l.b16 %v585
        %v622 = vunpack.c.l.b16 %v586
        %v623 = vunpack.c.l.b16 %v587
        %v624 = vunpack.c.l.b16 %v588
        %v625 = vunpack.c.l.b16 %v589
        %v626 = vunpack.c.l.b16 %v590
        %v627 = vunpack.c.l.b16 %v591
        %v628 = vunpack.c.l.b16 %v592
        %v629 = vunpack.c.l.b16 %v593
        %v630 = vunpack.c.l.b16 %v594
        %v631 = vunpack.c.l.b16 %v595
        %v632 = vunpack.c.l.b16 %v596
        %v633 = vunpack.c.l.b16 %v597
        %v634 = vpack.c.b16 %v619, %v618
        %v635 = vpack.c.b16 %v621, %v620
        %v636 = vpack.c.b16 %v623, %v622
        %v637 = vpack.c.b16 %v625, %v624
        %v638 = vpack.c.b16 %v627, %v626
        %v639 = vpack.c.b16 %v629, %v628
        %v640 = vpack.c.b16 %v631, %v630
        %v641 = vpack.c.b16 %v633, %v632
        %650 = vmatprep.subr.bf16.mxu0 0
        %651 = vmatpush1.bf16.msra.mxu0 %v634
        %652 = vmatprep.subr.bf16.mxu0 0
        %653 = vmatpush1.bf16.msra.mxu0 %v635
        %654 = vmatprep.subr.bf16.mxu0 0
        %655 = vmatpush1.bf16.msra.mxu0 %v636
        %656 = vmatprep.subr.bf16.mxu0 0
        %657 = vmatpush1.bf16.msra.mxu0 %v637
        %658 = vmatprep.subr.bf16.mxu0 0
        %659 = vmatpush1.bf16.msra.mxu0 %v638
        %660 = vmatprep.subr.bf16.mxu0 0
        %661 = vmatpush1.bf16.msra.mxu0 %v639
        %662 = vmatprep.subr.bf16.mxu0 0
        %663 = vmatpush1.bf16.msra.mxu0 %v640
        %664 = vmatprep.subr.bf16.mxu0 0
        %665 = vmatpush1.bf16.msra.mxu0 %v641
        %666 = vmatprep.subr.bf16.mxu0 0
        %667 = vmatpush1.bf16.msra.mxu0 0
        %668 = vmatprep.subr.bf16.mxu0 0
        %669 = vmatpush1.bf16.msra.mxu0 0
        %670 = vmatprep.subr.bf16.mxu0 0
        %671 = vmatpush1.bf16.msra.mxu0 0
        %672 = vmatprep.subr.bf16.mxu0 0
        %673 = vmatpush1.bf16.msra.mxu0 0
        %674 = vmatprep.subr.bf16.mxu0 0
        %675 = vmatpush1.bf16.msra.mxu0 0
        %676 = vmatprep.subr.bf16.mxu0 0
        %677 = vmatpush1.bf16.msra.mxu0 0
        %678 = vmatprep.subr.bf16.mxu0 0
        %679 = vmatpush1.bf16.msra.mxu0 0
        %680 = vmatprep.subr.bf16.mxu0 0
        %681 = vmatpush1.bf16.msra.mxu0 0
        %682 = vmatprep.mubr.bf16.mxu0 0
        %683 = vmatmul.mubr.bf16.gmra.mrb[0].mxu0 %v581
        %v684 = vpop.f32.mrb[0].mxu0
        %v685 = vadd.f32 %v601, %v684
        %v686 = vpop.f32.mrb[0].mxu0
        %v687 = vpop.f32.mrb[0].mxu0
        %v688 = vadd.f32 %v601, %v687
        %v689 = vpop.f32.mrb[0].mxu0
        %690 = vdwg.mxu0
        %v691 = vld [vmem:[#allocation2] sm:$0xff]
        %v692 = vld [vmem:[#allocation2 + $0x8] sm:$0xff]
        %v693 = vpack.c.bf16 %v688, %v685
        %694 = vmatprep.subr.bf16.mxu0 0
        %695 = vmatpush1.bf16.xpose.msra.mxu0 %v691
        %696 = vmatprep.subr.bf16.mxu0 0
        %697 = vmatpush1.bf16.xpose.msra.mxu0 0
        %698 = vmatprep.subr.bf16.mxu0 0
        %699 = vmatpush1.bf16.xpose.msra.mxu0 0
        %700 = vmatprep.subr.bf16.mxu0 0
        %701 = vmatpush1.bf16.xpose.msra.mxu0 0
        %702 = vmatprep.subr.bf16.mxu0 0
        %703 = vmatpush1.bf16.xpose.msra.mxu0 0
        %704 = vmatprep.subr.bf16.mxu0 0
        %705 = vmatpush1.bf16.xpose.msra.mxu0 0
        %706 = vmatprep.subr.bf16.mxu0 0
        %707 = vmatpush1.bf16.xpose.msra.mxu0 0
        %708 = vmatprep.subr.bf16.mxu0 0
        %709 = vmatpush1.bf16.xpose.msra.mxu0 0
        %710 = vmatprep.subr.bf16.mxu0 0
        %711 = vmatpush1.bf16.xpose.msra.mxu0 0
        %712 = vmatprep.subr.bf16.mxu0 0
        %713 = vmatpush1.bf16.xpose.msra.mxu0 0
        %714 = vmatprep.subr.bf16.mxu0 0
        %715 = vmatpush1.bf16.xpose.msra.mxu0 0
        %716 = vmatprep.subr.bf16.mxu0 0
        %717 = vmatpush1.bf16.xpose.msra.mxu0 0
        %718 = vmatprep.subr.bf16.mxu0 0
        %719 = vmatpush1.bf16.xpose.msra.mxu0 0
        %720 = vmatprep.subr.bf16.mxu0 0
        %721 = vmatpush1.bf16.xpose.msra.mxu0 0
        %722 = vmatprep.subr.bf16.mxu0 0
        %723 = vmatpush1.bf16.xpose.msra.mxu0 0
        %724 = vmatprep.subr.bf16.mxu0 0
        %725 = vmatpush1.bf16.xpose.msra.mxu0 0
        %726 = vmatprep.mubr.bf16.mxu0 0
        %727 = vmatmul.mubr.bf16.gmra.mrb[0].mxu0 %v693
        %v728 = vpop.f32.mrb[0].mxu0
        %v729 = vadd.f32 0.0, %v728
        %v730 = vpop.f32.mrb[0].mxu0
        %v731 = vpop.f32.mrb[0].mxu0
        %v732 = vadd.f32 0.0, %v731
        %v733 = vpop.f32.mrb[0].mxu0
        %734 = vdwg.mxu0
        %vm735 = vcmask 130048
        %v736 = vsel %vm735, %v729, -inf
        %737 = vmax.xlane.f32.xlu0 %v736
        %v738 = vpop.xlane.xlu0 %737
        %v739 = vsel %vm735, %v732, -inf
        %740 = vmax.xlane.f32.xlu0 %v739
        %v741 = vpop.xlane.xlu0 %740
        %v742 = vsub.f32 %v729, %v738
        %v743 = vsub.f32 %v732, %v741
        %v744 = vmul.f32 %v742, 1.442695
        %v745 = vpow.pop %v744
        %v746 = vmul.f32 %v743, 1.442695
        %v747 = vpow.pop %v746
        %v748 = vsel %vm735, %v745, 0.0
        %749 = vadd.xlane.f32.xlu0 %v748
        %v750 = vpop.xlane.xlu0 %749
        %v751 = vsel %vm735, %v747, 0.0
        %752 = vadd.xlane.f32.xlu0 %v751
        %v753 = vpop.xlane.xlu0 %752
        %v754 = vpack.c.bf16 %v747, %v745
        %v756 = vsel %vm735, %v754, 0
        %758 = vmatprep.subr.bf16.mxu0 0
        %759 = vmatpush1.bf16.msra.mxu0 %v692
        %760 = vmatprep.subr.bf16.mxu0 0
        %761 = vmatpush1.bf16.msra.mxu0 0
        %762 = vmatprep.subr.bf16.mxu0 0
        %763 = vmatpush1.bf16.msra.mxu0 0
        %764 = vmatprep.subr.bf16.mxu0 0
        %765 = vmatpush1.bf16.msra.mxu0 0
        %766 = vmatprep.subr.bf16.mxu0 0
        %767 = vmatpush1.bf16.msra.mxu0 0
        %768 = vmatprep.subr.bf16.mxu0 0
        %769 = vmatpush1.bf16.msra.mxu0 0
        %770 = vmatprep.subr.bf16.mxu0 0
        %771 = vmatpush1.bf16.msra.mxu0 0
        %772 = vmatprep.subr.bf16.mxu0 0
        %773 = vmatpush1.bf16.msra.mxu0 0
        %774 = vmatprep.subr.bf16.mxu0 0
        %775 = vmatpush1.bf16.msra.mxu0 0
        %776 = vmatprep.subr.bf16.mxu0 0
        %777 = vmatpush1.bf16.msra.mxu0 0
        %778 = vmatprep.subr.bf16.mxu0 0
        %779 = vmatpush1.bf16.msra.mxu0 0
        %780 = vmatprep.subr.bf16.mxu0 0
        %781 = vmatpush1.bf16.msra.mxu0 0
        %782 = vmatprep.subr.bf16.mxu0 0
        %783 = vmatpush1.bf16.msra.mxu0 0
        %784 = vmatprep.subr.bf16.mxu0 0
        %785 = vmatpush1.bf16.msra.mxu0 0
        %786 = vmatprep.subr.bf16.mxu0 0
        %787 = vmatpush1.bf16.msra.mxu0 0
        %788 = vmatprep.subr.bf16.mxu0 0
        %789 = vmatpush1.bf16.msra.mxu0 0
        %790 = vmatprep.mubr.bf16.mxu0 0
        %791 = vmatmul.mubr.bf16.gmra.mrb[0].mxu0 %v756
        %v792 = vpop.f32.mrb[0].mxu0
        %v793 = vadd.f32 0.0, %v792
        %v794 = vpop.f32.mrb[0].mxu0
        %v795 = vpop.f32.mrb[0].mxu0
        %v796 = vadd.f32 0.0, %v795
        %v797 = vpop.f32.mrb[0].mxu0
        %798 = vdwg.mxu0
        %v799 = vrcp.pop %v750
        %v800 = vrcp.pop %v753
        %v801 = vmul.f32 %v793, %v799
        %v802 = vmul.f32 %v796, %v800
        %v803 = vpack.c.bf16 %v802, %v801
        %v804 = vld [vmem:[#allocation9] sm:$0xf]
        %v805 = vld [vmem:[#allocation9 + $0x4] sm:$0xf]
        %v806 = vld [vmem:[#allocation9 + $0x8] sm:$0xf]
        %v807 = vld [vmem:[#allocation9 + $0xc] sm:$0xf]
        %v808 = vld [vmem:[#allocation9 + $0x10] sm:$0xf]
        %v809 = vld [vmem:[#allocation9 + $0x14] sm:$0xf]
        %v810 = vld [vmem:[#allocation9 + $0x18] sm:$0xf]
        %v811 = vld [vmem:[#allocation9 + $0x1c] sm:$0xf]
        %v812 = vld [vmem:[#allocation9 + $0x20] sm:$0xf]
        %v813 = vld [vmem:[#allocation9 + $0x24] sm:$0xf]
        %v814 = vld [vmem:[#allocation9 + $0x28] sm:$0xf]
        %v815 = vld [vmem:[#allocation9 + $0x2c] sm:$0xf]
        %v816 = vld [vmem:[#allocation9 + $0x30] sm:$0xf]
        %v817 = vld [vmem:[#allocation9 + $0x34] sm:$0xf]
        %v818 = vld [vmem:[#allocation9 + $0x38] sm:$0xf]
        %v819 = vld [vmem:[#allocation9 + $0x3c] sm:$0xf]
        %v820 = vlaneseq
        %v821 = vshrl.u32 %v820, 7
        %v822 = vsub.s32 3, %v821
        %v823 = vrot.slane %v413, %v822
        %v840 = vunpack.c.l.b16 %v804
        %v841 = vunpack.c.l.b16 %v805
        %v842 = vunpack.c.l.b16 %v806
        %v843 = vunpack.c.l.b16 %v807
        %v844 = vunpack.c.l.b16 %v808
        %v845 = vunpack.c.l.b16 %v809
        %v846 = vunpack.c.l.b16 %v810
        %v847 = vunpack.c.l.b16 %v811
        %v848 = vunpack.c.l.b16 %v812
        %v849 = vunpack.c.l.b16 %v813
        %v850 = vunpack.c.l.b16 %v814
        %v851 = vunpack.c.l.b16 %v815
        %v852 = vunpack.c.l.b16 %v816
        %v853 = vunpack.c.l.b16 %v817
        %v854 = vunpack.c.l.b16 %v818
        %v855 = vunpack.c.l.b16 %v819
        %v856 = vpack.c.b16 %v841, %v840
        %v857 = vpack.c.b16 %v843, %v842
        %v858 = vpack.c.b16 %v845, %v844
        %v859 = vpack.c.b16 %v847, %v846
        %v860 = vpack.c.b16 %v849, %v848
        %v861 = vpack.c.b16 %v851, %v850
        %v862 = vpack.c.b16 %v853, %v852
        %v863 = vpack.c.b16 %v855, %v854
        %872 = vmatprep.subr.bf16.mxu0 0
        %873 = vmatpush1.bf16.msra.mxu0 %v856
        %874 = vmatprep.subr.bf16.mxu0 0
        %875 = vmatpush1.bf16.msra.mxu0 %v857
        %876 = vmatprep.subr.bf16.mxu0 0
        %877 = vmatpush1.bf16.msra.mxu0 %v858
        %878 = vmatprep.subr.bf16.mxu0 0
        %879 = vmatpush1.bf16.msra.mxu0 %v859
        %880 = vmatprep.subr.bf16.mxu0 0
        %881 = vmatpush1.bf16.msra.mxu0 %v860
        %882 = vmatprep.subr.bf16.mxu0 0
        %883 = vmatpush1.bf16.msra.mxu0 %v861
        %884 = vmatprep.subr.bf16.mxu0 0
        %885 = vmatpush1.bf16.msra.mxu0 %v862
        %886 = vmatprep.subr.bf16.mxu0 0
        %887 = vmatpush1.bf16.msra.mxu0 %v863
        %888 = vmatprep.subr.bf16.mxu0 0
        %889 = vmatpush1.bf16.msra.mxu0 0
        %890 = vmatprep.subr.bf16.mxu0 0
        %891 = vmatpush1.bf16.msra.mxu0 0
        %892 = vmatprep.subr.bf16.mxu0 0
        %893 = vmatpush1.bf16.msra.mxu0 0
        %894 = vmatprep.subr.bf16.mxu0 0
        %895 = vmatpush1.bf16.msra.mxu0 0
        %896 = vmatprep.subr.bf16.mxu0 0
        %897 = vmatpush1.bf16.msra.mxu0 0
        %898 = vmatprep.subr.bf16.mxu0 0
        %899 = vmatpush1.bf16.msra.mxu0 0
        %900 = vmatprep.subr.bf16.mxu0 0
        %901 = vmatpush1.bf16.msra.mxu0 0
        %902 = vmatprep.subr.bf16.mxu0 0
        %903 = vmatpush1.bf16.msra.mxu0 0
        %904 = vmatprep.mubr.bf16.mxu0 0
        %905 = vmatmul.mubr.bf16.gmra.mrb[0].mxu0 %v803
        %v906 = vpop.f32.mrb[0].mxu0
        %v907 = vadd.f32 %v823, %v906
        %v908 = vpop.f32.mrb[0].mxu0
        %v909 = vpop.f32.mrb[0].mxu0
        %v910 = vadd.f32 %v823, %v909
        %v911 = vpop.f32.mrb[0].mxu0
        %912 = vdwg.mxu0
        %v913 = vadd.f32 %v579, %v907
        %v914 = vadd.f32 %v580, %v910
        %915 = vadd.xlane.f32.xlu0 %v913
        %v916 = vpop.xlane.xlu0 %915
        %917 = vadd.xlane.f32.xlu0 %v914
        %v918 = vpop.xlane.xlu0 %917
        %v919 = vrcp.pop 128.0
        %v920 = vmul.f32 %v916, %v919
        %v921 = vmul.f32 %v918, %v919
        %v922 = vsub.f32 %v913, %v920
        %v923 = vsub.f32 %v914, %v921
        %v924 = vmul.f32 %v922, %v922
        %v925 = vmul.f32 %v923, %v923
        %926 = vadd.xlane.f32.xlu0 %v924
        %v927 = vpop.xlane.xlu0 %926
        %928 = vadd.xlane.f32.xlu0 %v925
        %v929 = vpop.xlane.xlu0 %928
        %v930 = vmul.f32 %v927, %v919
        %v931 = vmul.f32 %v929, %v919
        %v932 = vadd.f32 %v930, 1e-05
        %v933 = vadd.f32 %v931, 1e-05
        %v934 = vrsqrt.pop %v932
        %v935 = vrsqrt.pop %v933
        %v936 = vmul.f32 %v922, %v934
        %v937 = vmul.f32 %v923, %v935
        %v938 = vlaneseq
        %v939 = vshrl.u32 %v938, 7
        %v940 = vsub.s32 5, %v939
        %v941 = vrot.slane %v413, %v940
        %v942 = vmul.f32 %v936, %v941
        %v943 = vmul.f32 %v937, %v941
        %v944 = vlaneseq
        %v945 = vshrl.u32 %v944, 7
        %v946 = vsub.s32 6, %v945
        %v947 = vrot.slane %v413, %v946
        %v948 = vadd.f32 %v942, %v947
        %v949 = vadd.f32 %v943, %v947
        %v950 = vpack.c.bf16 %v949, %v948
        %v951 = vld [vmem:[#allocation11] sm:$0xff]
        %v952 = vld [vmem:[#allocation11 + $0x8] sm:$0xff]
        %v953 = vld [vmem:[#allocation11 + $0x10] sm:$0xff]
        %v954 = vld [vmem:[#allocation11 + $0x18] sm:$0xff]
        %v955 = vld [vmem:[#allocation11 + $0x20] sm:$0xff]
        %v956 = vld [vmem:[#allocation11 + $0x28] sm:$0xff]
        %v957 = vld [vmem:[#allocation11 + $0x30] sm:$0xff]
        %v958 = vld [vmem:[#allocation11 + $0x38] sm:$0xff]
        %v959 = vld [vmem:[#allocation11 + $0x40] sm:$0xff]
        %v960 = vld [vmem:[#allocation11 + $0x48] sm:$0xff]
        %v961 = vld [vmem:[#allocation11 + $0x50] sm:$0xff]
        %v962 = vld [vmem:[#allocation11 + $0x58] sm:$0xff]
        %v963 = vld [vmem:[#allocation11 + $0x60] sm:$0xff]
        %v964 = vld [vmem:[#allocation11 + $0x68] sm:$0xff]
        %v965 = vld [vmem:[#allocation11 + $0x70] sm:$0xff]
        %v966 = vld [vmem:[#allocation11 + $0x78] sm:$0xff]
        %v967 = vld [vmem:[%s7] sm:$0x3]
        %v969 = vlaneseq
        %v970 = vshrl.u32 %v969, 7
        %v971 = vsub.s32 0, %v970
        %v972 = vrot.slane %v967, %v971
        %v973 = vlaneseq
        %v974 = vshrl.u32 %v973, 7
        %v975 = vsub.s32 1, %v974
        %v976 = vrot.slane %v967, %v975
        %v995 = vunpack.c.l.b16 %v951
        %v996 = vunpack.c.h.b16 %v951
        %v997 = vunpack.c.l.b16 %v952
        %v998 = vunpack.c.h.b16 %v952
        %v999 = vunpack.c.l.b16 %v953
        %v1000 = vunpack.c.h.b16 %v953
        %v1001 = vunpack.c.l.b16 %v954
        %v1002 = vunpack.c.h.b16 %v954
        %v1003 = vunpack.c.l.b16 %v955
        %v1004 = vunpack.c.h.b16 %v955
        %v1005 = vunpack.c.l.b16 %v956
        %v1006 = vunpack.c.h.b16 %v956
        %v1007 = vunpack.c.l.b16 %v957
        %v1008 = vunpack.c.h.b16 %v957
        %v1009 = vunpack.c.l.b16 %v958
        %v1010 = vunpack.c.h.b16 %v958
        %v1011 = vunpack.c.l.b16 %v959
        %v1012 = vunpack.c.h.b16 %v959
        %v1013 = vunpack.c.l.b16 %v960
        %v1014 = vunpack.c.h.b16 %v960
        %v1015 = vunpack.c.l.b16 %v961
        %v1016 = vunpack.c.h.b16 %v961
        %v1017 = vunpack.c.l.b16 %v962
        %v1018 = vunpack.c.h.b16 %v962
        %v1019 = vunpack.c.l.b16 %v963
        %v1020 = vunpack.c.h.b16 %v963
        %v1021 = vunpack.c.l.b16 %v964
        %v1022 = vunpack.c.h.b16 %v964
        %v1023 = vunpack.c.l.b16 %v965
        %v1024 = vunpack.c.h.b16 %v965
        %v1025 = vunpack.c.l.b16 %v966
        %v1026 = vunpack.c.h.b16 %v966
        %v1027 = vpack.c.b16 %v997, %v995
        %v1028 = vpack.c.b16 %v998, %v996
        %v1029 = vpack.c.b16 %v1001, %v999
        %v1030 = vpack.c.b16 %v1002, %v1000
        %v1031 = vpack.c.b16 %v1005, %v1003
        %v1032 = vpack.c.b16 %v1006, %v1004
        %v1033 = vpack.c.b16 %v1009, %v1007
        %v1034 = vpack.c.b16 %v1010, %v1008
        %v1035 = vpack.c.b16 %v1013, %v1011
        %v1036 = vpack.c.b16 %v1014, %v1012
        %v1037 = vpack.c.b16 %v1017, %v1015
        %v1038 = vpack.c.b16 %v1018, %v1016
        %v1039 = vpack.c.b16 %v1021, %v1019
        %v1040 = vpack.c.b16 %v1022, %v1020
        %v1041 = vpack.c.b16 %v1025, %v1023
        %v1042 = vpack.c.b16 %v1026, %v1024
        %1059 = vmatprep.subr.bf16.mxu0 %v1028
        %1060 = vmatpush1.bf16.msra.mxu0 %v1027
        %1061 = vmatprep.subr.bf16.mxu0 %v1030
        %1062 = vmatpush1.bf16.msra.mxu0 %v1029
        %1063 = vmatprep.subr.bf16.mxu0 %v1032
        %1064 = vmatpush1.bf16.msra.mxu0 %v1031
        %1065 = vmatprep.subr.bf16.mxu0 %v1034
        %1066 = vmatpush1.bf16.msra.mxu0 %v1033
        %1067 = vmatprep.subr.bf16.mxu0 %v1036
        %1068 = vmatpush1.bf16.msra.mxu0 %v1035
        %1069 = vmatprep.subr.bf16.mxu0 %v1038
        %1070 = vmatpush1.bf16.msra.mxu0 %v1037
        %1071 = vmatprep.subr.bf16.mxu0 %v1040
        %1072 = vmatpush1.bf16.msra.mxu0 %v1039
        %1073 = vmatprep.subr.bf16.mxu0 %v1042
        %1074 = vmatpush1.bf16.msra.mxu0 %v1041
        %1075 = vmatprep.subr.bf16.mxu0 0
        %1076 = vmatpush1.bf16.msra.mxu0 0
        %1077 = vmatprep.subr.bf16.mxu0 0
        %1078 = vmatpush1.bf16.msra.mxu0 0
        %1079 = vmatprep.subr.bf16.mxu0 0
        %1080 = vmatpush1.bf16.msra.mxu0 0
        %1081 = vmatprep.subr.bf16.mxu0 0
        %1082 = vmatpush1.bf16.msra.mxu0 0
        %1083 = vmatprep.subr.bf16.mxu0 0
        %1084 = vmatpush1.bf16.msra.mxu0 0
        %1085 = vmatprep.subr.bf16.mxu0 0
        %1086 = vmatpush1.bf16.msra.mxu0 0
        %1087 = vmatprep.subr.bf16.mxu0 0
        %1088 = vmatpush1.bf16.msra.mxu0 0
        %1089 = vmatprep.subr.bf16.mxu0 0
        %1090 = vmatpush1.bf16.msra.mxu0 0
        %1091 = vmatprep.mubr.bf16.mxu0 0
        %1092 = vmatmul.mubr.bf16.gmra.mrb[0].mxu0 %v950
        %v1093 = vpop.f32.mrb[0].mxu0
        %v1094 = vadd.f32 %v972, %v1093
        %v1095 = vpop.f32.mrb[0].mxu0
        %v1096 = vadd.f32 %v976, %v1095
        %v1097 = vpop.f32.mrb[0].mxu0
        %v1098 = vadd.f32 %v972, %v1097
        %v1099 = vpop.f32.mrb[0].mxu0
        %v1100 = vadd.f32 %v976, %v1099
        %1101 = vdwg.mxu0
        %v1102 = vmax.f32 %v1094, 0.0
        %v1103 = vmax.f32 %v1096, 0.0
        %v1104 = vmax.f32 %v1098, 0.0
        %v1105 = vmax.f32 %v1100, 0.0
        %v1106 = vpack.c.bf16 %v1104, %v1102
        %v1107 = vpack.c.bf16 %v1105, %v1103
        %v1108 = vld [vmem:[#allocation12] sm:$0xf]
        %v1109 = vld [vmem:[#allocation12 + $0x4] sm:$0xf]
        %v1110 = vld [vmem:[#allocation12 + $0x8] sm:$0xf]
        %v1111 = vld [vmem:[#allocation12 + $0xc] sm:$0xf]
        %v1112 = vld [vmem:[#allocation12 + $0x10] sm:$0xf]
        %v1113 = vld [vmem:[#allocation12 + $0x14] sm:$0xf]
        %v1114 = vld [vmem:[#allocation12 + $0x18] sm:$0xf]
        %v1115 = vld [vmem:[#allocation12 + $0x1c] sm:$0xf]
        %v1116 = vld [vmem:[#allocation12 + $0x20] sm:$0xf]
        %v1117 = vld [vmem:[#allocation12 + $0x24] sm:$0xf]
        %v1118 = vld [vmem:[#allocation12 + $0x28] sm:$0xf]
        %v1119 = vld [vmem:[#allocation12 + $0x2c] sm:$0xf]
        %v1120 = vld [vmem:[#allocation12 + $0x30] sm:$0xf]
        %v1121 = vld [vmem:[#allocation12 + $0x34] sm:$0xf]
        %v1122 = vld [vmem:[#allocation12 + $0x38] sm:$0xf]
        %v1123 = vld [vmem:[#allocation12 + $0x3c] sm:$0xf]
        %v1124 = vld [vmem:[#allocation12 + $0x40] sm:$0xf]
        %v1125 = vld [vmem:[#allocation12 + $0x44] sm:$0xf]
        %v1126 = vld [vmem:[#allocation12 + $0x48] sm:$0xf]
        %v1127 = vld [vmem:[#allocation12 + $0x4c] sm:$0xf]
        %v1128 = vld [vmem:[#allocation12 + $0x50] sm:$0xf]
        %v1129 = vld [vmem:[#allocation12 + $0x54] sm:$0xf]
        %v1130 = vld [vmem:[#allocation12 + $0x58] sm:$0xf]
        %v1131 = vld [vmem:[#allocation12 + $0x5c] sm:$0xf]
        %v1132 = vld [vmem:[#allocation12 + $0x60] sm:$0xf]
        %v1133 = vld [vmem:[#allocation12 + $0x64] sm:$0xf]
        %v1134 = vld [vmem:[#allocation12 + $0x68] sm:$0xf]
        %v1135 = vld [vmem:[#allocation12 + $0x6c] sm:$0xf]
        %v1136 = vld [vmem:[#allocation12 + $0x70] sm:$0xf]
        %v1137 = vld [vmem:[#allocation12 + $0x74] sm:$0xf]
        %v1138 = vld [vmem:[#allocation12 + $0x78] sm:$0xf]
        %v1139 = vld [vmem:[#allocation12 + $0x7c] sm:$0xf]
        %v1140 = vlaneseq
        %v1141 = vshrl.u32 %v1140, 7
        %v1142 = vsub.s32 4, %v1141
        %v1143 = vrot.slane %v413, %v1142
        %v1176 = vunpack.c.l.b16 %v1108
        %v1177 = vunpack.c.l.b16 %v1109
        %v1178 = vunpack.c.l.b16 %v1110
        %v1179 = vunpack.c.l.b16 %v1111
        %v1180 = vunpack.c.l.b16 %v1112
        %v1181 = vunpack.c.l.b16 %v1113
        %v1182 = vunpack.c.l.b16 %v1114
        %v1183 = vunpack.c.l.b16 %v1115
        %v1184 = vunpack.c.l.b16 %v1116
        %v1185 = vunpack.c.l.b16 %v1117
        %v1186 = vunpack.c.l.b16 %v1118
        %v1187 = vunpack.c.l.b16 %v1119
        %v1188 = vunpack.c.l.b16 %v1120
        %v1189 = vunpack.c.l.b16 %v1121
        %v1190 = vunpack.c.l.b16 %v1122
        %v1191 = vunpack.c.l.b16 %v1123
        %v1192 = vunpack.c.l.b16 %v1124
        %v1193 = vunpack.c.l.b16 %v1125
        %v1194 = vunpack.c.l.b16 %v1126
        %v1195 = vunpack.c.l.b16 %v1127
        %v1196 = vunpack.c.l.b16 %v1128
        %v1197 = vunpack.c.l.b16 %v1129
        %v1198 = vunpack.c.l.b16 %v1130
        %v1199 = vunpack.c.l.b16 %v1131
        %v1200 = vunpack.c.l.b16 %v1132
        %v1201 = vunpack.c.l.b16 %v1133
        %v1202 = vunpack.c.l.b16 %v1134
        %v1203 = vunpack.c.l.b16 %v1135
        %v1204 = vunpack.c.l.b16 %v1136
        %v1205 = vunpack.c.l.b16 %v1137
        %v1206 = vunpack.c.l.b16 %v1138
        %v1207 = vunpack.c.l.b16 %v1139
        %v1208 = vpack.c.b16 %v1177, %v1176
        %v1209 = vpack.c.b16 %v1179, %v1178
        %v1210 = vpack.c.b16 %v1181, %v1180
        %v1211 = vpack.c.b16 %v1183, %v1182
        %v1212 = vpack.c.b16 %v1185, %v1184
        %v1213 = vpack.c.b16 %v1187, %v1186
        %v1214 = vpack.c.b16 %v1189, %v1188
        %v1215 = vpack.c.b16 %v1191, %v1190
        %v1216 = vpack.c.b16 %v1193, %v1192
        %v1217 = vpack.c.b16 %v1195, %v1194
        %v1218 = vpack.c.b16 %v1197, %v1196
        %v1219 = vpack.c.b16 %v1199, %v1198
        %v1220 = vpack.c.b16 %v1201, %v1200
        %v1221 = vpack.c.b16 %v1203, %v1202
        %v1222 = vpack.c.b16 %v1205, %v1204
        %v1223 = vpack.c.b16 %v1207, %v1206
        %1240 = vmatprep.subr.bf16.mxu0 0
        %1241 = vmatpush1.bf16.msra.mxu0 %v1208
        %1242 = vmatprep.subr.bf16.mxu0 0
        %1243 = vmatpush1.bf16.msra.mxu0 %v1209
        %1244 = vmatprep.subr.bf16.mxu0 0
        %1245 = vmatpush1.bf16.msra.mxu0 %v1210
        %1246 = vmatprep.subr.bf16.mxu0 0
        %1247 = vmatpush1.bf16.msra.mxu0 %v1211
        %1248 = vmatprep.subr.bf16.mxu0 0
        %1249 = vmatpush1.bf16.msra.mxu0 %v1212
        %1250 = vmatprep.subr.bf16.mxu0 0
        %1251 = vmatpush1.bf16.msra.mxu0 %v1213
        %1252 = vmatprep.subr.bf16.mxu0 0
        %1253 = vmatpush1.bf16.msra.mxu0 %v1214
        %1254 = vmatprep.subr.bf16.mxu0 0
        %1255 = vmatpush1.bf16.msra.mxu0 %v1215
        %1256 = vmatprep.subr.bf16.mxu0 0
        %1257 = vmatpush1.bf16.msra.mxu0 %v1216
        %1258 = vmatprep.subr.bf16.mxu0 0
        %1259 = vmatpush1.bf16.msra.mxu0 %v1217
        %1260 = vmatprep.subr.bf16.mxu0 0
        %1261 = vmatpush1.bf16.msra.mxu0 %v1218
        %1262 = vmatprep.subr.bf16.mxu0 0
        %1263 = vmatpush1.bf16.msra.mxu0 %v1219
        %1264 = vmatprep.subr.bf16.mxu0 0
        %1265 = vmatpush1.bf16.msra.mxu0 %v1220
        %1266 = vmatprep.subr.bf16.mxu0 0
        %1267 = vmatpush1.bf16.msra.mxu0 %v1221
        %1268 = vmatprep.subr.bf16.mxu0 0
        %1269 = vmatpush1.bf16.msra.mxu0 %v1222
        %1270 = vmatprep.subr.bf16.mxu0 0
        %1271 = vmatpush1.bf16.msra.mxu0 %v1223
        %1272 = vmatprep.mubr.bf16.mxu0 %v1107
        %1273 = vmatmul.mubr.bf16.gmra.mrb[0].mxu0 %v1106
        %v1274 = vpop.f32.mrb[0].mxu0
        %v1275 = vadd.f32 %v1143, %v1274
        %v1276 = vpop.f32.mrb[0].mxu0
        %v1277 = vpop.f32.mrb[0].mxu0
        %v1278 = vadd.f32 %v1143, %v1277
        %v1279 = vpop.f32.mrb[0].mxu0
        %1280 = vdwg.mxu0
        %v1281 = vadd.f32 %v948, %v1275
        %v1282 = vadd.f32 %v949, %v1278
        %1283 = vadd.xlane.f32.xlu0 %v1281
        %v1284 = vpop.xlane.xlu0 %1283
        %1285 = vadd.xlane.f32.xlu0 %v1282
        %v1286 = vpop.xlane.xlu0 %1285
        %v1287 = vmul.f32 %v1284, %v919
        %v1288 = vmul.f32 %v1286, %v919
        %v1289 = vsub.f32 %v1281, %v1287
        %v1290 = vsub.f32 %v1282, %v1288
        %v1291 = vmul.f32 %v1289, %v1289
        %v1292 = vmul.f32 %v1290, %v1290
        %1293 = vadd.xlane.f32.xlu0 %v1291
        %v1294 = vpop.xlane.xlu0 %1293
        %1295 = vadd.xlane.f32.xlu0 %v1292
        %v1296 = vpop.xlane.xlu0 %1295
        %v1297 = vmul.f32 %v1294, %v919
        %v1298 = vmul.f32 %v1296, %v919
        %v1299 = vadd.f32 %v1297, 1e-05
        %v1300 = vadd.f32 %v1298, 1e-05
        %v1301 = vrsqrt.pop %v1299
        %v1302 = vrsqrt.pop %v1300
        %v1303 = vmul.f32 %v1289, %v1301
        %v1304 = vmul.f32 %v1290, %v1302
        %v1305 = vlaneseq
        %v1306 = vshrl.u32 %v1305, 7
        %v1307 = vsub.s32 7, %v1306
        %v1308 = vrot.slane %v413, %v1307
        %v1309 = vmul.f32 %v1303, %v1308
        %v1310 = vmul.f32 %v1304, %v1308
        %v1311 = vlaneseq
        %v1312 = vshrl.u32 %v1311, 7
        %v1313 = vsub.s32 0, %v1312
        %v1314 = vrot.slane %v414, %v1313
        %v1315 = vadd.f32 %v1309, %v1314
        %v1316 = vadd.f32 %v1310, %v1314
        %1317 = vst [vmem:[%s410] sm:$0xff] %v1315
        %1318 = vst [vmem:[%s410 + $0x8] sm:$0xff] %v1316
        %s1319 = sand.u32 %s223, 1
        %s1320 = scalar_lea.sflag [#allocation5], %s1319
        %s1321 = sand.u32 %s223, 1
        %s1322 = smul.addr %s1321, 16
        %s1323 = scalar_lea.vmem [#allocation14], %s1322
        // Predicated region
        $region81: #{tpu_custom_call.1} parent=51 // pred_check
          %p1324 = pneg %p233
        $region82: #{tpu_custom_call.1} parent=51 // pred_check_branch
          %1326 = sbr.rel (%p1324) target = $region84
        $region83: #{tpu_custom_call.1} parent=51 // pred_region
          %s1327 = smul.u32 2, %s33
          %s1329 = ssub.s32 256, 256
          %1330 = vsyncadd %s1320, %s1329
          %s1331 = smul.addr %s32, 2
          %s1332 = sadd.s32 %s1327, %s1331
          %s1333 = smul.addr %s1332, 128
          %s1334 = scalar_lea.hbm %s8, %s1333
          %s1335 = sshll.u32 %s1323, 4
          %s1336 = int_to_ptr.vmem [resolvable:$true] %s1335
          %1341 = dma.vmem_to_hbm [thread:$0]  %s1336, 256, %s1334, %s1320, 128, 128, 8
        $region84: #{tpu_custom_call.1} parent=51 // pred_fallthru
          _
      $region52: #{tpu_custom_call.1} parent=5 // pred_fallthru
        _
      %p1342 = scmp.le.s32.totalorder 2, %s23
      // Predicated region
      $region85: #{tpu_custom_call.1} parent=5 // pred_check
        %p1343 = pneg %p1342
      $region86: #{tpu_custom_call.1} parent=5 // pred_check_branch
        %1345 = sbr.rel (%p1343) target = $region88
      $region87: #{tpu_custom_call.1} parent=5 // pred_region
        %s1346 = ssub.s32 %s23, 2
        // Predicated region
        $region89: #{tpu_custom_call.1} parent=87 // pred_check
          %p1347 = pneg %p239
        $region90: #{tpu_custom_call.1} parent=87 // pred_check_branch
          %1349 = sbr.rel (%p1347) target = $region92
        $region91: #{tpu_custom_call.1} parent=87 // pred_region
          %s1350 = sand.u32 %s224, 1
          %s1351 = scalar_lea.sflag [#allocation5], %s1350
          %s1352 = sand.u32 %s224, 1
          %s1353 = smul.addr %s1352, 16
          %s1354 = scalar_lea.vmem [#allocation14], %s1353
          %1355 = dma.done %s1351, 256
        $region92: #{tpu_custom_call.1} parent=87 // pred_fallthru
          _
      $region88: #{tpu_custom_call.1} parent=5 // pred_fallthru
        _
    $region6: #{tpu_custom_call.1} parent=1 // loop_footer
      %s27 = sadd.s32 1, %s23
    $region7: #{tpu_custom_call.1} parent=1 // loop_footer_branch
      %22 = sbr.rel target = $region3
    $region8: #{tpu_custom_call.1} parent=1 // loop_exit
      _
    %1356 = vsyncpa [#allocation4], 1
    %s1357 = scalar_lea.sflag [#allocation4], 1
    %1358 = vsyncpa %s1357, 1
    %1359 = vsyncpa [#allocation7], 1
    %1360 = vsyncpa [#allocation10], 1
    %1361 = vsyncpa [#allocation13], 1
    %1362 = vsyncpa [#allocation5], 1
    %s1363 = scalar_lea.sflag [#allocation5], 1
    %1364 = vsyncpa %s1363, 1

// kernel: tpu_custom_call.1
$region0: #{tpu_custom_call.1}
  #allocation0 [shape = 'u32[]', space=smem, size = 0x4, offset = 0x4, fixed_abs, tag = 'smem constant byte address 0x4 - core index']
  #allocation1 [shape = 'u32[144,128]{1,0:T(1,128)}', space=vmem, size = 0x12000, scoped, tag = 'internal scratch']
  #allocation2 [shape = 'bf16[16,256]{1,0:T(16,128)(2,1)}', space=vmem, size = 0x2000, scoped, tag = 'scratch operand']
  %s0 = inlined_call_operand.hbm [shape: f32[2,16,128], index: 0, kind: input, shape index: {}]
  %s1 = inlined_call_operand.hbm [shape: bf16[128,128], index: 1, kind: input, shape index: {}]
  %s2 = inlined_call_operand.hbm [shape: bf16[128,256], index: 2, kind: input, shape index: {}]
  %s3 = inlined_call_operand.hbm [shape: bf16[128,128], index: 3, kind: input, shape index: {}]
  %s4 = inlined_call_operand.hbm [shape: bf16[128,256], index: 4, kind: input, shape index: {}]
  %s5 = inlined_call_operand.hbm [shape: bf16[256,128], index: 5, kind: input, shape index: {}]
  %s6 = inlined_call_operand.vmem [shape: f32[9,128], index: 6, kind: input, shape index: {}]
  %s7 = inlined_call_operand.vmem [shape: f32[1,256], index: 7, kind: input, shape index: {}]
  %s8 = inlined_call_operand.hbm [shape: f32[2,16,128], index: 8, kind: output, shape index: {}]
  %s9 = sld [smem:[#allocation0]]
  $region93: #{tpu_custom_call.1} parent=0
    _
  %s11 = ssub.s32 1, %s9
  %s12 = scalar_select 0, %s11, %s9
  $region1: #{tpu_custom_call.1} parent=0
    #allocation3 [shape = 'u8[16384]{0}', space=vmem, size = 0x4000, scoped, tag = 'input window, operand 0']
    #allocation4 [shape = 's32[2]{0}', space=sflag, size = 0x8, scoped, tag = 'scoped memory for tpu_custom_call.1']
    #allocation5 [shape = 's32[2]{0}', space=sflag, size = 0x8, scoped, tag = 'scoped memory for tpu_custom_call.1']
    #allocation6 [shape = 'u8[32768]{0}', space=vmem, size = 0x8000, scoped, tag = 'input window, operand 1, single buffered']
    #allocation7 [shape = 's32[1]{0}', space=sflag, size = 0x4, scoped, tag = 'scoped memory for tpu_custom_call.1']
    #allocation8 [shape = 'u8[65536]{0}', space=vmem, size = 0x10000, scoped, tag = 'input window, operand 2, single buffered']
    #allocation9 [shape = 'u8[32768]{0}', space=vmem, size = 0x8000, scoped, tag = 'input window, operand 3, single buffered']
    #allocation10 [shape = 's32[1]{0}', space=sflag, size = 0x4, scoped, tag = 'scoped memory for tpu_custom_call.1']
    #allocation11 [shape = 'u8[65536]{0}', space=vmem, size = 0x10000, scoped, tag = 'input window, operand 4, single buffered']
    #allocation12 [shape = 'u8[65536]{0}', space=vmem, size = 0x10000, scoped, tag = 'input window, operand 5, single buffered']
    #allocation13 [shape = 's32[1]{0}', space=sflag, size = 0x4, scoped, tag = 'scoped memory for tpu_custom_call.1']
    #allocation14 [shape = 'u8[16384]{0}', space=vmem, size = 0x4000, scoped, tag = 'output window, operand 0']
    %13 = vsyncpa [#allocation4], 0
    %s14 = scalar_lea.sflag [#allocation4], 1
    %15 = vsyncpa %s14, 0
    %16 = vsyncpa [#allocation7], 0
    %17 = vsyncpa [#allocation10], 0
    %18 = vsyncpa [#allocation13], 0
    %19 = vsyncpa [#allocation5], 0
    %s20 = scalar_lea.sflag [#allocation5], 1
    %21 = vsyncpa %s20, 0
    loop: start=0, step=1, limit=4
    $region2: #{tpu_custom_call.1} parent=1 // loop_pre_header
      _
    $region3: #{tpu_custom_call.1} parent=1 // loop_header
      %s23 = sphi 0, %s27
      %p24 = scmp.ge.s32.totalorder %s23, 4
      %s30 = sphi 0, %s42
      %s31 = sphi 0, %s38
      %s32 = sphi 0, %s30
      %s33 = sphi 0, %s31
      %s34 = sphi 0, %s32
      %s35 = sphi 0, %s33
      %s45 = sphi 0, %s47
      %s48 = sphi 0, %s45
      %s49 = sphi 0, %s48
      %s65 = sphi 0, %s49
      %s69 = sphi 0, %s69
      %s71 = sphi 0, %s69
      %s72 = sphi 0, %s71
      %s86 = sphi 0, %s72
      %s90 = sphi 0, %s90
      %s92 = sphi 0, %s90
      %s93 = sphi 0, %s92
      %s107 = sphi 0, %s93
      %s111 = sphi 0, %s111
      %s113 = sphi 0, %s111
      %s114 = sphi 0, %s113
      %s128 = sphi 0, %s114
      %s132 = sphi 0, %s132
      %s134 = sphi 0, %s132
      %s135 = sphi 0, %s134
      %s149 = sphi 0, %s135
      %s153 = sphi 0, %s153
      %s155 = sphi 0, %s153
      %s156 = sphi 0, %s155
      %s170 = sphi 0, %s156
      %s174 = sphi 0, %s174
      %s176 = sphi 0, %s174
      %s177 = sphi 0, %s176
      %s191 = sphi 0, %s177
      %s195 = sphi 0, %s195
      %s197 = sphi 0, %s195
      %s198 = sphi 0, %s197
      %s212 = sphi 0, %s198
      %s220 = sphi 0, %s222
      %s223 = sphi 0, %s220
      %s224 = sphi 0, %s223
      %s240 = sphi 0, %s224
    $region4: #{tpu_custom_call.1} parent=1 // loop_header_branch
      %26 = sbr.rel (%p24) target = $region8
    $region5: #{tpu_custom_call.1} parent=1 // loop_body
      %s28 = ssub.s32 %s23, 1
      %s29 = ssub.s32 %s23, 2
      %s36 = sadd.s32 1, %s31
      %p37 = scmp.ge.s32.totalorder %s36, 1
      %s38 = scalar_select %p37, 0, %s36
      %s39 = sadd.s32 1, %s30
      %s40 = scalar_select %p37, %s39, %s30
      %p41 = scmp.ge.s32.totalorder %s40, 2
      %s42 = scalar_select %p41, 0, %s40
      %s43 = ssub.s32 %s30, %s42
      %p44 = scmp.eq.s32.totalorder %s43, 0
      %s46 = sadd.s32 %s45, 1
      %s47 = scalar_select %p44, %s45, %s46
      %p50 = pneg %p44
      %p51 = scmp.eq.s32.totalorder %s23, 1
      %p52 = por %p50, %p51
      %p53 = scmp.ne.s32.totalorder %s45, %s48
      %p54 = scmp.eq.s32.totalorder %s23, 0
      %p55 = por %p53, %p54
      %p56 = scmp.ne.s32.totalorder %s45, %s48
      %p57 = scmp.eq.s32.totalorder %s28, 1
      %p58 = por %p56, %p57
      %p59 = scmp.ne.s32.totalorder %s48, %s49
      %p60 = scmp.eq.s32.totalorder %s28, 0
      %p61 = por %p59, %p60
      %p62 = scmp.ne.s32.totalorder %s48, %s49
      %p63 = scmp.eq.s32.totalorder %s29, 1
      %p64 = por %p62, %p63
      %p66 = scmp.ne.s32.totalorder %s49, %s65
      %p67 = scmp.eq.s32.totalorder %s29, 0
      %p68 = por %p66, %p67
      %s70 = sadd.s32 %s69, 1
      %p73 = scmp.eq.s32.totalorder %s23, 1
      %p74 = scmp.ne.s32.totalorder %s69, %s71
      %p75 = scmp.eq.s32.totalorder %s23, 0
      %p76 = por %p74, %p75
      %p77 = scmp.ne.s32.totalorder %s69, %s71
      %p78 = scmp.eq.s32.totalorder %s28, 1
      %p79 = por %p77, %p78
      %p80 = scmp.ne.s32.totalorder %s71, %s72
      %p81 = scmp.eq.s32.totalorder %s28, 0
      %p82 = por %p80, %p81
      %p83 = scmp.ne.s32.totalorder %s71, %s72
      %p84 = scmp.eq.s32.totalorder %s29, 1
      %p85 = por %p83, %p84
      %p87 = scmp.ne.s32.totalorder %s72, %s86
      %p88 = scmp.eq.s32.totalorder %s29, 0
      %p89 = por %p87, %p88
      %s91 = sadd.s32 %s90, 1
      %p94 = scmp.eq.s32.totalorder %s23, 1
      %p95 = scmp.ne.s32.totalorder %s90, %s92
      %p96 = scmp.eq.s32.totalorder %s23, 0
      %p97 = por %p95, %p96
      %p98 = scmp.ne.s32.totalorder %s90, %s92
      %p99 = scmp.eq.s32.totalorder %s28, 1
      %p100 = por %p98, %p99
      %p101 = scmp.ne.s32.totalorder %s92, %s93
      %p102 = scmp.eq.s32.totalorder %s28, 0
      %p103 = por %p101, %p102
      %p104 = scmp.ne.s32.totalorder %s92, %s93
      %p105 = scmp.eq.s32.totalorder %s29, 1
      %p106 = por %p104, %p105
      %p108 = scmp.ne.s32.totalorder %s93, %s107
      %p109 = scmp.eq.s32.totalorder %s29, 0
      %p110 = por %p108, %p109
      %s112 = sadd.s32 %s111, 1
      %p115 = scmp.eq.s32.totalorder %s23, 1
      %p116 = scmp.ne.s32.totalorder %s111, %s113
      %p117 = scmp.eq.s32.totalorder %s23, 0
      %p118 = por %p116, %p117
      %p119 = scmp.ne.s32.totalorder %s111, %s113
      %p120 = scmp.eq.s32.totalorder %s28, 1
      %p121 = por %p119, %p120
      %p122 = scmp.ne.s32.totalorder %s113, %s114
      %p123 = scmp.eq.s32.totalorder %s28, 0
      %p124 = por %p122, %p123
      %p125 = scmp.ne.s32.totalorder %s113, %s114
      %p126 = scmp.eq.s32.totalorder %s29, 1
      %p127 = por %p125, %p126
      %p129 = scmp.ne.s32.totalorder %s114, %s128
      %p130 = scmp.eq.s32.totalorder %s29, 0
      %p131 = por %p129, %p130
      %s133 = sadd.s32 %s132, 1
      %p136 = scmp.eq.s32.totalorder %s23, 1
      %p137 = scmp.ne.s32.totalorder %s132, %s134
      %p138 = scmp.eq.s32.totalorder %s23, 0
      %p139 = por %p137, %p138
      %p140 = scmp.ne.s32.totalorder %s132, %s134
      %p141 = scmp.eq.s32.totalorder %s28, 1
      %p142 = por %p140, %p141
      %p143 = scmp.ne.s32.totalorder %s134, %s135
      %p144 = scmp.eq.s32.totalorder %s28, 0
      %p145 = por %p143, %p144
      %p146 = scmp.ne.s32.totalorder %s134, %s135
      %p147 = scmp.eq.s32.totalorder %s29, 1
      %p148 = por %p146, %p147
      %p150 = scmp.ne.s32.totalorder %s135, %s149
      %p151 = scmp.eq.s32.totalorder %s29, 0
      %p152 = por %p150, %p151
      %s154 = sadd.s32 %s153, 1
      %p157 = scmp.eq.s32.totalorder %s23, 1
      %p158 = scmp.ne.s32.totalorder %s153, %s155
      %p159 = scmp.eq.s32.totalorder %s23, 0
      %p160 = por %p158, %p159
      %p161 = scmp.ne.s32.totalorder %s153, %s155
      %p162 = scmp.eq.s32.totalorder %s28, 1
      %p163 = por %p161, %p162
      %p164 = scmp.ne.s32.totalorder %s155, %s156
      %p165 = scmp.eq.s32.totalorder %s28, 0
      %p166 = por %p164, %p165
      %p167 = scmp.ne.s32.totalorder %s155, %s156
      %p168 = scmp.eq.s32.totalorder %s29, 1
      %p169 = por %p167, %p168
      %p171 = scmp.ne.s32.totalorder %s156, %s170
      %p172 = scmp.eq.s32.totalorder %s29, 0
      %p173 = por %p171, %p172
      %s175 = sadd.s32 %s174, 1
      %p178 = scmp.eq.s32.totalorder %s23, 1
      %p179 = scmp.ne.s32.totalorder %s174, %s176
      %p180 = scmp.eq.s32.totalorder %s23, 0
      %p181 = por %p179, %p180
      %p182 = scmp.ne.s32.totalorder %s174, %s176
      %p183 = scmp.eq.s32.totalorder %s28, 1
      %p184 = por %p182, %p183
      %p185 = scmp.ne.s32.totalorder %s176, %s177
      %p186 = scmp.eq.s32.totalorder %s28, 0
      %p187 = por %p185, %p186
      %p188 = scmp.ne.s32.totalorder %s176, %s177
      %p189 = scmp.eq.s32.totalorder %s29, 1
      %p190 = por %p188, %p189
      %p192 = scmp.ne.s32.totalorder %s177, %s191
      %p193 = scmp.eq.s32.totalorder %s29, 0
      %p194 = por %p192, %p193
      %s196 = sadd.s32 %s195, 1
      %p199 = scmp.eq.s32.totalorder %s23, 1
      %p200 = scmp.ne.s32.totalorder %s195, %s197
      %p201 = scmp.eq.s32.totalorder %s23, 0
      %p202 = por %p200, %p201
      %p203 = scmp.ne.s32.totalorder %s195, %s197
      %p204 = scmp.eq.s32.totalorder %s28, 1
      %p205 = por %p203, %p204
      %p206 = scmp.ne.s32.totalorder %s197, %s198
      %p207 = scmp.eq.s32.totalorder %s28, 0
      %p208 = por %p206, %p207
      %p209 = scmp.ne.s32.totalorder %s197, %s198
      %p210 = scmp.eq.s32.totalorder %s29, 1
      %p211 = por %p209, %p210
      %p213 = scmp.ne.s32.totalorder %s198, %s212
      %p214 = scmp.eq.s32.totalorder %s29, 0
      %p215 = por %p213, %p214
      %s216 = ssub.s32 %s30, %s42
      %s217 = ssub.s32 %s31, %s38
      %s218 = sor.u32 %s216, %s217
      %p219 = scmp.eq.s32.totalorder %s218, 0
      %s221 = sadd.s32 %s220, 1
      %s222 = scalar_select %p219, %s220, %s221
      %p225 = pneg %p219
      %p226 = scmp.eq.s32.totalorder %s23, 1
      %p227 = por %p225, %p226
      %p228 = scmp.ne.s32.totalorder %s220, %s223
      %p229 = scmp.eq.s32.totalorder %s23, 0
      %p230 = por %p228, %p229
      %p231 = scmp.ne.s32.totalorder %s220, %s223
      %p232 = scmp.eq.s32.totalorder %s28, 1
      %p233 = por %p231, %p232
      %p234 = scmp.ne.s32.totalorder %s223, %s224
      %p235 = scmp.eq.s32.totalorder %s28, 0
      %p236 = por %p234, %p235
      %p237 = scmp.ne.s32.totalorder %s223, %s224
      %p238 = scmp.eq.s32.totalorder %s29, 1
      %p239 = por %p237, %p238
      %p241 = scmp.ne.s32.totalorder %s224, %s240
      %p242 = scmp.eq.s32.totalorder %s29, 0
      %p243 = por %p241, %p242
      %p244 = scmp.le.s32.totalorder 1, %s23
      %p245 = scmp.lt.s32.totalorder %s23, 3
      %p246 = pnand %p244, %p245
      %p247 = pneg %p246
      // Predicated region
      $region9: #{tpu_custom_call.1} parent=5 // pred_check
        _
      $region10: #{tpu_custom_call.1} parent=5 // pred_check_branch
        %249 = sbr.rel (%p246) target = $region12
      $region11: #{tpu_custom_call.1} parent=5 // pred_region
        %s250 = ssub.s32 %s23, 1
        // Predicated region
        $region13: #{tpu_custom_call.1} parent=11 // pred_check
          %p251 = pneg %p82
        $region14: #{tpu_custom_call.1} parent=11 // pred_check_branch
          %253 = sbr.rel (%p251) target = $region16
        $region15: #{tpu_custom_call.1} parent=11 // pred_region
          %s255 = ssub.s32 1024, 1024
          %256 = vsyncadd [#allocation7], %s255
          %s257 = sshll.u32 [#allocation6], 4
          %s258 = int_to_ptr.vmem [resolvable:$true] %s257
          %263 = dma.hbm_to_vmem [thread:$0]  %s1, 1024, %s258, [#allocation7], 64, 64, 4
        $region16: #{tpu_custom_call.1} parent=11 // pred_fallthru
          _
        // Predicated region
        $region17: #{tpu_custom_call.1} parent=11 // pred_check
          %p264 = pneg %p103
        $region18: #{tpu_custom_call.1} parent=11 // pred_check_branch
          %266 = sbr.rel (%p264) target = $region20
        $region19: #{tpu_custom_call.1} parent=11 // pred_region
          %s268 = ssub.s32 2048, 2048
          %269 = vsyncadd [#allocation7], %s268
          %s270 = sshll.u32 [#allocation8], 4
          %s271 = int_to_ptr.vmem [resolvable:$true] %s270
          %276 = dma.hbm_to_vmem [thread:$0]  %s2, 2048, %s271, [#allocation7], 128, 128, 8
        $region20: #{tpu_custom_call.1} parent=11 // pred_fallthru
          _
        // Predicated region
        $region21: #{tpu_custom_call.1} parent=11 // pred_check
          %p277 = pneg %p124
        $region22: #{tpu_custom_call.1} parent=11 // pred_check_branch
          %279 = sbr.rel (%p277) target = $region24
        $region23: #{tpu_custom_call.1} parent=11 // pred_region
          %s281 = ssub.s32 1024, 1024
          %282 = vsyncadd [#allocation10], %s281
          %s283 = sshll.u32 [#allocation9], 4
          %s284 = int_to_ptr.vmem [resolvable:$true] %s283
          %289 = dma.hbm_to_vmem [thread:$0]  %s3, 1024, %s284, [#allocation10], 64, 64, 4
        $region24: #{tpu_custom_call.1} parent=11 // pred_fallthru
          _
        // Predicated region
        $region25: #{tpu_custom_call.1} parent=11 // pred_check
          %p290 = pneg %p145
        $region26: #{tpu_custom_call.1} parent=11 // pred_check_branch
          %292 = sbr.rel (%p290) target = $region28
        $region27: #{tpu_custom_call.1} parent=11 // pred_region
          %s294 = ssub.s32 2048, 2048
          %295 = vsyncadd [#allocation10], %s294
          %s296 = sshll.u32 [#allocation11], 4
          %s297 = int_to_ptr.vmem [resolvable:$true] %s296
          %302 = dma.hbm_to_vmem [thread:$0]  %s4, 2048, %s297, [#allocation10], 128, 128, 8
        $region28: #{tpu_custom_call.1} parent=11 // pred_fallthru
          _
        // Predicated region
        $region29: #{tpu_custom_call.1} parent=11 // pred_check
          %p303 = pneg %p166
        $region30: #{tpu_custom_call.1} parent=11 // pred_check_branch
          %305 = sbr.rel (%p303) target = $region32
        $region31: #{tpu_custom_call.1} parent=11 // pred_region
          %s307 = ssub.s32 2048, 2048
          %308 = vsyncadd [#allocation13], %s307
          %s309 = sshll.u32 [#allocation12], 4
          %s310 = int_to_ptr.vmem [resolvable:$true] %s309
          %315 = dma.hbm_to_vmem [thread:$0]  %s5, 2048, %s310, [#allocation13], 64, 64, 4
        $region32: #{tpu_custom_call.1} parent=11 // pred_fallthru
          _
        // Predicated region
        $region33: #{tpu_custom_call.1} parent=11 // pred_check
          %p316 = pneg %p187
        $region34: #{tpu_custom_call.1} parent=11 // pred_check_branch
          %318 = sbr.rel (%p316) target = $region36
        $region35: #{tpu_custom_call.1} parent=11 // pred_region
          _
        $region36: #{tpu_custom_call.1} parent=11 // pred_fallthru
          _
        // Predicated region
        $region37: #{tpu_custom_call.1} parent=11 // pred_check
          %p319 = pneg %p208
        $region38: #{tpu_custom_call.1} parent=11 // pred_check_branch
          %321 = sbr.rel (%p319) target = $region40
        $region39: #{tpu_custom_call.1} parent=11 // pred_region
          _
        $region40: #{tpu_custom_call.1} parent=11 // pred_fallthru
          _
      $region12: #{tpu_custom_call.1} parent=5 // pred_fallthru
        _
      %p322 = scmp.lt.s32.totalorder %s23, 2
      // Predicated region
      $region41: #{tpu_custom_call.1} parent=5 // pred_check
        %p323 = pneg %p322
      $region42: #{tpu_custom_call.1} parent=5 // pred_check_branch
        %325 = sbr.rel (%p323) target = $region44
      $region43: #{tpu_custom_call.1} parent=5 // pred_region
        // Predicated region
        $region45: #{tpu_custom_call.1} parent=43 // pred_check
          %p326 = pneg %p55
        $region46: #{tpu_custom_call.1} parent=43 // pred_check_branch
          %328 = sbr.rel (%p326) target = $region48
        $region47: #{tpu_custom_call.1} parent=43 // pred_region
          %s329 = sand.u32 %s45, 1
          %s330 = scalar_lea.sflag [#allocation4], %s329
          %s331 = sand.u32 %s45, 1
          %s332 = smul.addr %s331, 16
          %s333 = scalar_lea.vmem [#allocation3], %s332
          %s335 = ssub.s32 256, 256
          %336 = vsyncadd %s330, %s335
          %s337 = smul.addr %s30, 2
          %s338 = smul.addr %s337, 128
          %s339 = scalar_lea.hbm %s0, %s338
          %s340 = sshll.u32 %s333, 4
          %s341 = int_to_ptr.vmem [resolvable:$true] %s340
          %346 = dma.hbm_to_vmem [thread:$0]  %s339, 256, %s341, %s330, 128, 128, 8
        $region48: #{tpu_custom_call.1} parent=43 // pred_fallthru
          _
      $region44: #{tpu_custom_call.1} parent=5 // pred_fallthru
        _
      %p347 = scmp.le.s32.totalorder 1, %s23
      %p348 = scmp.lt.s32.totalorder %s23, 3
      %p349 = pnand %p347, %p348
      %p350 = pneg %p349
      // Predicated region
      $region49: #{tpu_custom_call.1} parent=5 // pred_check
        _
      $region50: #{tpu_custom_call.1} parent=5 // pred_check_branch
        %352 = sbr.rel (%p349) target = $region52
      $region51: #{tpu_custom_call.1} parent=5 // pred_region
        %s353 = ssub.s32 %s23, 1
        %s354 = sand.u32 %s48, 1
        %s355 = scalar_lea.sflag [#allocation4], %s354
        %s356 = sand.u32 %s48, 1
        %s357 = smul.addr %s356, 16
        %s358 = scalar_lea.vmem [#allocation3], %s357
        // Predicated region
        $region53: #{tpu_custom_call.1} parent=51 // pred_check
          %p359 = pneg %p61
        $region54: #{tpu_custom_call.1} parent=51 // pred_check_branch
          %361 = sbr.rel (%p359) target = $region56
        $region55: #{tpu_custom_call.1} parent=51 // pred_region
          %362 = dma.done %s355, 256
        $region56: #{tpu_custom_call.1} parent=51 // pred_fallthru
          _
        // Predicated region
        $region57: #{tpu_custom_call.1} parent=51 // pred_check
          %p363 = pneg %p82
        $region58: #{tpu_custom_call.1} parent=51 // pred_check_branch
          %365 = sbr.rel (%p363) target = $region60
        $region59: #{tpu_custom_call.1} parent=51 // pred_region
          %366 = dma.done [#allocation7], 1024
        $region60: #{tpu_custom_call.1} parent=51 // pred_fallthru
          _
        // Predicated region
        $region61: #{tpu_custom_call.1} parent=51 // pred_check
          %p367 = pneg %p103
        $region62: #{tpu_custom_call.1} parent=51 // pred_check_branch
          %369 = sbr.rel (%p367) target = $region64
        $region63: #{tpu_custom_call.1} parent=51 // pred_region
          %370 = dma.done [#allocation7], 2048
        $region64: #{tpu_custom_call.1} parent=51 // pred_fallthru
          _
        // Predicated region
        $region65: #{tpu_custom_call.1} parent=51 // pred_check
          %p371 = pneg %p124
        $region66: #{tpu_custom_call.1} parent=51 // pred_check_branch
          %373 = sbr.rel (%p371) target = $region68
        $region67: #{tpu_custom_call.1} parent=51 // pred_region
          %374 = dma.done [#allocation10], 1024
        $region68: #{tpu_custom_call.1} parent=51 // pred_fallthru
          _
        // Predicated region
        $region69: #{tpu_custom_call.1} parent=51 // pred_check
          %p375 = pneg %p145
        $region70: #{tpu_custom_call.1} parent=51 // pred_check_branch
          %377 = sbr.rel (%p375) target = $region72
        $region71: #{tpu_custom_call.1} parent=51 // pred_region
          %378 = dma.done [#allocation10], 2048
        $region72: #{tpu_custom_call.1} parent=51 // pred_fallthru
          _
        // Predicated region
        $region73: #{tpu_custom_call.1} parent=51 // pred_check
          %p379 = pneg %p166
        $region74: #{tpu_custom_call.1} parent=51 // pred_check_branch
          %381 = sbr.rel (%p379) target = $region76
        $region75: #{tpu_custom_call.1} parent=51 // pred_region
          %382 = dma.done [#allocation13], 2048
        $region76: #{tpu_custom_call.1} parent=51 // pred_fallthru
          _
        %s383 = sand.u32 %s48, 1
        %s384 = scalar_lea.sflag [#allocation4], %s383
        %s385 = sand.u32 %s48, 1
        %s386 = smul.addr %s385, 16
        %s387 = scalar_lea.vmem [#allocation3], %s386
        %p388 = pneg %p61
        %p389 = pneg %p58
        %p390 = pneg %p82
        %p391 = pneg %p79
        %p392 = pneg %p103
        %p393 = pneg %p100
        %p394 = pneg %p124
        %p395 = pneg %p121
        %p396 = pneg %p145
        %p397 = pneg %p142
        %p398 = pneg %p166
        %p399 = pneg %p163
        %p400 = pneg %p187
        %p401 = pneg %p184
        %p402 = pneg %p208
        %p403 = pneg %p205
        %p404 = pneg %p236
        %p405 = pneg %p233
        %s406 = sand.u32 %s223, 1
        %s407 = scalar_lea.sflag [#allocation5], %s406
        %s408 = sand.u32 %s223, 1
        %s409 = smul.addr %s408, 16
        %s410 = scalar_lea.vmem [#allocation14], %s409
        %s411 = smul.u32 2, %s33
        %v413 = vld [vmem:[%s6] sm:$0xff]
        %v414 = vld [vmem:[%s6 + $0x8] sm:$0x1]
        %p415 = scmp.eq.s32.totalorder %s33, 0
        // Predicated region
        $region77: #{tpu_custom_call.1} parent=51 // pred_check
          %p416 = pneg %p415
        $region78: #{tpu_custom_call.1} parent=51 // pred_check_branch
          %418 = sbr.rel (%p416) target = $region80
        $region79: #{tpu_custom_call.1} parent=51 // pred_region
          %v419 = vld [vmem:[%s358] sm:$0xff]
          %v420 = vld [vmem:[%s358 + $0x8] sm:$0xff]
          %v421 = vpack.c.bf16 %v420, %v419
          %v422 = vld [vmem:[#allocation8] sm:$0xff]
          %v423 = vld [vmem:[#allocation8 + $0x8] sm:$0xff]
          %v424 = vld [vmem:[#allocation8 + $0x10] sm:$0xff]
          %v425 = vld [vmem:[#allocation8 + $0x18] sm:$0xff]
          %v426 = vld [vmem:[#allocation8 + $0x20] sm:$0xff]
          %v427 = vld [vmem:[#allocation8 + $0x28] sm:$0xff]
          %v428 = vld [vmem:[#allocation8 + $0x30] sm:$0xff]
          %v429 = vld [vmem:[#allocation8 + $0x38] sm:$0xff]
          %v430 = vld [vmem:[#allocation8 + $0x40] sm:$0xff]
          %v431 = vld [vmem:[#allocation8 + $0x48] sm:$0xff]
          %v432 = vld [vmem:[#allocation8 + $0x50] sm:$0xff]
          %v433 = vld [vmem:[#allocation8 + $0x58] sm:$0xff]
          %v434 = vld [vmem:[#allocation8 + $0x60] sm:$0xff]
          %v435 = vld [vmem:[#allocation8 + $0x68] sm:$0xff]
          %v436 = vld [vmem:[#allocation8 + $0x70] sm:$0xff]
          %v437 = vld [vmem:[#allocation8 + $0x78] sm:$0xff]
          %v454 = vunpack.c.l.b16 %v422
          %v455 = vunpack.c.h.b16 %v422
          %v456 = vunpack.c.l.b16 %v423
          %v457 = vunpack.c.h.b16 %v423
          %v458 = vunpack.c.l.b16 %v424
          %v459 = vunpack.c.h.b16 %v424
          %v460 = vunpack.c.l.b16 %v425
          %v461 = vunpack.c.h.b16 %v425
          %v462 = vunpack.c.l.b16 %v426
          %v463 = vunpack.c.h.b16 %v426
          %v464 = vunpack.c.l.b16 %v427
          %v465 = vunpack.c.h.b16 %v427
          %v466 = vunpack.c.l.b16 %v428
          %v467 = vunpack.c.h.b16 %v428
          %v468 = vunpack.c.l.b16 %v429
          %v469 = vunpack.c.h.b16 %v429
          %v470 = vunpack.c.l.b16 %v430
          %v471 = vunpack.c.h.b16 %v430
          %v472 = vunpack.c.l.b16 %v431
          %v473 = vunpack.c.h.b16 %v431
          %v474 = vunpack.c.l.b16 %v432
          %v475 = vunpack.c.h.b16 %v432
          %v476 = vunpack.c.l.b16 %v433
          %v477 = vunpack.c.h.b16 %v433
          %v478 = vunpack.c.l.b16 %v434
          %v479 = vunpack.c.h.b16 %v434
          %v480 = vunpack.c.l.b16 %v435
          %v481 = vunpack.c.h.b16 %v435
          %v482 = vunpack.c.l.b16 %v436
          %v483 = vunpack.c.h.b16 %v436
          %v484 = vunpack.c.l.b16 %v437
          %v485 = vunpack.c.h.b16 %v437
          %v486 = vpack.c.b16 %v456, %v454
          %v487 = vpack.c.b16 %v457, %v455
          %v488 = vpack.c.b16 %v460, %v458
          %v489 = vpack.c.b16 %v461, %v459
          %v490 = vpack.c.b16 %v464, %v462
          %v491 = vpack.c.b16 %v465, %v463
          %v492 = vpack.c.b16 %v468, %v466
          %v493 = vpack.c.b16 %v469, %v467
          %v494 = vpack.c.b16 %v472, %v470
          %v495 = vpack.c.b16 %v473, %v471
          %v496 = vpack.c.b16 %v476, %v474
          %v497 = vpack.c.b16 %v477, %v475
          %v498 = vpack.c.b16 %v480, %v478
          %v499 = vpack.c.b16 %v481, %v479
          %v500 = vpack.c.b16 %v484, %v482
          %v501 = vpack.c.b16 %v485, %v483
          %518 = vmatprep.subr.bf16.mxu0 %v487
          %519 = vmatpush1.bf16.msra.mxu0 %v486
          %520 = vmatprep.subr.bf16.mxu0 %v489
          %521 = vmatpush1.bf16.msra.mxu0 %v488
          %522 = vmatprep.subr.bf16.mxu0 %v491
          %523 = vmatpush1.bf16.msra.mxu0 %v490
          %524 = vmatprep.subr.bf16.mxu0 %v493
          %525 = vmatpush1.bf16.msra.mxu0 %v492
          %526 = vmatprep.subr.bf16.mxu0 %v495
          %527 = vmatpush1.bf16.msra.mxu0 %v494
          %528 = vmatprep.subr.bf16.mxu0 %v497
          %529 = vmatpush1.bf16.msra.mxu0 %v496
          %530 = vmatprep.subr.bf16.mxu0 %v499
          %531 = vmatpush1.bf16.msra.mxu0 %v498
          %532 = vmatprep.subr.bf16.mxu0 %v501
          %533 = vmatpush1.bf16.msra.mxu0 %v500
          %534 = vmatprep.subr.bf16.mxu0 0
          %535 = vmatpush1.bf16.msra.mxu0 0
          %536 = vmatprep.subr.bf16.mxu0 0
          %537 = vmatpush1.bf16.msra.mxu0 0
          %538 = vmatprep.subr.bf16.mxu0 0
          %539 = vmatpush1.bf16.msra.mxu0 0
          %540 = vmatprep.subr.bf16.mxu0 0
          %541 = vmatpush1.bf16.msra.mxu0 0
          %542 = vmatprep.subr.bf16.mxu0 0
          %543 = vmatpush1.bf16.msra.mxu0 0
          %544 = vmatprep.subr.bf16.mxu0 0
          %545 = vmatpush1.bf16.msra.mxu0 0
          %546 = vmatprep.subr.bf16.mxu0 0
          %547 = vmatpush1.bf16.msra.mxu0 0
          %548 = vmatprep.subr.bf16.mxu0 0
          %549 = vmatpush1.bf16.msra.mxu0 0
          %550 = vmatprep.mubr.bf16.mxu0 0
          %551 = vmatmul.mubr.bf16.gmra.mrb[0].mxu0 %v421
          %v552 = vpop.f32.mrb[0].mxu0
          %v553 = vadd.f32 0.0, %v552
          %v554 = vpop.f32.mrb[0].mxu0
          %v555 = vadd.f32 0.0, %v554
          %v556 = vpop.f32.mrb[0].mxu0
          %v557 = vadd.f32 0.0, %v556
          %v558 = vpop.f32.mrb[0].mxu0
          %v559 = vadd.f32 0.0, %v558
          %560 = vdwg.mxu0
          %v561 = vlaneseq
          %v562 = vshrl.u32 %v561, 7
          %v563 = vsub.s32 1, %v562
          %v564 = vrot.slane %v413, %v563
          %v565 = vadd.f32 %v553, %v564
          %v566 = vadd.f32 %v557, %v564
          %v567 = vpack.c.bf16 %v566, %v565
          %568 = vst [vmem:[#allocation2] sm:$0xff] %v567
          %v569 = vlaneseq
          %v570 = vshrl.u32 %v569, 7
          %v571 = vsub.s32 2, %v570
          %v572 = vrot.slane %v413, %v571
          %v573 = vadd.f32 %v555, %v572
          %v574 = vadd.f32 %v559, %v572
          %v575 = vpack.c.bf16 %v574, %v573
          %576 = vst [vmem:[#allocation2 + $0x8] sm:$0xff] %v575
        $region80: #{tpu_custom_call.1} parent=51 // pred_fallthru
          _
        %s577 = smul.u32 %s33, 16
        %s578 = scalar_lea.vmem %s358, %s577 [#allocation3]
        %v579 = vld [vmem:[%s578] sm:$0xff]
        %v580 = vld [vmem:[%s578 + $0x8] sm:$0xff]
        %v581 = vpack.c.bf16 %v580, %v579
        %v582 = vld [vmem:[#allocation6] sm:$0xf]
        %v583 = vld [vmem:[#allocation6 + $0x4] sm:$0xf]
        %v584 = vld [vmem:[#allocation6 + $0x8] sm:$0xf]
        %v585 = vld [vmem:[#allocation6 + $0xc] sm:$0xf]
        %v586 = vld [vmem:[#allocation6 + $0x10] sm:$0xf]
        %v587 = vld [vmem:[#allocation6 + $0x14] sm:$0xf]
        %v588 = vld [vmem:[#allocation6 + $0x18] sm:$0xf]
        %v589 = vld [vmem:[#allocation6 + $0x1c] sm:$0xf]
        %v590 = vld [vmem:[#allocation6 + $0x20] sm:$0xf]
        %v591 = vld [vmem:[#allocation6 + $0x24] sm:$0xf]
        %v592 = vld [vmem:[#allocation6 + $0x28] sm:$0xf]
        %v593 = vld [vmem:[#allocation6 + $0x2c] sm:$0xf]
        %v594 = vld [vmem:[#allocation6 + $0x30] sm:$0xf]
        %v595 = vld [vmem:[#allocation6 + $0x34] sm:$0xf]
        %v596 = vld [vmem:[#allocation6 + $0x38] sm:$0xf]
        %v597 = vld [vmem:[#allocation6 + $0x3c] sm:$0xf]
        %v598 = vlaneseq
        %v599 = vshrl.u32 %v598, 7
        %v600 = vsub.s32 0, %v599
        %v601 = vrot.slane %v413, %v600
        %v618 = vunpack.c.l.b16 %v582
        %v619 = vunpack.c.l.b16 %v583
        %v620 = vunpack.c.l.b16 %v584
        %v621 = vunpack.c.l.b16 %v585
        %v622 = vunpack.c.l.b16 %v586
        %v623 = vunpack.c.l.b16 %v587
        %v624 = vunpack.c.l.b16 %v588
        %v625 = vunpack.c.l.b16 %v589
        %v626 = vunpack.c.l.b16 %v590
        %v627 = vunpack.c.l.b16 %v591
        %v628 = vunpack.c.l.b16 %v592
        %v629 = vunpack.c.l.b16 %v593
        %v630 = vunpack.c.l.b16 %v594
        %v631 = vunpack.c.l.b16 %v595
        %v632 = vunpack.c.l.b16 %v596
        %v633 = vunpack.c.l.b16 %v597
        %v634 = vpack.c.b16 %v619, %v618
        %v635 = vpack.c.b16 %v621, %v620
        %v636 = vpack.c.b16 %v623, %v622
        %v637 = vpack.c.b16 %v625, %v624
        %v638 = vpack.c.b16 %v627, %v626
        %v639 = vpack.c.b16 %v629, %v628
        %v640 = vpack.c.b16 %v631, %v630
        %v641 = vpack.c.b16 %v633, %v632
        %650 = vmatprep.subr.bf16.mxu0 0
        %651 = vmatpush1.bf16.msra.mxu0 %v634
        %652 = vmatprep.subr.bf16.mxu0 0
        %653 = vmatpush1.bf16.msra.mxu0 %v635
        %654 = vmatprep.subr.bf16.mxu0 0
        %655 = vmatpush1.bf16.msra.mxu0 %v636
        %656 = vmatprep.subr.bf16.mxu0 0
        %657 = vmatpush1.bf16.msra.mxu0 %v637
        %658 = vmatprep.subr.bf16.mxu0 0
        %659 = vmatpush1.bf16.msra.mxu0 %v638
        %660 = vmatprep.subr.bf16.mxu0 0
        %661 = vmatpush1.bf16.msra.mxu0 %v639
        %662 = vmatprep.subr.bf16.mxu0 0
        %663 = vmatpush1.bf16.msra.mxu0 %v640
        %664 = vmatprep.subr.bf16.mxu0 0
        %665 = vmatpush1.bf16.msra.mxu0 %v641
        %666 = vmatprep.subr.bf16.mxu0 0
        %667 = vmatpush1.bf16.msra.mxu0 0
        %668 = vmatprep.subr.bf16.mxu0 0
        %669 = vmatpush1.bf16.msra.mxu0 0
        %670 = vmatprep.subr.bf16.mxu0 0
        %671 = vmatpush1.bf16.msra.mxu0 0
        %672 = vmatprep.subr.bf16.mxu0 0
        %673 = vmatpush1.bf16.msra.mxu0 0
        %674 = vmatprep.subr.bf16.mxu0 0
        %675 = vmatpush1.bf16.msra.mxu0 0
        %676 = vmatprep.subr.bf16.mxu0 0
        %677 = vmatpush1.bf16.msra.mxu0 0
        %678 = vmatprep.subr.bf16.mxu0 0
        %679 = vmatpush1.bf16.msra.mxu0 0
        %680 = vmatprep.subr.bf16.mxu0 0
        %681 = vmatpush1.bf16.msra.mxu0 0
        %682 = vmatprep.mubr.bf16.mxu0 0
        %683 = vmatmul.mubr.bf16.gmra.mrb[0].mxu0 %v581
        %v684 = vpop.f32.mrb[0].mxu0
        %v685 = vadd.f32 %v601, %v684
        %v686 = vpop.f32.mrb[0].mxu0
        %v687 = vpop.f32.mrb[0].mxu0
        %v688 = vadd.f32 %v601, %v687
        %v689 = vpop.f32.mrb[0].mxu0
        %690 = vdwg.mxu0
        %v691 = vld [vmem:[#allocation2] sm:$0xff]
        %v692 = vld [vmem:[#allocation2 + $0x8] sm:$0xff]
        %v693 = vpack.c.bf16 %v688, %v685
        %694 = vmatprep.subr.bf16.mxu0 0
        %695 = vmatpush1.bf16.xpose.msra.mxu0 %v691
        %696 = vmatprep.subr.bf16.mxu0 0
        %697 = vmatpush1.bf16.xpose.msra.mxu0 0
        %698 = vmatprep.subr.bf16.mxu0 0
        %699 = vmatpush1.bf16.xpose.msra.mxu0 0
        %700 = vmatprep.subr.bf16.mxu0 0
        %701 = vmatpush1.bf16.xpose.msra.mxu0 0
        %702 = vmatprep.subr.bf16.mxu0 0
        %703 = vmatpush1.bf16.xpose.msra.mxu0 0
        %704 = vmatprep.subr.bf16.mxu0 0
        %705 = vmatpush1.bf16.xpose.msra.mxu0 0
        %706 = vmatprep.subr.bf16.mxu0 0
        %707 = vmatpush1.bf16.xpose.msra.mxu0 0
        %708 = vmatprep.subr.bf16.mxu0 0
        %709 = vmatpush1.bf16.xpose.msra.mxu0 0
        %710 = vmatprep.subr.bf16.mxu0 0
        %711 = vmatpush1.bf16.xpose.msra.mxu0 0
        %712 = vmatprep.subr.bf16.mxu0 0
        %713 = vmatpush1.bf16.xpose.msra.mxu0 0
        %714 = vmatprep.subr.bf16.mxu0 0
        %715 = vmatpush1.bf16.xpose.msra.mxu0 0
        %716 = vmatprep.subr.bf16.mxu0 0
        %717 = vmatpush1.bf16.xpose.msra.mxu0 0
        %718 = vmatprep.subr.bf16.mxu0 0
        %719 = vmatpush1.bf16.xpose.msra.mxu0 0
        %720 = vmatprep.subr.bf16.mxu0 0
        %721 = vmatpush1.bf16.xpose.msra.mxu0 0
        %722 = vmatprep.subr.bf16.mxu0 0
        %723 = vmatpush1.bf16.xpose.msra.mxu0 0
        %724 = vmatprep.subr.bf16.mxu0 0
        %725 = vmatpush1.bf16.xpose.msra.mxu0 0
        %726 = vmatprep.mubr.bf16.mxu0 0
        %727 = vmatmul.mubr.bf16.gmra.mrb[0].mxu0 %v693
        %v728 = vpop.f32.mrb[0].mxu0
        %v729 = vadd.f32 0.0, %v728
        %v730 = vpop.f32.mrb[0].mxu0
        %v731 = vpop.f32.mrb[0].mxu0
        %v732 = vadd.f32 0.0, %v731
        %v733 = vpop.f32.mrb[0].mxu0
        %734 = vdwg.mxu0
        %vm735 = vcmask 130048
        %v736 = vsel %vm735, %v729, -inf
        %737 = vmax.xlane.f32.xlu0 %v736
        %v738 = vpop.xlane.xlu0 %737
        %v739 = vsel %vm735, %v732, -inf
        %740 = vmax.xlane.f32.xlu0 %v739
        %v741 = vpop.xlane.xlu0 %740
        %v742 = vsub.f32 %v729, %v738
        %v743 = vsub.f32 %v732, %v741
        %v744 = vmul.f32 %v742, 1.442695
        %v745 = vpow.pop %v744
        %v746 = vmul.f32 %v743, 1.442695
        %v747 = vpow.pop %v746
        %v748 = vsel %vm735, %v745, 0.0
        %749 = vadd.xlane.f32.xlu0 %v748
        %v750 = vpop.xlane.xlu0 %749
        %v751 = vsel %vm735, %v747, 0.0
        %752 = vadd.xlane.f32.xlu0 %v751
        %v753 = vpop.xlane.xlu0 %752
        %v754 = vpack.c.bf16 %v747, %v745
        %v756 = vsel %vm735, %v754, 0
        %758 = vmatprep.subr.bf16.mxu0 0
        %759 = vmatpush1.bf16.msra.mxu0 %v692
        %760 = vmatprep.subr.bf16.mxu0 0
        %761 = vmatpush1.bf16.msra.mxu0 0
        %762 = vmatprep.subr.bf16.mxu0 0
        %763 = vmatpush1.bf16.msra.mxu0 0
        %764 = vmatprep.subr.bf16.mxu0 0
        %765 = vmatpush1.bf16.msra.mxu0 0
        %766 = vmatprep.subr.bf16.mxu0 0
        %767 = vmatpush1.bf16.msra.mxu0 0
        %768 = vmatprep.subr.bf16.mxu0 0
        %769 = vmatpush1.bf16.msra.mxu0 0
        %770 = vmatprep.subr.bf16.mxu0 0
        %771 = vmatpush1.bf16.msra.mxu0 0
        %772 = vmatprep.subr.bf16.mxu0 0
        %773 = vmatpush1.bf16.msra.mxu0 0
        %774 = vmatprep.subr.bf16.mxu0 0
        %775 = vmatpush1.bf16.msra.mxu0 0
        %776 = vmatprep.subr.bf16.mxu0 0
        %777 = vmatpush1.bf16.msra.mxu0 0
        %778 = vmatprep.subr.bf16.mxu0 0
        %779 = vmatpush1.bf16.msra.mxu0 0
        %780 = vmatprep.subr.bf16.mxu0 0
        %781 = vmatpush1.bf16.msra.mxu0 0
        %782 = vmatprep.subr.bf16.mxu0 0
        %783 = vmatpush1.bf16.msra.mxu0 0
        %784 = vmatprep.subr.bf16.mxu0 0
        %785 = vmatpush1.bf16.msra.mxu0 0
        %786 = vmatprep.subr.bf16.mxu0 0
        %787 = vmatpush1.bf16.msra.mxu0 0
        %788 = vmatprep.subr.bf16.mxu0 0
        %789 = vmatpush1.bf16.msra.mxu0 0
        %790 = vmatprep.mubr.bf16.mxu0 0
        %791 = vmatmul.mubr.bf16.gmra.mrb[0].mxu0 %v756
        %v792 = vpop.f32.mrb[0].mxu0
        %v793 = vadd.f32 0.0, %v792
        %v794 = vpop.f32.mrb[0].mxu0
        %v795 = vpop.f32.mrb[0].mxu0
        %v796 = vadd.f32 0.0, %v795
        %v797 = vpop.f32.mrb[0].mxu0
        %798 = vdwg.mxu0
        %v799 = vrcp.pop %v750
        %v800 = vrcp.pop %v753
        %v801 = vmul.f32 %v793, %v799
        %v802 = vmul.f32 %v796, %v800
        %v803 = vpack.c.bf16 %v802, %v801
        %v804 = vld [vmem:[#allocation9] sm:$0xf]
        %v805 = vld [vmem:[#allocation9 + $0x4] sm:$0xf]
        %v806 = vld [vmem:[#allocation9 + $0x8] sm:$0xf]
        %v807 = vld [vmem:[#allocation9 + $0xc] sm:$0xf]
        %v808 = vld [vmem:[#allocation9 + $0x10] sm:$0xf]
        %v809 = vld [vmem:[#allocation9 + $0x14] sm:$0xf]
        %v810 = vld [vmem:[#allocation9 + $0x18] sm:$0xf]
        %v811 = vld [vmem:[#allocation9 + $0x1c] sm:$0xf]
        %v812 = vld [vmem:[#allocation9 + $0x20] sm:$0xf]
        %v813 = vld [vmem:[#allocation9 + $0x24] sm:$0xf]
        %v814 = vld [vmem:[#allocation9 + $0x28] sm:$0xf]
        %v815 = vld [vmem:[#allocation9 + $0x2c] sm:$0xf]
        %v816 = vld [vmem:[#allocation9 + $0x30] sm:$0xf]
        %v817 = vld [vmem:[#allocation9 + $0x34] sm:$0xf]
        %v818 = vld [vmem:[#allocation9 + $0x38] sm:$0xf]
        %v819 = vld [vmem:[#allocation9 + $0x3c] sm:$0xf]
        %v820 = vlaneseq
        %v821 = vshrl.u32 %v820, 7
        %v822 = vsub.s32 3, %v821
        %v823 = vrot.slane %v413, %v822
        %v840 = vunpack.c.l.b16 %v804
        %v841 = vunpack.c.l.b16 %v805
        %v842 = vunpack.c.l.b16 %v806
        %v843 = vunpack.c.l.b16 %v807
        %v844 = vunpack.c.l.b16 %v808
        %v845 = vunpack.c.l.b16 %v809
        %v846 = vunpack.c.l.b16 %v810
        %v847 = vunpack.c.l.b16 %v811
        %v848 = vunpack.c.l.b16 %v812
        %v849 = vunpack.c.l.b16 %v813
        %v850 = vunpack.c.l.b16 %v814
        %v851 = vunpack.c.l.b16 %v815
        %v852 = vunpack.c.l.b16 %v816
        %v853 = vunpack.c.l.b16 %v817
        %v854 = vunpack.c.l.b16 %v818
        %v855 = vunpack.c.l.b16 %v819
        %v856 = vpack.c.b16 %v841, %v840
        %v857 = vpack.c.b16 %v843, %v842
        %v858 = vpack.c.b16 %v845, %v844
        %v859 = vpack.c.b16 %v847, %v846
        %v860 = vpack.c.b16 %v849, %v848
        %v861 = vpack.c.b16 %v851, %v850
        %v862 = vpack.c.b16 %v853, %v852
        %v863 = vpack.c.b16 %v855, %v854
        %872 = vmatprep.subr.bf16.mxu0 0
        %873 = vmatpush1.bf16.msra.mxu0 %v856
        %874 = vmatprep.subr.bf16.mxu0 0
        %875 = vmatpush1.bf16.msra.mxu0 %v857
        %876 = vmatprep.subr.bf16.mxu0 0
        %877 = vmatpush1.bf16.msra.mxu0 %v858
        %878 = vmatprep.subr.bf16.mxu0 0
        %879 = vmatpush1.bf16.msra.mxu0 %v859
        %880 = vmatprep.subr.bf16.mxu0 0
        %881 = vmatpush1.bf16.msra.mxu0 %v860
        %882 = vmatprep.subr.bf16.mxu0 0
        %883 = vmatpush1.bf16.msra.mxu0 %v861
        %884 = vmatprep.subr.bf16.mxu0 0
        %885 = vmatpush1.bf16.msra.mxu0 %v862
        %886 = vmatprep.subr.bf16.mxu0 0
        %887 = vmatpush1.bf16.msra.mxu0 %v863
        %888 = vmatprep.subr.bf16.mxu0 0
        %889 = vmatpush1.bf16.msra.mxu0 0
        %890 = vmatprep.subr.bf16.mxu0 0
        %891 = vmatpush1.bf16.msra.mxu0 0
        %892 = vmatprep.subr.bf16.mxu0 0
        %893 = vmatpush1.bf16.msra.mxu0 0
        %894 = vmatprep.subr.bf16.mxu0 0
        %895 = vmatpush1.bf16.msra.mxu0 0
        %896 = vmatprep.subr.bf16.mxu0 0
        %897 = vmatpush1.bf16.msra.mxu0 0
        %898 = vmatprep.subr.bf16.mxu0 0
        %899 = vmatpush1.bf16.msra.mxu0 0
        %900 = vmatprep.subr.bf16.mxu0 0
        %901 = vmatpush1.bf16.msra.mxu0 0
        %902 = vmatprep.subr.bf16.mxu0 0
        %903 = vmatpush1.bf16.msra.mxu0 0
        %904 = vmatprep.mubr.bf16.mxu0 0
        %905 = vmatmul.mubr.bf16.gmra.mrb[0].mxu0 %v803
        %v906 = vpop.f32.mrb[0].mxu0
        %v907 = vadd.f32 %v823, %v906
        %v908 = vpop.f32.mrb[0].mxu0
        %v909 = vpop.f32.mrb[0].mxu0
        %v910 = vadd.f32 %v823, %v909
        %v911 = vpop.f32.mrb[0].mxu0
        %912 = vdwg.mxu0
        %v913 = vadd.f32 %v579, %v907
        %v914 = vadd.f32 %v580, %v910
        %915 = vadd.xlane.f32.xlu0 %v913
        %v916 = vpop.xlane.xlu0 %915
        %917 = vadd.xlane.f32.xlu0 %v914
        %v918 = vpop.xlane.xlu0 %917
        %v919 = vrcp.pop 128.0
        %v920 = vmul.f32 %v916, %v919
        %v921 = vmul.f32 %v918, %v919
        %v922 = vsub.f32 %v913, %v920
        %v923 = vsub.f32 %v914, %v921
        %v924 = vmul.f32 %v922, %v922
        %v925 = vmul.f32 %v923, %v923
        %926 = vadd.xlane.f32.xlu0 %v924
        %v927 = vpop.xlane.xlu0 %926
        %928 = vadd.xlane.f32.xlu0 %v925
        %v929 = vpop.xlane.xlu0 %928
        %v930 = vmul.f32 %v927, %v919
        %v931 = vmul.f32 %v929, %v919
        %v932 = vadd.f32 %v930, 1e-05
        %v933 = vadd.f32 %v931, 1e-05
        %v934 = vrsqrt.pop %v932
        %v935 = vrsqrt.pop %v933
        %v936 = vmul.f32 %v922, %v934
        %v937 = vmul.f32 %v923, %v935
        %v938 = vlaneseq
        %v939 = vshrl.u32 %v938, 7
        %v940 = vsub.s32 5, %v939
        %v941 = vrot.slane %v413, %v940
        %v942 = vmul.f32 %v936, %v941
        %v943 = vmul.f32 %v937, %v941
        %v944 = vlaneseq
        %v945 = vshrl.u32 %v944, 7
        %v946 = vsub.s32 6, %v945
        %v947 = vrot.slane %v413, %v946
        %v948 = vadd.f32 %v942, %v947
        %v949 = vadd.f32 %v943, %v947
        %v950 = vpack.c.bf16 %v949, %v948
        %v951 = vld [vmem:[#allocation11] sm:$0xff]
        %v952 = vld [vmem:[#allocation11 + $0x8] sm:$0xff]
        %v953 = vld [vmem:[#allocation11 + $0x10] sm:$0xff]
        %v954 = vld [vmem:[#allocation11 + $0x18] sm:$0xff]
        %v955 = vld [vmem:[#allocation11 + $0x20] sm:$0xff]
        %v956 = vld [vmem:[#allocation11 + $0x28] sm:$0xff]
        %v957 = vld [vmem:[#allocation11 + $0x30] sm:$0xff]
        %v958 = vld [vmem:[#allocation11 + $0x38] sm:$0xff]
        %v959 = vld [vmem:[#allocation11 + $0x40] sm:$0xff]
        %v960 = vld [vmem:[#allocation11 + $0x48] sm:$0xff]
        %v961 = vld [vmem:[#allocation11 + $0x50] sm:$0xff]
        %v962 = vld [vmem:[#allocation11 + $0x58] sm:$0xff]
        %v963 = vld [vmem:[#allocation11 + $0x60] sm:$0xff]
        %v964 = vld [vmem:[#allocation11 + $0x68] sm:$0xff]
        %v965 = vld [vmem:[#allocation11 + $0x70] sm:$0xff]
        %v966 = vld [vmem:[#allocation11 + $0x78] sm:$0xff]
        %v967 = vld [vmem:[%s7] sm:$0x3]
        %v969 = vlaneseq
        %v970 = vshrl.u32 %v969, 7
        %v971 = vsub.s32 0, %v970
        %v972 = vrot.slane %v967, %v971
        %v973 = vlaneseq
        %v974 = vshrl.u32 %v973, 7
        %v975 = vsub.s32 1, %v974
        %v976 = vrot.slane %v967, %v975
        %v995 = vunpack.c.l.b16 %v951
        %v996 = vunpack.c.h.b16 %v951
        %v997 = vunpack.c.l.b16 %v952
        %v998 = vunpack.c.h.b16 %v952
        %v999 = vunpack.c.l.b16 %v953
        %v1000 = vunpack.c.h.b16 %v953
        %v1001 = vunpack.c.l.b16 %v954
        %v1002 = vunpack.c.h.b16 %v954
        %v1003 = vunpack.c.l.b16 %v955
        %v1004 = vunpack.c.h.b16 %v955
        %v1005 = vunpack.c.l.b16 %v956
        %v1006 = vunpack.c.h.b16 %v956
        %v1007 = vunpack.c.l.b16 %v957
        %v1008 = vunpack.c.h.b16 %v957
        %v1009 = vunpack.c.l.b16 %v958
        %v1010 = vunpack.c.h.b16 %v958
        %v1011 = vunpack.c.l.b16 %v959
        %v1012 = vunpack.c.h.b16 %v959
        %v1013 = vunpack.c.l.b16 %v960
        %v1014 = vunpack.c.h.b16 %v960
        %v1015 = vunpack.c.l.b16 %v961
        %v1016 = vunpack.c.h.b16 %v961
        %v1017 = vunpack.c.l.b16 %v962
        %v1018 = vunpack.c.h.b16 %v962
        %v1019 = vunpack.c.l.b16 %v963
        %v1020 = vunpack.c.h.b16 %v963
        %v1021 = vunpack.c.l.b16 %v964
        %v1022 = vunpack.c.h.b16 %v964
        %v1023 = vunpack.c.l.b16 %v965
        %v1024 = vunpack.c.h.b16 %v965
        %v1025 = vunpack.c.l.b16 %v966
        %v1026 = vunpack.c.h.b16 %v966
        %v1027 = vpack.c.b16 %v997, %v995
        %v1028 = vpack.c.b16 %v998, %v996
        %v1029 = vpack.c.b16 %v1001, %v999
        %v1030 = vpack.c.b16 %v1002, %v1000
        %v1031 = vpack.c.b16 %v1005, %v1003
        %v1032 = vpack.c.b16 %v1006, %v1004
        %v1033 = vpack.c.b16 %v1009, %v1007
        %v1034 = vpack.c.b16 %v1010, %v1008
        %v1035 = vpack.c.b16 %v1013, %v1011
        %v1036 = vpack.c.b16 %v1014, %v1012
        %v1037 = vpack.c.b16 %v1017, %v1015
        %v1038 = vpack.c.b16 %v1018, %v1016
        %v1039 = vpack.c.b16 %v1021, %v1019
        %v1040 = vpack.c.b16 %v1022, %v1020
        %v1041 = vpack.c.b16 %v1025, %v1023
        %v1042 = vpack.c.b16 %v1026, %v1024
        %1059 = vmatprep.subr.bf16.mxu0 %v1028
        %1060 = vmatpush1.bf16.msra.mxu0 %v1027
        %1061 = vmatprep.subr.bf16.mxu0 %v1030
        %1062 = vmatpush1.bf16.msra.mxu0 %v1029
        %1063 = vmatprep.subr.bf16.mxu0 %v1032
        %1064 = vmatpush1.bf16.msra.mxu0 %v1031
        %1065 = vmatprep.subr.bf16.mxu0 %v1034
        %1066 = vmatpush1.bf16.msra.mxu0 %v1033
        %1067 = vmatprep.subr.bf16.mxu0 %v1036
        %1068 = vmatpush1.bf16.msra.mxu0 %v1035
        %1069 = vmatprep.subr.bf16.mxu0 %v1038
        %1070 = vmatpush1.bf16.msra.mxu0 %v1037
        %1071 = vmatprep.subr.bf16.mxu0 %v1040
        %1072 = vmatpush1.bf16.msra.mxu0 %v1039
        %1073 = vmatprep.subr.bf16.mxu0 %v1042
        %1074 = vmatpush1.bf16.msra.mxu0 %v1041
        %1075 = vmatprep.subr.bf16.mxu0 0
        %1076 = vmatpush1.bf16.msra.mxu0 0
        %1077 = vmatprep.subr.bf16.mxu0 0
        %1078 = vmatpush1.bf16.msra.mxu0 0
        %1079 = vmatprep.subr.bf16.mxu0 0
        %1080 = vmatpush1.bf16.msra.mxu0 0
        %1081 = vmatprep.subr.bf16.mxu0 0
        %1082 = vmatpush1.bf16.msra.mxu0 0
        %1083 = vmatprep.subr.bf16.mxu0 0
        %1084 = vmatpush1.bf16.msra.mxu0 0
        %1085 = vmatprep.subr.bf16.mxu0 0
        %1086 = vmatpush1.bf16.msra.mxu0 0
        %1087 = vmatprep.subr.bf16.mxu0 0
        %1088 = vmatpush1.bf16.msra.mxu0 0
        %1089 = vmatprep.subr.bf16.mxu0 0
        %1090 = vmatpush1.bf16.msra.mxu0 0
        %1091 = vmatprep.mubr.bf16.mxu0 0
        %1092 = vmatmul.mubr.bf16.gmra.mrb[0].mxu0 %v950
        %v1093 = vpop.f32.mrb[0].mxu0
        %v1094 = vadd.f32 %v972, %v1093
        %v1095 = vpop.f32.mrb[0].mxu0
        %v1096 = vadd.f32 %v976, %v1095
        %v1097 = vpop.f32.mrb[0].mxu0
        %v1098 = vadd.f32 %v972, %v1097
        %v1099 = vpop.f32.mrb[0].mxu0
        %v1100 = vadd.f32 %v976, %v1099
        %1101 = vdwg.mxu0
        %v1102 = vmax.f32 %v1094, 0.0
        %v1103 = vmax.f32 %v1096, 0.0
        %v1104 = vmax.f32 %v1098, 0.0
        %v1105 = vmax.f32 %v1100, 0.0
        %v1106 = vpack.c.bf16 %v1104, %v1102
        %v1107 = vpack.c.bf16 %v1105, %v1103
        %v1108 = vld [vmem:[#allocation12] sm:$0xf]
        %v1109 = vld [vmem:[#allocation12 + $0x4] sm:$0xf]
        %v1110 = vld [vmem:[#allocation12 + $0x8] sm:$0xf]
        %v1111 = vld [vmem:[#allocation12 + $0xc] sm:$0xf]
        %v1112 = vld [vmem:[#allocation12 + $0x10] sm:$0xf]
        %v1113 = vld [vmem:[#allocation12 + $0x14] sm:$0xf]
        %v1114 = vld [vmem:[#allocation12 + $0x18] sm:$0xf]
        %v1115 = vld [vmem:[#allocation12 + $0x1c] sm:$0xf]
        %v1116 = vld [vmem:[#allocation12 + $0x20] sm:$0xf]
        %v1117 = vld [vmem:[#allocation12 + $0x24] sm:$0xf]
        %v1118 = vld [vmem:[#allocation12 + $0x28] sm:$0xf]
        %v1119 = vld [vmem:[#allocation12 + $0x2c] sm:$0xf]
        %v1120 = vld [vmem:[#allocation12 + $0x30] sm:$0xf]
        %v1121 = vld [vmem:[#allocation12 + $0x34] sm:$0xf]
        %v1122 = vld [vmem:[#allocation12 + $0x38] sm:$0xf]
        %v1123 = vld [vmem:[#allocation12 + $0x3c] sm:$0xf]
        %v1124 = vld [vmem:[#allocation12 + $0x40] sm:$0xf]
        %v1125 = vld [vmem:[#allocation12 + $0x44] sm:$0xf]
        %v1126 = vld [vmem:[#allocation12 + $0x48] sm:$0xf]
        %v1127 = vld [vmem:[#allocation12 + $0x4c] sm:$0xf]
        %v1128 = vld [vmem:[#allocation12 + $0x50] sm:$0xf]
        %v1129 = vld [vmem:[#allocation12 + $0x54] sm:$0xf]
        %v1130 = vld [vmem:[#allocation12 + $0x58] sm:$0xf]
        %v1131 = vld [vmem:[#allocation12 + $0x5c] sm:$0xf]
        %v1132 = vld [vmem:[#allocation12 + $0x60] sm:$0xf]
        %v1133 = vld [vmem:[#allocation12 + $0x64] sm:$0xf]
        %v1134 = vld [vmem:[#allocation12 + $0x68] sm:$0xf]
        %v1135 = vld [vmem:[#allocation12 + $0x6c] sm:$0xf]
        %v1136 = vld [vmem:[#allocation12 + $0x70] sm:$0xf]
        %v1137 = vld [vmem:[#allocation12 + $0x74] sm:$0xf]
        %v1138 = vld [vmem:[#allocation12 + $0x78] sm:$0xf]
        %v1139 = vld [vmem:[#allocation12 + $0x7c] sm:$0xf]
        %v1140 = vlaneseq
        %v1141 = vshrl.u32 %v1140, 7
        %v1142 = vsub.s32 4, %v1141
        %v1143 = vrot.slane %v413, %v1142
        %v1176 = vunpack.c.l.b16 %v1108
        %v1177 = vunpack.c.l.b16 %v1109
        %v1178 = vunpack.c.l.b16 %v1110
        %v1179 = vunpack.c.l.b16 %v1111
        %v1180 = vunpack.c.l.b16 %v1112
        %v1181 = vunpack.c.l.b16 %v1113
        %v1182 = vunpack.c.l.b16 %v1114
        %v1183 = vunpack.c.l.b16 %v1115
        %v1184 = vunpack.c.l.b16 %v1116
        %v1185 = vunpack.c.l.b16 %v1117
        %v1186 = vunpack.c.l.b16 %v1118
        %v1187 = vunpack.c.l.b16 %v1119
        %v1188 = vunpack.c.l.b16 %v1120
        %v1189 = vunpack.c.l.b16 %v1121
        %v1190 = vunpack.c.l.b16 %v1122
        %v1191 = vunpack.c.l.b16 %v1123
        %v1192 = vunpack.c.l.b16 %v1124
        %v1193 = vunpack.c.l.b16 %v1125
        %v1194 = vunpack.c.l.b16 %v1126
        %v1195 = vunpack.c.l.b16 %v1127
        %v1196 = vunpack.c.l.b16 %v1128
        %v1197 = vunpack.c.l.b16 %v1129
        %v1198 = vunpack.c.l.b16 %v1130
        %v1199 = vunpack.c.l.b16 %v1131
        %v1200 = vunpack.c.l.b16 %v1132
        %v1201 = vunpack.c.l.b16 %v1133
        %v1202 = vunpack.c.l.b16 %v1134
        %v1203 = vunpack.c.l.b16 %v1135
        %v1204 = vunpack.c.l.b16 %v1136
        %v1205 = vunpack.c.l.b16 %v1137
        %v1206 = vunpack.c.l.b16 %v1138
        %v1207 = vunpack.c.l.b16 %v1139
        %v1208 = vpack.c.b16 %v1177, %v1176
        %v1209 = vpack.c.b16 %v1179, %v1178
        %v1210 = vpack.c.b16 %v1181, %v1180
        %v1211 = vpack.c.b16 %v1183, %v1182
        %v1212 = vpack.c.b16 %v1185, %v1184
        %v1213 = vpack.c.b16 %v1187, %v1186
        %v1214 = vpack.c.b16 %v1189, %v1188
        %v1215 = vpack.c.b16 %v1191, %v1190
        %v1216 = vpack.c.b16 %v1193, %v1192
        %v1217 = vpack.c.b16 %v1195, %v1194
        %v1218 = vpack.c.b16 %v1197, %v1196
        %v1219 = vpack.c.b16 %v1199, %v1198
        %v1220 = vpack.c.b16 %v1201, %v1200
        %v1221 = vpack.c.b16 %v1203, %v1202
        %v1222 = vpack.c.b16 %v1205, %v1204
        %v1223 = vpack.c.b16 %v1207, %v1206
        %1240 = vmatprep.subr.bf16.mxu0 0
        %1241 = vmatpush1.bf16.msra.mxu0 %v1208
        %1242 = vmatprep.subr.bf16.mxu0 0
        %1243 = vmatpush1.bf16.msra.mxu0 %v1209
        %1244 = vmatprep.subr.bf16.mxu0 0
        %1245 = vmatpush1.bf16.msra.mxu0 %v1210
        %1246 = vmatprep.subr.bf16.mxu0 0
        %1247 = vmatpush1.bf16.msra.mxu0 %v1211
        %1248 = vmatprep.subr.bf16.mxu0 0
        %1249 = vmatpush1.bf16.msra.mxu0 %v1212
        %1250 = vmatprep.subr.bf16.mxu0 0
        %1251 = vmatpush1.bf16.msra.mxu0 %v1213
        %1252 = vmatprep.subr.bf16.mxu0 0
        %1253 = vmatpush1.bf16.msra.mxu0 %v1214
        %1254 = vmatprep.subr.bf16.mxu0 0
        %1255 = vmatpush1.bf16.msra.mxu0 %v1215
        %1256 = vmatprep.subr.bf16.mxu0 0
        %1257 = vmatpush1.bf16.msra.mxu0 %v1216
        %1258 = vmatprep.subr.bf16.mxu0 0
        %1259 = vmatpush1.bf16.msra.mxu0 %v1217
        %1260 = vmatprep.subr.bf16.mxu0 0
        %1261 = vmatpush1.bf16.msra.mxu0 %v1218
        %1262 = vmatprep.subr.bf16.mxu0 0
        %1263 = vmatpush1.bf16.msra.mxu0 %v1219
        %1264 = vmatprep.subr.bf16.mxu0 0
        %1265 = vmatpush1.bf16.msra.mxu0 %v1220
        %1266 = vmatprep.subr.bf16.mxu0 0
        %1267 = vmatpush1.bf16.msra.mxu0 %v1221
        %1268 = vmatprep.subr.bf16.mxu0 0
        %1269 = vmatpush1.bf16.msra.mxu0 %v1222
        %1270 = vmatprep.subr.bf16.mxu0 0
        %1271 = vmatpush1.bf16.msra.mxu0 %v1223
        %1272 = vmatprep.mubr.bf16.mxu0 %v1107
        %1273 = vmatmul.mubr.bf16.gmra.mrb[0].mxu0 %v1106
        %v1274 = vpop.f32.mrb[0].mxu0
        %v1275 = vadd.f32 %v1143, %v1274
        %v1276 = vpop.f32.mrb[0].mxu0
        %v1277 = vpop.f32.mrb[0].mxu0
        %v1278 = vadd.f32 %v1143, %v1277
        %v1279 = vpop.f32.mrb[0].mxu0
        %1280 = vdwg.mxu0
        %v1281 = vadd.f32 %v948, %v1275
        %v1282 = vadd.f32 %v949, %v1278
        %1283 = vadd.xlane.f32.xlu0 %v1281
        %v1284 = vpop.xlane.xlu0 %1283
        %1285 = vadd.xlane.f32.xlu0 %v1282
        %v1286 = vpop.xlane.xlu0 %1285
        %v1287 = vmul.f32 %v1284, %v919
        %v1288 = vmul.f32 %v1286, %v919
        %v1289 = vsub.f32 %v1281, %v1287
        %v1290 = vsub.f32 %v1282, %v1288
        %v1291 = vmul.f32 %v1289, %v1289
        %v1292 = vmul.f32 %v1290, %v1290
        %1293 = vadd.xlane.f32.xlu0 %v1291
        %v1294 = vpop.xlane.xlu0 %1293
        %1295 = vadd.xlane.f32.xlu0 %v1292
        %v1296 = vpop.xlane.xlu0 %1295
        %v1297 = vmul.f32 %v1294, %v919
        %v1298 = vmul.f32 %v1296, %v919
        %v1299 = vadd.f32 %v1297, 1e-05
        %v1300 = vadd.f32 %v1298, 1e-05
        %v1301 = vrsqrt.pop %v1299
        %v1302 = vrsqrt.pop %v1300
        %v1303 = vmul.f32 %v1289, %v1301
        %v1304 = vmul.f32 %v1290, %v1302
        %v1305 = vlaneseq
        %v1306 = vshrl.u32 %v1305, 7
        %v1307 = vsub.s32 7, %v1306
        %v1308 = vrot.slane %v413, %v1307
        %v1309 = vmul.f32 %v1303, %v1308
        %v1310 = vmul.f32 %v1304, %v1308
        %v1311 = vlaneseq
        %v1312 = vshrl.u32 %v1311, 7
        %v1313 = vsub.s32 0, %v1312
        %v1314 = vrot.slane %v414, %v1313
        %v1315 = vadd.f32 %v1309, %v1314
        %v1316 = vadd.f32 %v1310, %v1314
        %1317 = vst [vmem:[%s410] sm:$0xff] %v1315
        %1318 = vst [vmem:[%s410 + $0x8] sm:$0xff] %v1316
        %s1319 = sand.u32 %s223, 1
        %s1320 = scalar_lea.sflag [#allocation5], %s1319
        %s1321 = sand.u32 %s223, 1
        %s1322 = smul.addr %s1321, 16
        %s1323 = scalar_lea.vmem [#allocation14], %s1322
        // Predicated region
        $region81: #{tpu_custom_call.1} parent=51 // pred_check
          %p1324 = pneg %p233
        $region82: #{tpu_custom_call.1} parent=51 // pred_check_branch
          %1326 = sbr.rel (%p1324) target = $region84
        $region83: #{tpu_custom_call.1} parent=51 // pred_region
          %s1327 = smul.u32 2, %s33
          %s1329 = ssub.s32 256, 256
          %1330 = vsyncadd %s1320, %s1329
          %s1331 = smul.addr %s32, 2
          %s1332 = sadd.s32 %s1327, %s1331
          %s1333 = smul.addr %s1332, 128
          %s1334 = scalar_lea.hbm %s8, %s1333
          %s1335 = sshll.u32 %s1323, 4
          %s1336 = int_to_ptr.vmem [resolvable:$true] %s1335
          %1341 = dma.vmem_to_hbm [thread:$0]  %s1336, 256, %s1334, %s1320, 128, 128, 8
        $region84: #{tpu_custom_call.1} parent=51 // pred_fallthru
          _
      $region52: #{tpu_custom_call.1} parent=5 // pred_fallthru
        _
      %p1342 = scmp.le.s32.totalorder 2, %s23
      // Predicated region
      $region85: #{tpu_custom_call.1} parent=5 // pred_check
        %p1343 = pneg %p1342
      $region86: #{tpu_custom_call.1} parent=5 // pred_check_branch
        %1345 = sbr.rel (%p1343) target = $region88
      $region87: #{tpu_custom_call.1} parent=5 // pred_region
        %s1346 = ssub.s32 %s23, 2
        // Predicated region
        $region89: #{tpu_custom_call.1} parent=87 // pred_check
          %p1347 = pneg %p239
        $region90: #{tpu_custom_call.1} parent=87 // pred_check_branch
          %1349 = sbr.rel (%p1347) target = $region92
        $region91: #{tpu_custom_call.1} parent=87 // pred_region
          %s1350 = sand.u32 %s224, 1
          %s1351 = scalar_lea.sflag [#allocation5], %s1350
          %s1352 = sand.u32 %s224, 1
          %s1353 = smul.addr %s1352, 16
          %s1354 = scalar_lea.vmem [#allocation14], %s1353
          %1355 = dma.done %s1351, 256
        $region92: #{tpu_custom_call.1} parent=87 // pred_fallthru
          _
      $region88: #{tpu_custom_call.1} parent=5 // pred_fallthru
        _
    $region6: #{tpu_custom_call.1} parent=1 // loop_footer
      %s27 = sadd.s32 1, %s23
    $region7: #{tpu_custom_call.1} parent=1 // loop_footer_branch
      %22 = sbr.rel target = $region3
    $region8: #{tpu_custom_call.1} parent=1 // loop_exit
      _
    %1356 = vsyncpa [#allocation4], 1
    %s1357 = scalar_lea.sflag [#allocation4], 1
    %1358 = vsyncpa %s1357, 1
    %1359 = vsyncpa [#allocation7], 1
    %1360 = vsyncpa [#allocation10], 1
    %1361 = vsyncpa [#allocation13], 1
    %1362 = vsyncpa [#allocation5], 1
    %s1363 = scalar_lea.sflag [#allocation5], 1
    %1364 = vsyncpa %s1363, 1

</llo_original>
